<compile_context>
chip_gen: v7x
topology: tpu7x:2x2x1
jax: 0.10.0
libtpu: 0.0.40
codegen_flags: <defaults>
</compile_context>

<pallas_src>
import jax
import jax.numpy as jnp
from jax.experimental import pallas as pl
from jax.experimental.pallas import tpu as pltpu


def _linear_bias_kernel(x_ref, w_ref, b_ref, o_ref):
    # One N-tile of the output per grid step:
    #   o[:, n*tn:(n+1)*tn] = x @ w[:, n*tn:(n+1)*tn] + b[:, n*tn:(n+1)*tn]
    o_ref[...] = (
        jnp.dot(x_ref[...], w_ref[...], preferred_element_type=jnp.float32)
        + b_ref[...]
    ).astype(o_ref.dtype)


def linear_pallas(x, w, b, *, tn=128):
    """x: (B, S, K), w: (K, N), b: (N,) -> (B, S, N)."""
    B, S, K = x.shape
    Kw, N = w.shape
    assert K == Kw and b.shape == (N,)
    M = B * S
    assert M % 8 == 0, "rows must be sublane-aligned"
    assert tn % 128 == 0 and N % tn == 0, "N tile must be lane-aligned"
    nn = N // tn

    x2 = x.reshape(M, K)
    b2 = b.reshape(1, N)

    cost = pl.CostEstimate(
        flops=2 * M * N * K,
        transcendentals=0,
        bytes_accessed=4 * (M * K + K * N + M * N + N),
    )

    out = pl.pallas_call(
        _linear_bias_kernel,
        out_shape=jax.ShapeDtypeStruct((M, N), x.dtype),
        grid_spec=pltpu.PrefetchScalarGridSpec(
            num_scalar_prefetch=0,
            grid=(nn,),
            in_specs=[
                # Activations: constant block index -> DMA'd once, stays in VMEM.
                pl.BlockSpec((M, K), lambda n: (0, 0)),
                # Weights: streamed one N-tile per step (double-buffered).
                pl.BlockSpec((K, tn), lambda n: (0, n)),
                # Bias tile, broadcast over the M rows inside the kernel.
                pl.BlockSpec((1, tn), lambda n: (0, n)),
            ],
            out_specs=pl.BlockSpec((M, tn), lambda n: (0, n)),
        ),
        compiler_params=pltpu.CompilerParams(
            dimension_semantics=("parallel",),
            vmem_limit_bytes=32 * 1024 * 1024,
        ),
        cost_estimate=cost,
    )(x2, w, b2)

    return out.reshape(B, S, N)


class MPallas:
    """Mirrors torch module M: Linear(in_features=3072, out_features=768, bias=True)."""

    def __init__(self, key, in_features=3072, out_features=768, dtype=jnp.float32):
        kw, kb = jax.random.split(key)
        bound = 1.0 / (in_features ** 0.5)
        # PyTorch stores weight as (out, in); we keep (in, out) for the matmul.
        self.weight = jax.random.uniform(
            kw, (in_features, out_features), dtype, minval=-bound, maxval=bound
        )
        self.bias = jax.random.uniform(
            kb, (out_features,), dtype, minval=-bound, maxval=bound
        )

    def __call__(self, x):
        return linear_pallas(x, self.weight, self.bias)


if __name__ == "__main__":
    key = jax.random.PRNGKey(0)
    k_x, k_params = jax.random.split(key)

    # Input shape fixed by the module's forward: (1, 384, 3072)
    x = jax.random.normal(k_x, (1, 384, 3072), dtype=jnp.float32)

    model = MPallas(k_params)
    out = model(x)
    out = jax.block_until_ready(out)

    # sanity check against plain-JAX reference
    ref = x @ model.weight + model.bias
    assert out.shape == (1, 384, 768)
    assert jnp.allclose(out, ref, atol=1e-4, rtol=1e-4)

    print("KERNEL_OK")
</pallas_src>

<mosaic_0001>
module attributes {stable_mosaic.version = 11 : i64} {
  func.func @_linear_bias_kernel(%arg0: i32, %arg1: memref<384x3072xf32, #tpu.memory_space<vmem>>, %arg2: memref<3072x128xf32, #tpu.memory_space<vmem>>, %arg3: memref<1x128xf32, #tpu.memory_space<vmem>>, %arg4: memref<384x128xf32, #tpu.memory_space<vmem>>) attributes {dimension_semantics = [#tpu.dimension_semantics<parallel>], iteration_bounds = array<i64: 6>, scalar_prefetch = 0 : i64, scratch_operands = 0 : i64, tpu.core_type = #tpu.core_type<tc>, window_params = [{pipeline_mode = #tpu.pipeline_mode<synchronous>, transform_indices = @transform_0, window_bounds = array<i64: 384, 3072>}, {transform_indices = @transform_1, window_bounds = array<i64: 3072, 128>}, {transform_indices = @transform_2, window_bounds = array<i64: 1, 128>}, {transform_indices = @transform_3, window_bounds = array<i64: 384, 128>}]} {
    %c0 = arith.constant 0 : index
    %c0_0 = arith.constant 0 : index
    %0 = vector.load %arg1[%c0, %c0_0] : memref<384x3072xf32, #tpu.memory_space<vmem>>, vector<384x3072xf32>
    %c0_1 = arith.constant 0 : index
    %c0_2 = arith.constant 0 : index
    %1 = vector.load %arg2[%c0_1, %c0_2] : memref<3072x128xf32, #tpu.memory_space<vmem>>, vector<3072x128xf32>
    %cst = arith.constant dense<0.000000e+00> : vector<384x128xf32>
    %2 = tpu.matmul %0, %1, %cst {dimension_numbers = #tpu.dot_dimension_numbers<[1], [0], [0], [1], [0, 0, 1, 1], [], []>} : vector<384x3072xf32>, vector<3072x128xf32>, vector<384x128xf32> -> vector<384x128xf32>
    %c0_3 = arith.constant 0 : index
    %c0_4 = arith.constant 0 : index
    %3 = vector.load %arg3[%c0_3, %c0_4] : memref<1x128xf32, #tpu.memory_space<vmem>>, vector<1x128xf32>
    %4 = vector.broadcast %3 : vector<1x128xf32> to vector<384x128xf32>
    %5 = arith.addf %2, %4 : vector<384x128xf32>
    %c0_5 = arith.constant 0 : index
    %c0_6 = arith.constant 0 : index
    %6 = vector.load %arg4[%c0_5, %c0_6] : memref<384x128xf32, #tpu.memory_space<vmem>>, vector<384x128xf32>
    tpu.vector_store %arg4[%c0_5, %c0_6], %5 {strides = array<i32>} : memref<384x128xf32, #tpu.memory_space<vmem>>, vector<384x128xf32>,
    return
  }
  func.func @transform_0(%arg0: i32) -> (i32, i32) {
    %c0_i32 = arith.constant 0 : i32
    %c0_i32_0 = arith.constant 0 : i32
    %c0_i32_1 = arith.constant 0 : i32
    return %c0_i32, %c0_i32_0 : i32, i32
  }
  func.func @transform_1(%arg0: i32) -> (i32, i32) {
    %c0_i32 = arith.constant 0 : i32
    %c0_i32_0 = arith.constant 0 : i32
    return %c0_i32, %arg0 : i32, i32
  }
  func.func @transform_2(%arg0: i32) -> (i32, i32) {
    %c0_i32 = arith.constant 0 : i32
    %c0_i32_0 = arith.constant 0 : i32
    return %c0_i32, %arg0 : i32, i32
  }
  func.func @transform_3(%arg0: i32) -> (i32, i32) {
    %c0_i32 = arith.constant 0 : i32
    %c0_i32_0 = arith.constant 0 : i32
    return %c0_i32, %arg0 : i32, i32
  }
}

</mosaic_0001>

<llo_original>
// kernel: tpu_custom_call.1
$region0: #{tpu_custom_call.1}
  #allocation0 [shape = 'u32[]', space=smem, size = 0x4, offset = 0x4, fixed_abs, tag = 'smem constant byte address 0x4 - core index']
  #allocation1 [shape = 'u32[144,128]{1,0:T(1,128)}', space=vmem, size = 0x12000, scoped, tag = 'internal scratch']
  %s0 = inlined_call_operand.hbm [shape: f32[384,3072], index: 0, kind: input, shape index: {}]
  %s1 = inlined_call_operand.hbm [shape: f32[3072,768], index: 1, kind: input, shape index: {}]
  %s2 = inlined_call_operand.hbm [shape: f32[1,768], index: 2, kind: input, shape index: {}]
  %s3 = inlined_call_operand.hbm [shape: f32[384,768], index: 3, kind: output, shape index: {}]
  %s4 = sld [smem:[#allocation0]]
  $region57: #{tpu_custom_call.1} parent=0
    _
  %s6 = ssub.s32 1, %s4
  %s7 = scalar_select 0, %s6, %s4
  $region1: #{tpu_custom_call.1} parent=0
    #allocation2 [shape = 'u8[4718592]{0}', space=vmem, size = 0x480000, scoped, tag = 'input window, operand 0, single buffered']
    #allocation3 [shape = 's32[2]{0}', space=sflag, size = 0x8, scoped, tag = 'scoped memory for tpu_custom_call.1']
    #allocation4 [shape = 's32[2]{0}', space=sflag, size = 0x8, scoped, tag = 'scoped memory for tpu_custom_call.1']
    #allocation5 [shape = 'u8[3145728]{0}', space=vmem, size = 0x300000, scoped, tag = 'input window, operand 1']
    #allocation6 [shape = 's32[2]{0}', space=sflag, size = 0x8, scoped, tag = 'scoped memory for tpu_custom_call.1']
    #allocation7 [shape = 'u8[1024]{0}', space=vmem, size = 0x400, scoped, tag = 'input window, operand 2']
    #allocation8 [shape = 'u8[393216]{0}', space=vmem, size = 0x60000, scoped, tag = 'output window, operand 0']
    %8 = vsyncpa [#allocation3], 0
    %9 = vsyncpa [#allocation6], 0
    %s10 = scalar_lea.sflag [#allocation6], 1
    %11 = vsyncpa %s10, 0
    %12 = vsyncpa [#allocation4], 0
    %s13 = scalar_lea.sflag [#allocation4], 1
    %14 = vsyncpa %s13, 0
    loop: start=0, step=1, limit=8
    $region2: #{tpu_custom_call.1} parent=1 // loop_pre_header
      _
    $region3: #{tpu_custom_call.1} parent=1 // loop_header
      %s16 = sphi 0, %s20
      %p17 = scmp.ge.s32.totalorder %s16, 8
      %s24 = sphi 0, %s24
      %s26 = sphi 0, %s24
      %s27 = sphi 0, %s26
      %s41 = sphi 0, %s27
      %s47 = sphi 0, %s49
      %s50 = sphi 0, %s47
      %s51 = sphi 0, %s50
      %s67 = sphi 0, %s51
      %s73 = sphi 0, %s75
      %s76 = sphi 0, %s73
      %s77 = sphi 0, %s76
      %s93 = sphi 0, %s77
      %s99 = sphi 0, %s101
      %s102 = sphi 0, %s99
      %s103 = sphi 0, %s102
      %s119 = sphi 0, %s103
    $region4: #{tpu_custom_call.1} parent=1 // loop_header_branch
      %19 = sbr.rel (%p17) target = $region8
    $region5: #{tpu_custom_call.1} parent=1 // loop_body
      %s21 = ssub.s32 %s16, 1
      %s22 = ssub.s32 %s16, 2
      %s23 = sadd.s32 %s16, 1
      %s25 = sadd.s32 %s24, 1
      %p28 = scmp.eq.s32.totalorder %s16, 5
      %p29 = scmp.ne.s32.totalorder %s24, %s26
      %p30 = scmp.eq.s32.totalorder %s16, 0
      %p31 = por %p29, %p30
      %p32 = scmp.ne.s32.totalorder %s24, %s26
      %p33 = scmp.eq.s32.totalorder %s21, 5
      %p34 = por %p32, %p33
      %p35 = scmp.ne.s32.totalorder %s26, %s27
      %p36 = scmp.eq.s32.totalorder %s21, 0
      %p37 = por %p35, %p36
      %p38 = scmp.ne.s32.totalorder %s26, %s27
      %p39 = scmp.eq.s32.totalorder %s22, 5
      %p40 = por %p38, %p39
      %p42 = scmp.ne.s32.totalorder %s27, %s41
      %p43 = scmp.eq.s32.totalorder %s22, 0
      %p44 = por %p42, %p43
      %s45 = ssub.s32 %s16, %s23
      %p46 = scmp.eq.s32.totalorder %s45, 0
      %s48 = sadd.s32 %s47, 1
      %s49 = scalar_select %p46, %s47, %s48
      %p52 = pneg %p46
      %p53 = scmp.eq.s32.totalorder %s16, 5
      %p54 = por %p52, %p53
      %p55 = scmp.ne.s32.totalorder %s47, %s50
      %p56 = scmp.eq.s32.totalorder %s16, 0
      %p57 = por %p55, %p56
      %p58 = scmp.ne.s32.totalorder %s47, %s50
      %p59 = scmp.eq.s32.totalorder %s21, 5
      %p60 = por %p58, %p59
      %p61 = scmp.ne.s32.totalorder %s50, %s51
      %p62 = scmp.eq.s32.totalorder %s21, 0
      %p63 = por %p61, %p62
      %p64 = scmp.ne.s32.totalorder %s50, %s51
      %p65 = scmp.eq.s32.totalorder %s22, 5
      %p66 = por %p64, %p65
      %p68 = scmp.ne.s32.totalorder %s51, %s67
      %p69 = scmp.eq.s32.totalorder %s22, 0
      %p70 = por %p68, %p69
      %s71 = ssub.s32 %s16, %s23
      %p72 = scmp.eq.s32.totalorder %s71, 0
      %s74 = sadd.s32 %s73, 1
      %s75 = scalar_select %p72, %s73, %s74
      %p78 = pneg %p72
      %p79 = scmp.eq.s32.totalorder %s16, 5
      %p80 = por %p78, %p79
      %p81 = scmp.ne.s32.totalorder %s73, %s76
      %p82 = scmp.eq.s32.totalorder %s16, 0
      %p83 = por %p81, %p82
      %p84 = scmp.ne.s32.totalorder %s73, %s76
      %p85 = scmp.eq.s32.totalorder %s21, 5
      %p86 = por %p84, %p85
      %p87 = scmp.ne.s32.totalorder %s76, %s77
      %p88 = scmp.eq.s32.totalorder %s21, 0
      %p89 = por %p87, %p88
      %p90 = scmp.ne.s32.totalorder %s76, %s77
      %p91 = scmp.eq.s32.totalorder %s22, 5
      %p92 = por %p90, %p91
      %p94 = scmp.ne.s32.totalorder %s77, %s93
      %p95 = scmp.eq.s32.totalorder %s22, 0
      %p96 = por %p94, %p95
      %s97 = ssub.s32 %s16, %s23
      %p98 = scmp.eq.s32.totalorder %s97, 0
      %s100 = sadd.s32 %s99, 1
      %s101 = scalar_select %p98, %s99, %s100
      %p104 = pneg %p98
      %p105 = scmp.eq.s32.totalorder %s16, 5
      %p106 = por %p104, %p105
      %p107 = scmp.ne.s32.totalorder %s99, %s102
      %p108 = scmp.eq.s32.totalorder %s16, 0
      %p109 = por %p107, %p108
      %p110 = scmp.ne.s32.totalorder %s99, %s102
      %p111 = scmp.eq.s32.totalorder %s21, 5
      %p112 = por %p110, %p111
      %p113 = scmp.ne.s32.totalorder %s102, %s103
      %p114 = scmp.eq.s32.totalorder %s21, 0
      %p115 = por %p113, %p114
      %p116 = scmp.ne.s32.totalorder %s102, %s103
      %p117 = scmp.eq.s32.totalorder %s22, 5
      %p118 = por %p116, %p117
      %p120 = scmp.ne.s32.totalorder %s103, %s119
      %p121 = scmp.eq.s32.totalorder %s22, 0
      %p122 = por %p120, %p121
      %p123 = scmp.le.s32.totalorder 1, %s16
      %p124 = scmp.lt.s32.totalorder %s16, 7
      %p125 = pnand %p123, %p124
      %p126 = pneg %p125
      // Predicated region
      $region9: #{tpu_custom_call.1} parent=5 // pred_check
        _
      $region10: #{tpu_custom_call.1} parent=5 // pred_check_branch
        %128 = sbr.rel (%p125) target = $region12
      $region11: #{tpu_custom_call.1} parent=5 // pred_region
        %s129 = ssub.s32 %s16, 1
        // Predicated region
        $region13: #{tpu_custom_call.1} parent=11 // pred_check
          %p130 = pneg %p37
        $region14: #{tpu_custom_call.1} parent=11 // pred_check_branch
          %132 = sbr.rel (%p130) target = $region16
        $region15: #{tpu_custom_call.1} parent=11 // pred_region
          %s134 = ssub.s32 147456, 147456
          %135 = vsyncadd [#allocation3], %s134
          %s136 = sshll.u32 [#allocation2], 4
          %s137 = int_to_ptr.vmem [resolvable:$true] %s136
          %142 = dma.hbm_to_vmem [thread:$0]  %s0, 147456, %s137, [#allocation3], 3072, 3072, 192
        $region16: #{tpu_custom_call.1} parent=11 // pred_fallthru
          _
      $region12: #{tpu_custom_call.1} parent=5 // pred_fallthru
        _
      %p143 = scmp.lt.s32.totalorder %s16, 6
      // Predicated region
      $region17: #{tpu_custom_call.1} parent=5 // pred_check
        %p144 = pneg %p143
      $region18: #{tpu_custom_call.1} parent=5 // pred_check_branch
        %146 = sbr.rel (%p144) target = $region20
      $region19: #{tpu_custom_call.1} parent=5 // pred_region
        // Predicated region
        $region21: #{tpu_custom_call.1} parent=19 // pred_check
          %p147 = pneg %p57
        $region22: #{tpu_custom_call.1} parent=19 // pred_check_branch
          %149 = sbr.rel (%p147) target = $region24
        $region23: #{tpu_custom_call.1} parent=19 // pred_region
          %s150 = sand.u32 %s16, 1
          %s151 = scalar_lea.sflag [#allocation6], %s150
          %s152 = sand.u32 %s47, 1
          %s153 = smul.addr %s152, 3072
          %s154 = scalar_lea.vmem [#allocation5], %s153
          %s156 = ssub.s32 49152, 49152
          %157 = vsyncadd %s151, %s156
          %s158 = smul.addr %s16, 128
          %s159 = scalar_lea.hbm %s1, %s158
          %s160 = sshll.u32 %s154, 4
          %s161 = int_to_ptr.vmem [resolvable:$true] %s160
          %166 = dma.hbm_to_vmem [thread:$0]  %s159, 49152, %s161, %s151, 768, 128, 8
        $region24: #{tpu_custom_call.1} parent=19 // pred_fallthru
          _
        // Predicated region
        $region25: #{tpu_custom_call.1} parent=19 // pred_check
          %p167 = pneg %p83
        $region26: #{tpu_custom_call.1} parent=19 // pred_check_branch
          %169 = sbr.rel (%p167) target = $region28
        $region27: #{tpu_custom_call.1} parent=19 // pred_region
          %s170 = sand.u32 %s16, 1
          %s171 = scalar_lea.sflag [#allocation6], %s170
          %s172 = sand.u32 %s73, 1
          %s173 = scalar_lea.vmem [#allocation7], %s172
          %s175 = ssub.s32 16, 16
          %176 = vsyncadd %s171, %s175
          %s177 = smul.addr %s16, 16
          %s178 = scalar_lea.hbm %s2, %s177
          %s180 = sshll.u32 %s173, 4
          %s181 = int_to_ptr.vmem [resolvable:$true] %s180
          %183 = dma.hbm_to_vmem [thread:$0]  %s178, 16, %s181, %s171
        $region28: #{tpu_custom_call.1} parent=19 // pred_fallthru
          _
      $region20: #{tpu_custom_call.1} parent=5 // pred_fallthru
        _
      %p184 = scmp.le.s32.totalorder 1, %s16
      %p185 = scmp.lt.s32.totalorder %s16, 7
      %p186 = pnand %p184, %p185
      %p187 = pneg %p186
      // Predicated region
      $region29: #{tpu_custom_call.1} parent=5 // pred_check
        _
      $region30: #{tpu_custom_call.1} parent=5 // pred_check_branch
        %189 = sbr.rel (%p186) target = $region32
      $region31: #{tpu_custom_call.1} parent=5 // pred_region
        %s190 = ssub.s32 %s16, 1
        // Predicated region
        $region33: #{tpu_custom_call.1} parent=31 // pred_check
          %p191 = pneg %p37
        $region34: #{tpu_custom_call.1} parent=31 // pred_check_branch
          %193 = sbr.rel (%p191) target = $region36
        $region35: #{tpu_custom_call.1} parent=31 // pred_region
          %194 = dma.done [#allocation3], 147456
        $region36: #{tpu_custom_call.1} parent=31 // pred_fallthru
          _
        %s195 = sand.u32 %s21, 1
        %s196 = scalar_lea.sflag [#allocation6], %s195
        %s197 = sand.u32 %s50, 1
        %s198 = smul.addr %s197, 3072
        %s199 = scalar_lea.vmem [#allocation5], %s198
        // Predicated region
        $region37: #{tpu_custom_call.1} parent=31 // pred_check
          %p200 = pneg %p63
        $region38: #{tpu_custom_call.1} parent=31 // pred_check_branch
          %202 = sbr.rel (%p200) target = $region40
        $region39: #{tpu_custom_call.1} parent=31 // pred_region
          %203 = dma.done %s196, 49152
        $region40: #{tpu_custom_call.1} parent=31 // pred_fallthru
          _
        %s204 = sand.u32 %s21, 1
        %s205 = scalar_lea.sflag [#allocation6], %s204
        %s206 = sand.u32 %s76, 1
        %s207 = scalar_lea.vmem [#allocation7], %s206
        // Predicated region
        $region41: #{tpu_custom_call.1} parent=31 // pred_check
          %p208 = pneg %p89
        $region42: #{tpu_custom_call.1} parent=31 // pred_check_branch
          %210 = sbr.rel (%p208) target = $region44
        $region43: #{tpu_custom_call.1} parent=31 // pred_region
          %211 = dma.done %s205, 16
        $region44: #{tpu_custom_call.1} parent=31 // pred_fallthru
          _
        %p212 = pneg %p37
        %p213 = pneg %p34
        %s214 = sand.u32 %s21, 1
        %s215 = scalar_lea.sflag [#allocation6], %s214
        %s216 = sand.u32 %s50, 1
        %s217 = smul.addr %s216, 3072
        %s218 = scalar_lea.vmem [#allocation5], %s217
        %p219 = pneg %p63
        %p220 = pneg %p60
        %s221 = sand.u32 %s21, 1
        %s222 = scalar_lea.sflag [#allocation6], %s221
        %s223 = sand.u32 %s76, 1
        %s224 = scalar_lea.vmem [#allocation7], %s223
        %p225 = pneg %p89
        %p226 = pneg %p86
        %p227 = pneg %p115
        %p228 = pneg %p112
        %s229 = sand.u32 %s102, 1
        %s230 = scalar_lea.sflag [#allocation4], %s229
        %s231 = sand.u32 %s102, 1
        %s232 = smul.addr %s231, 384
        %s233 = scalar_lea.vmem [#allocation8], %s232
        %v234 = vld [vmem:[#allocation2] sm:$0xff]
        %v235 = vld [vmem:[#allocation2 + $0x8] sm:$0xff]
        %v236 = vld [vmem:[#allocation2 + $0x10] sm:$0xff]
        %v237 = vld [vmem:[#allocation2 + $0x18] sm:$0xff]
        %v238 = vld [vmem:[#allocation2 + $0x20] sm:$0xff]
        %v239 = vld [vmem:[#allocation2 + $0x28] sm:$0xff]
        %v240 = vld [vmem:[#allocation2 + $0x30] sm:$0xff]
        %v241 = vld [vmem:[#allocation2 + $0x38] sm:$0xff]
        %v242 = vld [vmem:[#allocation2 + $0x40] sm:$0xff]
        %v243 = vld [vmem:[#allocation2 + $0x48] sm:$0xff]
        %v244 = vld [vmem:[#allocation2 + $0x50] sm:$0xff]
        %v245 = vld [vmem:[#allocation2 + $0x58] sm:$0xff]
        %v246 = vld [vmem:[#allocation2 + $0x60] sm:$0xff]
        %v247 = vld [vmem:[#allocation2 + $0x68] sm:$0xff]
        %v248 = vld [vmem:[#allocation2 + $0x70] sm:$0xff]
        %v249 = vld [vmem:[#allocation2 + $0x78] sm:$0xff]
        %v250 = vld [vmem:[#allocation2 + $0x80] sm:$0xff]
        %v251 = vld [vmem:[#allocation2 + $0x88] sm:$0xff]
        %v252 = vld [vmem:[#allocation2 + $0x90] sm:$0xff]
        %v253 = vld [vmem:[#allocation2 + $0x98] sm:$0xff]
        %v254 = vld [vmem:[#allocation2 + $0xa0] sm:$0xff]
        %v255 = vld [vmem:[#allocation2 + $0xa8] sm:$0xff]
        %v256 = vld [vmem:[#allocation2 + $0xb0] sm:$0xff]
        %v257 = vld [vmem:[#allocation2 + $0xb8] sm:$0xff]
        %v258 = vld [vmem:[#allocation2 + $0xc0] sm:$0xff]
        %v259 = vld [vmem:[#allocation2 + $0xc8] sm:$0xff]
        %v260 = vld [vmem:[#allocation2 + $0xd0] sm:$0xff]
        %v261 = vld [vmem:[#allocation2 + $0xd8] sm:$0xff]
        %v262 = vld [vmem:[#allocation2 + $0xe0] sm:$0xff]
        %v263 = vld [vmem:[#allocation2 + $0xe8] sm:$0xff]
        %v264 = vld [vmem:[#allocation2 + $0xf0] sm:$0xff]
        %v265 = vld [vmem:[#allocation2 + $0xf8] sm:$0xff]
        %v266 = vld [vmem:[#allocation2 + $0x100] sm:$0xff]
        %v267 = vld [vmem:[#allocation2 + $0x108] sm:$0xff]
        %v268 = vld [vmem:[#allocation2 + $0x110] sm:$0xff]
        %v269 = vld [vmem:[#allocation2 + $0x118] sm:$0xff]
        %v270 = vld [vmem:[#allocation2 + $0x120] sm:$0xff]
        %v271 = vld [vmem:[#allocation2 + $0x128] sm:$0xff]
        %v272 = vld [vmem:[#allocation2 + $0x130] sm:$0xff]
        %v273 = vld [vmem:[#allocation2 + $0x138] sm:$0xff]
        %v274 = vld [vmem:[#allocation2 + $0x140] sm:$0xff]
        %v275 = vld [vmem:[#allocation2 + $0x148] sm:$0xff]
        %v276 = vld [vmem:[#allocation2 + $0x150] sm:$0xff]
        %v277 = vld [vmem:[#allocation2 + $0x158] sm:$0xff]
        %v278 = vld [vmem:[#allocation2 + $0x160] sm:$0xff]
        %v279 = vld [vmem:[#allocation2 + $0x168] sm:$0xff]
        %v280 = vld [vmem:[#allocation2 + $0x170] sm:$0xff]
        %v281 = vld [vmem:[#allocation2 + $0x178] sm:$0xff]
        %v282 = vld [vmem:[#allocation2 + $0x180] sm:$0xff]
        %v283 = vld [vmem:[#allocation2 + $0x188] sm:$0xff]
        %v284 = vld [vmem:[#allocation2 + $0x190] sm:$0xff]
        %v285 = vld [vmem:[#allocation2 + $0x198] sm:$0xff]
        %v286 = vld [vmem:[#allocation2 + $0x1a0] sm:$0xff]
        %v287 = vld [vmem:[#allocation2 + $0x1a8] sm:$0xff]
        %v288 = vld [vmem:[#allocation2 + $0x1b0] sm:$0xff]
        %v289 = vld [vmem:[#allocation2 + $0x1b8] sm:$0xff]
        %v290 = vld [vmem:[#allocation2 + $0x1c0] sm:$0xff]
        %v291 = vld [vmem:[#allocation2 + $0x1c8] sm:$0xff]
        %v292 = vld [vmem:[#allocation2 + $0x1d0] sm:$0xff]
        %v293 = vld [vmem:[#allocation2 + $0x1d8] sm:$0xff]
        %v294 = vld [vmem:[#allocation2 + $0x1e0] sm:$0xff]
        %v295 = vld [vmem:[#allocation2 + $0x1e8] sm:$0xff]
        %v296 = vld [vmem:[#allocation2 + $0x1f0] sm:$0xff]
        %v297 = vld [vmem:[#allocation2 + $0x1f8] sm:$0xff]
        %v298 = vld [vmem:[#allocation2 + $0x200] sm:$0xff]
        %v299 = vld [vmem:[#allocation2 + $0x208] sm:$0xff]
        %v300 = vld [vmem:[#allocation2 + $0x210] sm:$0xff]
        %v301 = vld [vmem:[#allocation2 + $0x218] sm:$0xff]
        %v302 = vld [vmem:[#allocation2 + $0x220] sm:$0xff]
        %v303 = vld [vmem:[#allocation2 + $0x228] sm:$0xff]
        %v304 = vld [vmem:[#allocation2 + $0x230] sm:$0xff]
        %v305 = vld [vmem:[#allocation2 + $0x238] sm:$0xff]
        %v306 = vld [vmem:[#allocation2 + $0x240] sm:$0xff]
        %v307 = vld [vmem:[#allocation2 + $0x248] sm:$0xff]
        %v308 = vld [vmem:[#allocation2 + $0x250] sm:$0xff]
        %v309 = vld [vmem:[#allocation2 + $0x258] sm:$0xff]
        %v310 = vld [vmem:[#allocation2 + $0x260] sm:$0xff]
        %v311 = vld [vmem:[#allocation2 + $0x268] sm:$0xff]
        %v312 = vld [vmem:[#allocation2 + $0x270] sm:$0xff]
        %v313 = vld [vmem:[#allocation2 + $0x278] sm:$0xff]
        %v314 = vld [vmem:[#allocation2 + $0x280] sm:$0xff]
        %v315 = vld [vmem:[#allocation2 + $0x288] sm:$0xff]
        %v316 = vld [vmem:[#allocation2 + $0x290] sm:$0xff]
        %v317 = vld [vmem:[#allocation2 + $0x298] sm:$0xff]
        %v318 = vld [vmem:[#allocation2 + $0x2a0] sm:$0xff]
        %v319 = vld [vmem:[#allocation2 + $0x2a8] sm:$0xff]
        %v320 = vld [vmem:[#allocation2 + $0x2b0] sm:$0xff]
        %v321 = vld [vmem:[#allocation2 + $0x2b8] sm:$0xff]
        %v322 = vld [vmem:[#allocation2 + $0x2c0] sm:$0xff]
        %v323 = vld [vmem:[#allocation2 + $0x2c8] sm:$0xff]
        %v324 = vld [vmem:[#allocation2 + $0x2d0] sm:$0xff]
        %v325 = vld [vmem:[#allocation2 + $0x2d8] sm:$0xff]
        %v326 = vld [vmem:[#allocation2 + $0x2e0] sm:$0xff]
        %v327 = vld [vmem:[#allocation2 + $0x2e8] sm:$0xff]
        %v328 = vld [vmem:[#allocation2 + $0x2f0] sm:$0xff]
        %v329 = vld [vmem:[#allocation2 + $0x2f8] sm:$0xff]
        %v330 = vld [vmem:[#allocation2 + $0x300] sm:$0xff]
        %v331 = vld [vmem:[#allocation2 + $0x308] sm:$0xff]
        %v332 = vld [vmem:[#allocation2 + $0x310] sm:$0xff]
        %v333 = vld [vmem:[#allocation2 + $0x318] sm:$0xff]
        %v334 = vld [vmem:[#allocation2 + $0x320] sm:$0xff]
        %v335 = vld [vmem:[#allocation2 + $0x328] sm:$0xff]
        %v336 = vld [vmem:[#allocation2 + $0x330] sm:$0xff]
        %v337 = vld [vmem:[#allocation2 + $0x338] sm:$0xff]
        %v338 = vld [vmem:[#allocation2 + $0x340] sm:$0xff]
        %v339 = vld [vmem:[#allocation2 + $0x348] sm:$0xff]
        %v340 = vld [vmem:[#allocation2 + $0x350] sm:$0xff]
        %v341 = vld [vmem:[#allocation2 + $0x358] sm:$0xff]
        %v342 = vld [vmem:[#allocation2 + $0x360] sm:$0xff]
        %v343 = vld [vmem:[#allocation2 + $0x368] sm:$0xff]
        %v344 = vld [vmem:[#allocation2 + $0x370] sm:$0xff]
        %v345 = vld [vmem:[#allocation2 + $0x378] sm:$0xff]
        %v346 = vld [vmem:[#allocation2 + $0x380] sm:$0xff]
        %v347 = vld [vmem:[#allocation2 + $0x388] sm:$0xff]
        %v348 = vld [vmem:[#allocation2 + $0x390] sm:$0xff]
        %v349 = vld [vmem:[#allocation2 + $0x398] sm:$0xff]
        %v350 = vld [vmem:[#allocation2 + $0x3a0] sm:$0xff]
        %v351 = vld [vmem:[#allocation2 + $0x3a8] sm:$0xff]
        %v352 = vld [vmem:[#allocation2 + $0x3b0] sm:$0xff]
        %v353 = vld [vmem:[#allocation2 + $0x3b8] sm:$0xff]
        %v354 = vld [vmem:[#allocation2 + $0x3c0] sm:$0xff]
        %v355 = vld [vmem:[#allocation2 + $0x3c8] sm:$0xff]
        %v356 = vld [vmem:[#allocation2 + $0x3d0] sm:$0xff]
        %v357 = vld [vmem:[#allocation2 + $0x3d8] sm:$0xff]
        %v358 = vld [vmem:[#allocation2 + $0x3e0] sm:$0xff]
        %v359 = vld [vmem:[#allocation2 + $0x3e8] sm:$0xff]
        %v360 = vld [vmem:[#allocation2 + $0x3f0] sm:$0xff]
        %v361 = vld [vmem:[#allocation2 + $0x3f8] sm:$0xff]
        %v362 = vld [vmem:[#allocation2 + $0x400] sm:$0xff]
        %v363 = vld [vmem:[#allocation2 + $0x408] sm:$0xff]
        %v364 = vld [vmem:[#allocation2 + $0x410] sm:$0xff]
        %v365 = vld [vmem:[#allocation2 + $0x418] sm:$0xff]
        %v366 = vld [vmem:[#allocation2 + $0x420] sm:$0xff]
        %v367 = vld [vmem:[#allocation2 + $0x428] sm:$0xff]
        %v368 = vld [vmem:[#allocation2 + $0x430] sm:$0xff]
        %v369 = vld [vmem:[#allocation2 + $0x438] sm:$0xff]
        %v370 = vld [vmem:[#allocation2 + $0x440] sm:$0xff]
        %v371 = vld [vmem:[#allocation2 + $0x448] sm:$0xff]
        %v372 = vld [vmem:[#allocation2 + $0x450] sm:$0xff]
        %v373 = vld [vmem:[#allocation2 + $0x458] sm:$0xff]
        %v374 = vld [vmem:[#allocation2 + $0x460] sm:$0xff]
        %v375 = vld [vmem:[#allocation2 + $0x468] sm:$0xff]
        %v376 = vld [vmem:[#allocation2 + $0x470] sm:$0xff]
        %v377 = vld [vmem:[#allocation2 + $0x478] sm:$0xff]
        %v378 = vld [vmem:[#allocation2 + $0x480] sm:$0xff]
        %v379 = vld [vmem:[#allocation2 + $0x488] sm:$0xff]
        %v380 = vld [vmem:[#allocation2 + $0x490] sm:$0xff]
        %v381 = vld [vmem:[#allocation2 + $0x498] sm:$0xff]
        %v382 = vld [vmem:[#allocation2 + $0x4a0] sm:$0xff]
        %v383 = vld [vmem:[#allocation2 + $0x4a8] sm:$0xff]
        %v384 = vld [vmem:[#allocation2 + $0x4b0] sm:$0xff]
        %v385 = vld [vmem:[#allocation2 + $0x4b8] sm:$0xff]
        %v386 = vld [vmem:[#allocation2 + $0x4c0] sm:$0xff]
        %v387 = vld [vmem:[#allocation2 + $0x4c8] sm:$0xff]
        %v388 = vld [vmem:[#allocation2 + $0x4d0] sm:$0xff]
        %v389 = vld [vmem:[#allocation2 + $0x4d8] sm:$0xff]
        %v390 = vld [vmem:[#allocation2 + $0x4e0] sm:$0xff]
        %v391 = vld [vmem:[#allocation2 + $0x4e8] sm:$0xff]
        %v392 = vld [vmem:[#allocation2 + $0x4f0] sm:$0xff]
        %v393 = vld [vmem:[#allocation2 + $0x4f8] sm:$0xff]
        %v394 = vld [vmem:[#allocation2 + $0x500] sm:$0xff]
        %v395 = vld [vmem:[#allocation2 + $0x508] sm:$0xff]
        %v396 = vld [vmem:[#allocation2 + $0x510] sm:$0xff]
        %v397 = vld [vmem:[#allocation2 + $0x518] sm:$0xff]
        %v398 = vld [vmem:[#allocation2 + $0x520] sm:$0xff]
        %v399 = vld [vmem:[#allocation2 + $0x528] sm:$0xff]
        %v400 = vld [vmem:[#allocation2 + $0x530] sm:$0xff]
        %v401 = vld [vmem:[#allocation2 + $0x538] sm:$0xff]
        %v402 = vld [vmem:[#allocation2 + $0x540] sm:$0xff]
        %v403 = vld [vmem:[#allocation2 + $0x548] sm:$0xff]
        %v404 = vld [vmem:[#allocation2 + $0x550] sm:$0xff]
        %v405 = vld [vmem:[#allocation2 + $0x558] sm:$0xff]
        %v406 = vld [vmem:[#allocation2 + $0x560] sm:$0xff]
        %v407 = vld [vmem:[#allocation2 + $0x568] sm:$0xff]
        %v408 = vld [vmem:[#allocation2 + $0x570] sm:$0xff]
        %v409 = vld [vmem:[#allocation2 + $0x578] sm:$0xff]
        %v410 = vld [vmem:[#allocation2 + $0x580] sm:$0xff]
        %v411 = vld [vmem:[#allocation2 + $0x588] sm:$0xff]
        %v412 = vld [vmem:[#allocation2 + $0x590] sm:$0xff]
        %v413 = vld [vmem:[#allocation2 + $0x598] sm:$0xff]
        %v414 = vld [vmem:[#allocation2 + $0x5a0] sm:$0xff]
        %v415 = vld [vmem:[#allocation2 + $0x5a8] sm:$0xff]
        %v416 = vld [vmem:[#allocation2 + $0x5b0] sm:$0xff]
        %v417 = vld [vmem:[#allocation2 + $0x5b8] sm:$0xff]
        %v418 = vld [vmem:[#allocation2 + $0x5c0] sm:$0xff]
        %v419 = vld [vmem:[#allocation2 + $0x5c8] sm:$0xff]
        %v420 = vld [vmem:[#allocation2 + $0x5d0] sm:$0xff]
        %v421 = vld [vmem:[#allocation2 + $0x5d8] sm:$0xff]
        %v422 = vld [vmem:[#allocation2 + $0x5e0] sm:$0xff]
        %v423 = vld [vmem:[#allocation2 + $0x5e8] sm:$0xff]
        %v424 = vld [vmem:[#allocation2 + $0x5f0] sm:$0xff]
        %v425 = vld [vmem:[#allocation2 + $0x5f8] sm:$0xff]
        %v426 = vld [vmem:[#allocation2 + $0x600] sm:$0xff]
        %v427 = vld [vmem:[#allocation2 + $0x608] sm:$0xff]
        %v428 = vld [vmem:[#allocation2 + $0x610] sm:$0xff]
        %v429 = vld [vmem:[#allocation2 + $0x618] sm:$0xff]
        %v430 = vld [vmem:[#allocation2 + $0x620] sm:$0xff]
        %v431 = vld [vmem:[#allocation2 + $0x628] sm:$0xff]
        %v432 = vld [vmem:[#allocation2 + $0x630] sm:$0xff]
        %v433 = vld [vmem:[#allocation2 + $0x638] sm:$0xff]
        %v434 = vld [vmem:[#allocation2 + $0x640] sm:$0xff]
        %v435 = vld [vmem:[#allocation2 + $0x648] sm:$0xff]
        %v436 = vld [vmem:[#allocation2 + $0x650] sm:$0xff]
        %v437 = vld [vmem:[#allocation2 + $0x658] sm:$0xff]
        %v438 = vld [vmem:[#allocation2 + $0x660] sm:$0xff]
        %v439 = vld [vmem:[#allocation2 + $0x668] sm:$0xff]
        %v440 = vld [vmem:[#allocation2 + $0x670] sm:$0xff]
        %v441 = vld [vmem:[#allocation2 + $0x678] sm:$0xff]
        %v442 = vld [vmem:[#allocation2 + $0x680] sm:$0xff]
        %v443 = vld [vmem:[#allocation2 + $0x688] sm:$0xff]
        %v444 = vld [vmem:[#allocation2 + $0x690] sm:$0xff]
        %v445 = vld [vmem:[#allocation2 + $0x698] sm:$0xff]
        %v446 = vld [vmem:[#allocation2 + $0x6a0] sm:$0xff]
        %v447 = vld [vmem:[#allocation2 + $0x6a8] sm:$0xff]
        %v448 = vld [vmem:[#allocation2 + $0x6b0] sm:$0xff]
        %v449 = vld [vmem:[#allocation2 + $0x6b8] sm:$0xff]
        %v450 = vld [vmem:[#allocation2 + $0x6c0] sm:$0xff]
        %v451 = vld [vmem:[#allocation2 + $0x6c8] sm:$0xff]
        %v452 = vld [vmem:[#allocation2 + $0x6d0] sm:$0xff]
        %v453 = vld [vmem:[#allocation2 + $0x6d8] sm:$0xff]
        %v454 = vld [vmem:[#allocation2 + $0x6e0] sm:$0xff]
        %v455 = vld [vmem:[#allocation2 + $0x6e8] sm:$0xff]
        %v456 = vld [vmem:[#allocation2 + $0x6f0] sm:$0xff]
        %v457 = vld [vmem:[#allocation2 + $0x6f8] sm:$0xff]
        %v458 = vld [vmem:[#allocation2 + $0x700] sm:$0xff]
        %v459 = vld [vmem:[#allocation2 + $0x708] sm:$0xff]
        %v460 = vld [vmem:[#allocation2 + $0x710] sm:$0xff]
        %v461 = vld [vmem:[#allocation2 + $0x718] sm:$0xff]
        %v462 = vld [vmem:[#allocation2 + $0x720] sm:$0xff]
        %v463 = vld [vmem:[#allocation2 + $0x728] sm:$0xff]
        %v464 = vld [vmem:[#allocation2 + $0x730] sm:$0xff]
        %v465 = vld [vmem:[#allocation2 + $0x738] sm:$0xff]
        %v466 = vld [vmem:[#allocation2 + $0x740] sm:$0xff]
        %v467 = vld [vmem:[#allocation2 + $0x748] sm:$0xff]
        %v468 = vld [vmem:[#allocation2 + $0x750] sm:$0xff]
        %v469 = vld [vmem:[#allocation2 + $0x758] sm:$0xff]
        %v470 = vld [vmem:[#allocation2 + $0x760] sm:$0xff]
        %v471 = vld [vmem:[#allocation2 + $0x768] sm:$0xff]
        %v472 = vld [vmem:[#allocation2 + $0x770] sm:$0xff]
        %v473 = vld [vmem:[#allocation2 + $0x778] sm:$0xff]
        %v474 = vld [vmem:[#allocation2 + $0x780] sm:$0xff]
        %v475 = vld [vmem:[#allocation2 + $0x788] sm:$0xff]
        %v476 = vld [vmem:[#allocation2 + $0x790] sm:$0xff]
        %v477 = vld [vmem:[#allocation2 + $0x798] sm:$0xff]
        %v478 = vld [vmem:[#allocation2 + $0x7a0] sm:$0xff]
        %v479 = vld [vmem:[#allocation2 + $0x7a8] sm:$0xff]
        %v480 = vld [vmem:[#allocation2 + $0x7b0] sm:$0xff]
        %v481 = vld [vmem:[#allocation2 + $0x7b8] sm:$0xff]
        %v482 = vld [vmem:[#allocation2 + $0x7c0] sm:$0xff]
        %v483 = vld [vmem:[#allocation2 + $0x7c8] sm:$0xff]
        %v484 = vld [vmem:[#allocation2 + $0x7d0] sm:$0xff]
        %v485 = vld [vmem:[#allocation2 + $0x7d8] sm:$0xff]
        %v486 = vld [vmem:[#allocation2 + $0x7e0] sm:$0xff]
        %v487 = vld [vmem:[#allocation2 + $0x7e8] sm:$0xff]
        %v488 = vld [vmem:[#allocation2 + $0x7f0] sm:$0xff]
        %v489 = vld [vmem:[#allocation2 + $0x7f8] sm:$0xff]
        %v490 = vld [vmem:[#allocation2 + $0x800] sm:$0xff]
        %v491 = vld [vmem:[#allocation2 + $0x808] sm:$0xff]
        %v492 = vld [vmem:[#allocation2 + $0x810] sm:$0xff]
        %v493 = vld [vmem:[#allocation2 + $0x818] sm:$0xff]
        %v494 = vld [vmem:[#allocation2 + $0x820] sm:$0xff]
        %v495 = vld [vmem:[#allocation2 + $0x828] sm:$0xff]
        %v496 = vld [vmem:[#allocation2 + $0x830] sm:$0xff]
        %v497 = vld [vmem:[#allocation2 + $0x838] sm:$0xff]
        %v498 = vld [vmem:[#allocation2 + $0x840] sm:$0xff]
        %v499 = vld [vmem:[#allocation2 + $0x848] sm:$0xff]
        %v500 = vld [vmem:[#allocation2 + $0x850] sm:$0xff]
        %v501 = vld [vmem:[#allocation2 + $0x858] sm:$0xff]
        %v502 = vld [vmem:[#allocation2 + $0x860] sm:$0xff]
        %v503 = vld [vmem:[#allocation2 + $0x868] sm:$0xff]
        %v504 = vld [vmem:[#allocation2 + $0x870] sm:$0xff]
        %v505 = vld [vmem:[#allocation2 + $0x878] sm:$0xff]
        %v506 = vld [vmem:[#allocation2 + $0x880] sm:$0xff]
        %v507 = vld [vmem:[#allocation2 + $0x888] sm:$0xff]
        %v508 = vld [vmem:[#allocation2 + $0x890] sm:$0xff]
        %v509 = vld [vmem:[#allocation2 + $0x898] sm:$0xff]
        %v510 = vld [vmem:[#allocation2 + $0x8a0] sm:$0xff]
        %v511 = vld [vmem:[#allocation2 + $0x8a8] sm:$0xff]
        %v512 = vld [vmem:[#allocation2 + $0x8b0] sm:$0xff]
        %v513 = vld [vmem:[#allocation2 + $0x8b8] sm:$0xff]
        %v514 = vld [vmem:[#allocation2 + $0x8c0] sm:$0xff]
        %v515 = vld [vmem:[#allocation2 + $0x8c8] sm:$0xff]
        %v516 = vld [vmem:[#allocation2 + $0x8d0] sm:$0xff]
        %v517 = vld [vmem:[#allocation2 + $0x8d8] sm:$0xff]
        %v518 = vld [vmem:[#allocation2 + $0x8e0] sm:$0xff]
        %v519 = vld [vmem:[#allocation2 + $0x8e8] sm:$0xff]
        %v520 = vld [vmem:[#allocation2 + $0x8f0] sm:$0xff]
        %v521 = vld [vmem:[#allocation2 + $0x8f8] sm:$0xff]
        %v522 = vld [vmem:[#allocation2 + $0x900] sm:$0xff]
        %v523 = vld [vmem:[#allocation2 + $0x908] sm:$0xff]
        %v524 = vld [vmem:[#allocation2 + $0x910] sm:$0xff]
        %v525 = vld [vmem:[#allocation2 + $0x918] sm:$0xff]
        %v526 = vld [vmem:[#allocation2 + $0x920] sm:$0xff]
        %v527 = vld [vmem:[#allocation2 + $0x928] sm:$0xff]
        %v528 = vld [vmem:[#allocation2 + $0x930] sm:$0xff]
        %v529 = vld [vmem:[#allocation2 + $0x938] sm:$0xff]
        %v530 = vld [vmem:[#allocation2 + $0x940] sm:$0xff]
        %v531 = vld [vmem:[#allocation2 + $0x948] sm:$0xff]
        %v532 = vld [vmem:[#allocation2 + $0x950] sm:$0xff]
        %v533 = vld [vmem:[#allocation2 + $0x958] sm:$0xff]
        %v534 = vld [vmem:[#allocation2 + $0x960] sm:$0xff]
        %v535 = vld [vmem:[#allocation2 + $0x968] sm:$0xff]
        %v536 = vld [vmem:[#allocation2 + $0x970] sm:$0xff]
        %v537 = vld [vmem:[#allocation2 + $0x978] sm:$0xff]
        %v538 = vld [vmem:[#allocation2 + $0x980] sm:$0xff]
        %v539 = vld [vmem:[#allocation2 + $0x988] sm:$0xff]
        %v540 = vld [vmem:[#allocation2 + $0x990] sm:$0xff]
        %v541 = vld [vmem:[#allocation2 + $0x998] sm:$0xff]
        %v542 = vld [vmem:[#allocation2 + $0x9a0] sm:$0xff]
        %v543 = vld [vmem:[#allocation2 + $0x9a8] sm:$0xff]
        %v544 = vld [vmem:[#allocation2 + $0x9b0] sm:$0xff]
        %v545 = vld [vmem:[#allocation2 + $0x9b8] sm:$0xff]
        %v546 = vld [vmem:[#allocation2 + $0x9c0] sm:$0xff]
        %v547 = vld [vmem:[#allocation2 + $0x9c8] sm:$0xff]
        %v548 = vld [vmem:[#allocation2 + $0x9d0] sm:$0xff]
        %v549 = vld [vmem:[#allocation2 + $0x9d8] sm:$0xff]
        %v550 = vld [vmem:[#allocation2 + $0x9e0] sm:$0xff]
        %v551 = vld [vmem:[#allocation2 + $0x9e8] sm:$0xff]
        %v552 = vld [vmem:[#allocation2 + $0x9f0] sm:$0xff]
        %v553 = vld [vmem:[#allocation2 + $0x9f8] sm:$0xff]
        %v554 = vld [vmem:[#allocation2 + $0xa00] sm:$0xff]
        %v555 = vld [vmem:[#allocation2 + $0xa08] sm:$0xff]
        %v556 = vld [vmem:[#allocation2 + $0xa10] sm:$0xff]
        %v557 = vld [vmem:[#allocation2 + $0xa18] sm:$0xff]
        %v558 = vld [vmem:[#allocation2 + $0xa20] sm:$0xff]
        %v559 = vld [vmem:[#allocation2 + $0xa28] sm:$0xff]
        %v560 = vld [vmem:[#allocation2 + $0xa30] sm:$0xff]
        %v561 = vld [vmem:[#allocation2 + $0xa38] sm:$0xff]
        %v562 = vld [vmem:[#allocation2 + $0xa40] sm:$0xff]
        %v563 = vld [vmem:[#allocation2 + $0xa48] sm:$0xff]
        %v564 = vld [vmem:[#allocation2 + $0xa50] sm:$0xff]
        %v565 = vld [vmem:[#allocation2 + $0xa58] sm:$0xff]
        %v566 = vld [vmem:[#allocation2 + $0xa60] sm:$0xff]
        %v567 = vld [vmem:[#allocation2 + $0xa68] sm:$0xff]
        %v568 = vld [vmem:[#allocation2 + $0xa70] sm:$0xff]
        %v569 = vld [vmem:[#allocation2 + $0xa78] sm:$0xff]
        %v570 = vld [vmem:[#allocation2 + $0xa80] sm:$0xff]
        %v571 = vld [vmem:[#allocation2 + $0xa88] sm:$0xff]
        %v572 = vld [vmem:[#allocation2 + $0xa90] sm:$0xff]
        %v573 = vld [vmem:[#allocation2 + $0xa98] sm:$0xff]
        %v574 = vld [vmem:[#allocation2 + $0xaa0] sm:$0xff]
        %v575 = vld [vmem:[#allocation2 + $0xaa8] sm:$0xff]
        %v576 = vld [vmem:[#allocation2 + $0xab0] sm:$0xff]
        %v577 = vld [vmem:[#allocation2 + $0xab8] sm:$0xff]
        %v578 = vld [vmem:[#allocation2 + $0xac0] sm:$0xff]
        %v579 = vld [vmem:[#allocation2 + $0xac8] sm:$0xff]
        %v580 = vld [vmem:[#allocation2 + $0xad0] sm:$0xff]
        %v581 = vld [vmem:[#allocation2 + $0xad8] sm:$0xff]
        %v582 = vld [vmem:[#allocation2 + $0xae0] sm:$0xff]
        %v583 = vld [vmem:[#allocation2 + $0xae8] sm:$0xff]
        %v584 = vld [vmem:[#allocation2 + $0xaf0] sm:$0xff]
        %v585 = vld [vmem:[#allocation2 + $0xaf8] sm:$0xff]
        %v586 = vld [vmem:[#allocation2 + $0xb00] sm:$0xff]
        %v587 = vld [vmem:[#allocation2 + $0xb08] sm:$0xff]
        %v588 = vld [vmem:[#allocation2 + $0xb10] sm:$0xff]
        %v589 = vld [vmem:[#allocation2 + $0xb18] sm:$0xff]
        %v590 = vld [vmem:[#allocation2 + $0xb20] sm:$0xff]
        %v591 = vld [vmem:[#allocation2 + $0xb28] sm:$0xff]
        %v592 = vld [vmem:[#allocation2 + $0xb30] sm:$0xff]
        %v593 = vld [vmem:[#allocation2 + $0xb38] sm:$0xff]
        %v594 = vld [vmem:[#allocation2 + $0xb40] sm:$0xff]
        %v595 = vld [vmem:[#allocation2 + $0xb48] sm:$0xff]
        %v596 = vld [vmem:[#allocation2 + $0xb50] sm:$0xff]
        %v597 = vld [vmem:[#allocation2 + $0xb58] sm:$0xff]
        %v598 = vld [vmem:[#allocation2 + $0xb60] sm:$0xff]
        %v599 = vld [vmem:[#allocation2 + $0xb68] sm:$0xff]
        %v600 = vld [vmem:[#allocation2 + $0xb70] sm:$0xff]
        %v601 = vld [vmem:[#allocation2 + $0xb78] sm:$0xff]
        %v602 = vld [vmem:[#allocation2 + $0xb80] sm:$0xff]
        %v603 = vld [vmem:[#allocation2 + $0xb88] sm:$0xff]
        %v604 = vld [vmem:[#allocation2 + $0xb90] sm:$0xff]
        %v605 = vld [vmem:[#allocation2 + $0xb98] sm:$0xff]
        %v606 = vld [vmem:[#allocation2 + $0xba0] sm:$0xff]
        %v607 = vld [vmem:[#allocation2 + $0xba8] sm:$0xff]
        %v608 = vld [vmem:[#allocation2 + $0xbb0] sm:$0xff]
        %v609 = vld [vmem:[#allocation2 + $0xbb8] sm:$0xff]
        %v610 = vld [vmem:[#allocation2 + $0xbc0] sm:$0xff]
        %v611 = vld [vmem:[#allocation2 + $0xbc8] sm:$0xff]
        %v612 = vld [vmem:[#allocation2 + $0xbd0] sm:$0xff]
        %v613 = vld [vmem:[#allocation2 + $0xbd8] sm:$0xff]
        %v614 = vld [vmem:[#allocation2 + $0xbe0] sm:$0xff]
        %v615 = vld [vmem:[#allocation2 + $0xbe8] sm:$0xff]
        %v616 = vld [vmem:[#allocation2 + $0xbf0] sm:$0xff]
        %v617 = vld [vmem:[#allocation2 + $0xbf8] sm:$0xff]
        %v618 = vld [vmem:[#allocation2 + $0xc00] sm:$0xff]
        %v619 = vld [vmem:[#allocation2 + $0xc08] sm:$0xff]
        %v620 = vld [vmem:[#allocation2 + $0xc10] sm:$0xff]
        %v621 = vld [vmem:[#allocation2 + $0xc18] sm:$0xff]
        %v622 = vld [vmem:[#allocation2 + $0xc20] sm:$0xff]
        %v623 = vld [vmem:[#allocation2 + $0xc28] sm:$0xff]
        %v624 = vld [vmem:[#allocation2 + $0xc30] sm:$0xff]
        %v625 = vld [vmem:[#allocation2 + $0xc38] sm:$0xff]
        %v626 = vld [vmem:[#allocation2 + $0xc40] sm:$0xff]
        %v627 = vld [vmem:[#allocation2 + $0xc48] sm:$0xff]
        %v628 = vld [vmem:[#allocation2 + $0xc50] sm:$0xff]
        %v629 = vld [vmem:[#allocation2 + $0xc58] sm:$0xff]
        %v630 = vld [vmem:[#allocation2 + $0xc60] sm:$0xff]
        %v631 = vld [vmem:[#allocation2 + $0xc68] sm:$0xff]
        %v632 = vld [vmem:[#allocation2 + $0xc70] sm:$0xff]
        %v633 = vld [vmem:[#allocation2 + $0xc78] sm:$0xff]
        %v634 = vld [vmem:[#allocation2 + $0xc80] sm:$0xff]
        %v635 = vld [vmem:[#allocation2 + $0xc88] sm:$0xff]
        %v636 = vld [vmem:[#allocation2 + $0xc90] sm:$0xff]
        %v637 = vld [vmem:[#allocation2 + $0xc98] sm:$0xff]
        %v638 = vld [vmem:[#allocation2 + $0xca0] sm:$0xff]
        %v639 = vld [vmem:[#allocation2 + $0xca8] sm:$0xff]
        %v640 = vld [vmem:[#allocation2 + $0xcb0] sm:$0xff]
        %v641 = vld [vmem:[#allocation2 + $0xcb8] sm:$0xff]
        %v642 = vld [vmem:[#allocation2 + $0xcc0] sm:$0xff]
        %v643 = vld [vmem:[#allocation2 + $0xcc8] sm:$0xff]
        %v644 = vld [vmem:[#allocation2 + $0xcd0] sm:$0xff]
        %v645 = vld [vmem:[#allocation2 + $0xcd8] sm:$0xff]
        %v646 = vld [vmem:[#allocation2 + $0xce0] sm:$0xff]
        %v647 = vld [vmem:[#allocation2 + $0xce8] sm:$0xff]
        %v648 = vld [vmem:[#allocation2 + $0xcf0] sm:$0xff]
        %v649 = vld [vmem:[#allocation2 + $0xcf8] sm:$0xff]
        %v650 = vld [vmem:[#allocation2 + $0xd00] sm:$0xff]
        %v651 = vld [vmem:[#allocation2 + $0xd08] sm:$0xff]
        %v652 = vld [vmem:[#allocation2 + $0xd10] sm:$0xff]
        %v653 = vld [vmem:[#allocation2 + $0xd18] sm:$0xff]
        %v654 = vld [vmem:[#allocation2 + $0xd20] sm:$0xff]
        %v655 = vld [vmem:[#allocation2 + $0xd28] sm:$0xff]
        %v656 = vld [vmem:[#allocation2 + $0xd30] sm:$0xff]
        %v657 = vld [vmem:[#allocation2 + $0xd38] sm:$0xff]
        %v658 = vld [vmem:[#allocation2 + $0xd40] sm:$0xff]
        %v659 = vld [vmem:[#allocation2 + $0xd48] sm:$0xff]
        %v660 = vld [vmem:[#allocation2 + $0xd50] sm:$0xff]
        %v661 = vld [vmem:[#allocation2 + $0xd58] sm:$0xff]
        %v662 = vld [vmem:[#allocation2 + $0xd60] sm:$0xff]
        %v663 = vld [vmem:[#allocation2 + $0xd68] sm:$0xff]
        %v664 = vld [vmem:[#allocation2 + $0xd70] sm:$0xff]
        %v665 = vld [vmem:[#allocation2 + $0xd78] sm:$0xff]
        %v666 = vld [vmem:[#allocation2 + $0xd80] sm:$0xff]
        %v667 = vld [vmem:[#allocation2 + $0xd88] sm:$0xff]
        %v668 = vld [vmem:[#allocation2 + $0xd90] sm:$0xff]
        %v669 = vld [vmem:[#allocation2 + $0xd98] sm:$0xff]
        %v670 = vld [vmem:[#allocation2 + $0xda0] sm:$0xff]
        %v671 = vld [vmem:[#allocation2 + $0xda8] sm:$0xff]
        %v672 = vld [vmem:[#allocation2 + $0xdb0] sm:$0xff]
        %v673 = vld [vmem:[#allocation2 + $0xdb8] sm:$0xff]
        %v674 = vld [vmem:[#allocation2 + $0xdc0] sm:$0xff]
        %v675 = vld [vmem:[#allocation2 + $0xdc8] sm:$0xff]
        %v676 = vld [vmem:[#allocation2 + $0xdd0] sm:$0xff]
        %v677 = vld [vmem:[#allocation2 + $0xdd8] sm:$0xff]
        %v678 = vld [vmem:[#allocation2 + $0xde0] sm:$0xff]
        %v679 = vld [vmem:[#allocation2 + $0xde8] sm:$0xff]
        %v680 = vld [vmem:[#allocation2 + $0xdf0] sm:$0xff]
        %v681 = vld [vmem:[#allocation2 + $0xdf8] sm:$0xff]
        %v682 = vld [vmem:[#allocation2 + $0xe00] sm:$0xff]
        %v683 = vld [vmem:[#allocation2 + $0xe08] sm:$0xff]
        %v684 = vld [vmem:[#allocation2 + $0xe10] sm:$0xff]
        %v685 = vld [vmem:[#allocation2 + $0xe18] sm:$0xff]
        %v686 = vld [vmem:[#allocation2 + $0xe20] sm:$0xff]
        %v687 = vld [vmem:[#allocation2 + $0xe28] sm:$0xff]
        %v688 = vld [vmem:[#allocation2 + $0xe30] sm:$0xff]
        %v689 = vld [vmem:[#allocation2 + $0xe38] sm:$0xff]
        %v690 = vld [vmem:[#allocation2 + $0xe40] sm:$0xff]
        %v691 = vld [vmem:[#allocation2 + $0xe48] sm:$0xff]
        %v692 = vld [vmem:[#allocation2 + $0xe50] sm:$0xff]
        %v693 = vld [vmem:[#allocation2 + $0xe58] sm:$0xff]
        %v694 = vld [vmem:[#allocation2 + $0xe60] sm:$0xff]
        %v695 = vld [vmem:[#allocation2 + $0xe68] sm:$0xff]
        %v696 = vld [vmem:[#allocation2 + $0xe70] sm:$0xff]
        %v697 = vld [vmem:[#allocation2 + $0xe78] sm:$0xff]
        %v698 = vld [vmem:[#allocation2 + $0xe80] sm:$0xff]
        %v699 = vld [vmem:[#allocation2 + $0xe88] sm:$0xff]
        %v700 = vld [vmem:[#allocation2 + $0xe90] sm:$0xff]
        %v701 = vld [vmem:[#allocation2 + $0xe98] sm:$0xff]
        %v702 = vld [vmem:[#allocation2 + $0xea0] sm:$0xff]
        %v703 = vld [vmem:[#allocation2 + $0xea8] sm:$0xff]
        %v704 = vld [vmem:[#allocation2 + $0xeb0] sm:$0xff]
        %v705 = vld [vmem:[#allocation2 + $0xeb8] sm:$0xff]
        %v706 = vld [vmem:[#allocation2 + $0xec0] sm:$0xff]
        %v707 = vld [vmem:[#allocation2 + $0xec8] sm:$0xff]
        %v708 = vld [vmem:[#allocation2 + $0xed0] sm:$0xff]
        %v709 = vld [vmem:[#allocation2 + $0xed8] sm:$0xff]
        %v710 = vld [vmem:[#allocation2 + $0xee0] sm:$0xff]
        %v711 = vld [vmem:[#allocation2 + $0xee8] sm:$0xff]
        %v712 = vld [vmem:[#allocation2 + $0xef0] sm:$0xff]
        %v713 = vld [vmem:[#allocation2 + $0xef8] sm:$0xff]
        %v714 = vld [vmem:[#allocation2 + $0xf00] sm:$0xff]
        %v715 = vld [vmem:[#allocation2 + $0xf08] sm:$0xff]
        %v716 = vld [vmem:[#allocation2 + $0xf10] sm:$0xff]
        %v717 = vld [vmem:[#allocation2 + $0xf18] sm:$0xff]
        %v718 = vld [vmem:[#allocation2 + $0xf20] sm:$0xff]
        %v719 = vld [vmem:[#allocation2 + $0xf28] sm:$0xff]
        %v720 = vld [vmem:[#allocation2 + $0xf30] sm:$0xff]
        %v721 = vld [vmem:[#allocation2 + $0xf38] sm:$0xff]
        %v722 = vld [vmem:[#allocation2 + $0xf40] sm:$0xff]
        %v723 = vld [vmem:[#allocation2 + $0xf48] sm:$0xff]
        %v724 = vld [vmem:[#allocation2 + $0xf50] sm:$0xff]
        %v725 = vld [vmem:[#allocation2 + $0xf58] sm:$0xff]
        %v726 = vld [vmem:[#allocation2 + $0xf60] sm:$0xff]
        %v727 = vld [vmem:[#allocation2 + $0xf68] sm:$0xff]
        %v728 = vld [vmem:[#allocation2 + $0xf70] sm:$0xff]
        %v729 = vld [vmem:[#allocation2 + $0xf78] sm:$0xff]
        %v730 = vld [vmem:[#allocation2 + $0xf80] sm:$0xff]
        %v731 = vld [vmem:[#allocation2 + $0xf88] sm:$0xff]
        %v732 = vld [vmem:[#allocation2 + $0xf90] sm:$0xff]
        %v733 = vld [vmem:[#allocation2 + $0xf98] sm:$0xff]
        %v734 = vld [vmem:[#allocation2 + $0xfa0] sm:$0xff]
        %v735 = vld [vmem:[#allocation2 + $0xfa8] sm:$0xff]
        %v736 = vld [vmem:[#allocation2 + $0xfb0] sm:$0xff]
        %v737 = vld [vmem:[#allocation2 + $0xfb8] sm:$0xff]
        %v738 = vld [vmem:[#allocation2 + $0xfc0] sm:$0xff]
        %v739 = vld [vmem:[#allocation2 + $0xfc8] sm:$0xff]
        %v740 = vld [vmem:[#allocation2 + $0xfd0] sm:$0xff]
        %v741 = vld [vmem:[#allocation2 + $0xfd8] sm:$0xff]
        %v742 = vld [vmem:[#allocation2 + $0xfe0] sm:$0xff]
        %v743 = vld [vmem:[#allocation2 + $0xfe8] sm:$0xff]
        %v744 = vld [vmem:[#allocation2 + $0xff0] sm:$0xff]
        %v745 = vld [vmem:[#allocation2 + $0xff8] sm:$0xff]
        %v746 = vld [vmem:[#allocation2 + $0x1000] sm:$0xff]
        %v747 = vld [vmem:[#allocation2 + $0x1008] sm:$0xff]
        %v748 = vld [vmem:[#allocation2 + $0x1010] sm:$0xff]
        %v749 = vld [vmem:[#allocation2 + $0x1018] sm:$0xff]
        %v750 = vld [vmem:[#allocation2 + $0x1020] sm:$0xff]
        %v751 = vld [vmem:[#allocation2 + $0x1028] sm:$0xff]
        %v752 = vld [vmem:[#allocation2 + $0x1030] sm:$0xff]
        %v753 = vld [vmem:[#allocation2 + $0x1038] sm:$0xff]
        %v754 = vld [vmem:[#allocation2 + $0x1040] sm:$0xff]
        %v755 = vld [vmem:[#allocation2 + $0x1048] sm:$0xff]
        %v756 = vld [vmem:[#allocation2 + $0x1050] sm:$0xff]
        %v757 = vld [vmem:[#allocation2 + $0x1058] sm:$0xff]
        %v758 = vld [vmem:[#allocation2 + $0x1060] sm:$0xff]
        %v759 = vld [vmem:[#allocation2 + $0x1068] sm:$0xff]
        %v760 = vld [vmem:[#allocation2 + $0x1070] sm:$0xff]
        %v761 = vld [vmem:[#allocation2 + $0x1078] sm:$0xff]
        %v762 = vld [vmem:[#allocation2 + $0x1080] sm:$0xff]
        %v763 = vld [vmem:[#allocation2 + $0x1088] sm:$0xff]
        %v764 = vld [vmem:[#allocation2 + $0x1090] sm:$0xff]
        %v765 = vld [vmem:[#allocation2 + $0x1098] sm:$0xff]
        %v766 = vld [vmem:[#allocation2 + $0x10a0] sm:$0xff]
        %v767 = vld [vmem:[#allocation2 + $0x10a8] sm:$0xff]
        %v768 = vld [vmem:[#allocation2 + $0x10b0] sm:$0xff]
        %v769 = vld [vmem:[#allocation2 + $0x10b8] sm:$0xff]
        %v770 = vld [vmem:[#allocation2 + $0x10c0] sm:$0xff]
        %v771 = vld [vmem:[#allocation2 + $0x10c8] sm:$0xff]
        %v772 = vld [vmem:[#allocation2 + $0x10d0] sm:$0xff]
        %v773 = vld [vmem:[#allocation2 + $0x10d8] sm:$0xff]
        %v774 = vld [vmem:[#allocation2 + $0x10e0] sm:$0xff]
        %v775 = vld [vmem:[#allocation2 + $0x10e8] sm:$0xff]
        %v776 = vld [vmem:[#allocation2 + $0x10f0] sm:$0xff]
        %v777 = vld [vmem:[#allocation2 + $0x10f8] sm:$0xff]
        %v778 = vld [vmem:[#allocation2 + $0x1100] sm:$0xff]
        %v779 = vld [vmem:[#allocation2 + $0x1108] sm:$0xff]
        %v780 = vld [vmem:[#allocation2 + $0x1110] sm:$0xff]
        %v781 = vld [vmem:[#allocation2 + $0x1118] sm:$0xff]
        %v782 = vld [vmem:[#allocation2 + $0x1120] sm:$0xff]
        %v783 = vld [vmem:[#allocation2 + $0x1128] sm:$0xff]
        %v784 = vld [vmem:[#allocation2 + $0x1130] sm:$0xff]
        %v785 = vld [vmem:[#allocation2 + $0x1138] sm:$0xff]
        %v786 = vld [vmem:[#allocation2 + $0x1140] sm:$0xff]
        %v787 = vld [vmem:[#allocation2 + $0x1148] sm:$0xff]
        %v788 = vld [vmem:[#allocation2 + $0x1150] sm:$0xff]
        %v789 = vld [vmem:[#allocation2 + $0x1158] sm:$0xff]
        %v790 = vld [vmem:[#allocation2 + $0x1160] sm:$0xff]
        %v791 = vld [vmem:[#allocation2 + $0x1168] sm:$0xff]
        %v792 = vld [vmem:[#allocation2 + $0x1170] sm:$0xff]
        %v793 = vld [vmem:[#allocation2 + $0x1178] sm:$0xff]
        %v794 = vld [vmem:[#allocation2 + $0x1180] sm:$0xff]
        %v795 = vld [vmem:[#allocation2 + $0x1188] sm:$0xff]
        %v796 = vld [vmem:[#allocation2 + $0x1190] sm:$0xff]
        %v797 = vld [vmem:[#allocation2 + $0x1198] sm:$0xff]
        %v798 = vld [vmem:[#allocation2 + $0x11a0] sm:$0xff]
        %v799 = vld [vmem:[#allocation2 + $0x11a8] sm:$0xff]
        %v800 = vld [vmem:[#allocation2 + $0x11b0] sm:$0xff]
        %v801 = vld [vmem:[#allocation2 + $0x11b8] sm:$0xff]
        %v802 = vld [vmem:[#allocation2 + $0x11c0] sm:$0xff]
        %v803 = vld [vmem:[#allocation2 + $0x11c8] sm:$0xff]
        %v804 = vld [vmem:[#allocation2 + $0x11d0] sm:$0xff]
        %v805 = vld [vmem:[#allocation2 + $0x11d8] sm:$0xff]
        %v806 = vld [vmem:[#allocation2 + $0x11e0] sm:$0xff]
        %v807 = vld [vmem:[#allocation2 + $0x11e8] sm:$0xff]
        %v808 = vld [vmem:[#allocation2 + $0x11f0] sm:$0xff]
        %v809 = vld [vmem:[#allocation2 + $0x11f8] sm:$0xff]
        %v810 = vld [vmem:[#allocation2 + $0x1200] sm:$0xff]
        %v811 = vld [vmem:[#allocation2 + $0x1208] sm:$0xff]
        %v812 = vld [vmem:[#allocation2 + $0x1210] sm:$0xff]
        %v813 = vld [vmem:[#allocation2 + $0x1218] sm:$0xff]
        %v814 = vld [vmem:[#allocation2 + $0x1220] sm:$0xff]
        %v815 = vld [vmem:[#allocation2 + $0x1228] sm:$0xff]
        %v816 = vld [vmem:[#allocation2 + $0x1230] sm:$0xff]
        %v817 = vld [vmem:[#allocation2 + $0x1238] sm:$0xff]
        %v818 = vld [vmem:[#allocation2 + $0x1240] sm:$0xff]
        %v819 = vld [vmem:[#allocation2 + $0x1248] sm:$0xff]
        %v820 = vld [vmem:[#allocation2 + $0x1250] sm:$0xff]
        %v821 = vld [vmem:[#allocation2 + $0x1258] sm:$0xff]
        %v822 = vld [vmem:[#allocation2 + $0x1260] sm:$0xff]
        %v823 = vld [vmem:[#allocation2 + $0x1268] sm:$0xff]
        %v824 = vld [vmem:[#allocation2 + $0x1270] sm:$0xff]
        %v825 = vld [vmem:[#allocation2 + $0x1278] sm:$0xff]
        %v826 = vld [vmem:[#allocation2 + $0x1280] sm:$0xff]
        %v827 = vld [vmem:[#allocation2 + $0x1288] sm:$0xff]
        %v828 = vld [vmem:[#allocation2 + $0x1290] sm:$0xff]
        %v829 = vld [vmem:[#allocation2 + $0x1298] sm:$0xff]
        %v830 = vld [vmem:[#allocation2 + $0x12a0] sm:$0xff]
        %v831 = vld [vmem:[#allocation2 + $0x12a8] sm:$0xff]
        %v832 = vld [vmem:[#allocation2 + $0x12b0] sm:$0xff]
        %v833 = vld [vmem:[#allocation2 + $0x12b8] sm:$0xff]
        %v834 = vld [vmem:[#allocation2 + $0x12c0] sm:$0xff]
        %v835 = vld [vmem:[#allocation2 + $0x12c8] sm:$0xff]
        %v836 = vld [vmem:[#allocation2 + $0x12d0] sm:$0xff]
        %v837 = vld [vmem:[#allocation2 + $0x12d8] sm:$0xff]
        %v838 = vld [vmem:[#allocation2 + $0x12e0] sm:$0xff]
        %v839 = vld [vmem:[#allocation2 + $0x12e8] sm:$0xff]
        %v840 = vld [vmem:[#allocation2 + $0x12f0] sm:$0xff]
        %v841 = vld [vmem:[#allocation2 + $0x12f8] sm:$0xff]
        %v842 = vld [vmem:[#allocation2 + $0x1300] sm:$0xff]
        %v843 = vld [vmem:[#allocation2 + $0x1308] sm:$0xff]
        %v844 = vld [vmem:[#allocation2 + $0x1310] sm:$0xff]
        %v845 = vld [vmem:[#allocation2 + $0x1318] sm:$0xff]
        %v846 = vld [vmem:[#allocation2 + $0x1320] sm:$0xff]
        %v847 = vld [vmem:[#allocation2 + $0x1328] sm:$0xff]
        %v848 = vld [vmem:[#allocation2 + $0x1330] sm:$0xff]
        %v849 = vld [vmem:[#allocation2 + $0x1338] sm:$0xff]
        %v850 = vld [vmem:[#allocation2 + $0x1340] sm:$0xff]
        %v851 = vld [vmem:[#allocation2 + $0x1348] sm:$0xff]
        %v852 = vld [vmem:[#allocation2 + $0x1350] sm:$0xff]
        %v853 = vld [vmem:[#allocation2 + $0x1358] sm:$0xff]
        %v854 = vld [vmem:[#allocation2 + $0x1360] sm:$0xff]
        %v855 = vld [vmem:[#allocation2 + $0x1368] sm:$0xff]
        %v856 = vld [vmem:[#allocation2 + $0x1370] sm:$0xff]
        %v857 = vld [vmem:[#allocation2 + $0x1378] sm:$0xff]
        %v858 = vld [vmem:[#allocation2 + $0x1380] sm:$0xff]
        %v859 = vld [vmem:[#allocation2 + $0x1388] sm:$0xff]
        %v860 = vld [vmem:[#allocation2 + $0x1390] sm:$0xff]
        %v861 = vld [vmem:[#allocation2 + $0x1398] sm:$0xff]
        %v862 = vld [vmem:[#allocation2 + $0x13a0] sm:$0xff]
        %v863 = vld [vmem:[#allocation2 + $0x13a8] sm:$0xff]
        %v864 = vld [vmem:[#allocation2 + $0x13b0] sm:$0xff]
        %v865 = vld [vmem:[#allocation2 + $0x13b8] sm:$0xff]
        %v866 = vld [vmem:[#allocation2 + $0x13c0] sm:$0xff]
        %v867 = vld [vmem:[#allocation2 + $0x13c8] sm:$0xff]
        %v868 = vld [vmem:[#allocation2 + $0x13d0] sm:$0xff]
        %v869 = vld [vmem:[#allocation2 + $0x13d8] sm:$0xff]
        %v870 = vld [vmem:[#allocation2 + $0x13e0] sm:$0xff]
        %v871 = vld [vmem:[#allocation2 + $0x13e8] sm:$0xff]
        %v872 = vld [vmem:[#allocation2 + $0x13f0] sm:$0xff]
        %v873 = vld [vmem:[#allocation2 + $0x13f8] sm:$0xff]
        %v874 = vld [vmem:[#allocation2 + $0x1400] sm:$0xff]
        %v875 = vld [vmem:[#allocation2 + $0x1408] sm:$0xff]
        %v876 = vld [vmem:[#allocation2 + $0x1410] sm:$0xff]
        %v877 = vld [vmem:[#allocation2 + $0x1418] sm:$0xff]
        %v878 = vld [vmem:[#allocation2 + $0x1420] sm:$0xff]
        %v879 = vld [vmem:[#allocation2 + $0x1428] sm:$0xff]
        %v880 = vld [vmem:[#allocation2 + $0x1430] sm:$0xff]
        %v881 = vld [vmem:[#allocation2 + $0x1438] sm:$0xff]
        %v882 = vld [vmem:[#allocation2 + $0x1440] sm:$0xff]
        %v883 = vld [vmem:[#allocation2 + $0x1448] sm:$0xff]
        %v884 = vld [vmem:[#allocation2 + $0x1450] sm:$0xff]
        %v885 = vld [vmem:[#allocation2 + $0x1458] sm:$0xff]
        %v886 = vld [vmem:[#allocation2 + $0x1460] sm:$0xff]
        %v887 = vld [vmem:[#allocation2 + $0x1468] sm:$0xff]
        %v888 = vld [vmem:[#allocation2 + $0x1470] sm:$0xff]
        %v889 = vld [vmem:[#allocation2 + $0x1478] sm:$0xff]
        %v890 = vld [vmem:[#allocation2 + $0x1480] sm:$0xff]
        %v891 = vld [vmem:[#allocation2 + $0x1488] sm:$0xff]
        %v892 = vld [vmem:[#allocation2 + $0x1490] sm:$0xff]
        %v893 = vld [vmem:[#allocation2 + $0x1498] sm:$0xff]
        %v894 = vld [vmem:[#allocation2 + $0x14a0] sm:$0xff]
        %v895 = vld [vmem:[#allocation2 + $0x14a8] sm:$0xff]
        %v896 = vld [vmem:[#allocation2 + $0x14b0] sm:$0xff]
        %v897 = vld [vmem:[#allocation2 + $0x14b8] sm:$0xff]
        %v898 = vld [vmem:[#allocation2 + $0x14c0] sm:$0xff]
        %v899 = vld [vmem:[#allocation2 + $0x14c8] sm:$0xff]
        %v900 = vld [vmem:[#allocation2 + $0x14d0] sm:$0xff]
        %v901 = vld [vmem:[#allocation2 + $0x14d8] sm:$0xff]
        %v902 = vld [vmem:[#allocation2 + $0x14e0] sm:$0xff]
        %v903 = vld [vmem:[#allocation2 + $0x14e8] sm:$0xff]
        %v904 = vld [vmem:[#allocation2 + $0x14f0] sm:$0xff]
        %v905 = vld [vmem:[#allocation2 + $0x14f8] sm:$0xff]
        %v906 = vld [vmem:[#allocation2 + $0x1500] sm:$0xff]
        %v907 = vld [vmem:[#allocation2 + $0x1508] sm:$0xff]
        %v908 = vld [vmem:[#allocation2 + $0x1510] sm:$0xff]
        %v909 = vld [vmem:[#allocation2 + $0x1518] sm:$0xff]
        %v910 = vld [vmem:[#allocation2 + $0x1520] sm:$0xff]
        %v911 = vld [vmem:[#allocation2 + $0x1528] sm:$0xff]
        %v912 = vld [vmem:[#allocation2 + $0x1530] sm:$0xff]
        %v913 = vld [vmem:[#allocation2 + $0x1538] sm:$0xff]
        %v914 = vld [vmem:[#allocation2 + $0x1540] sm:$0xff]
        %v915 = vld [vmem:[#allocation2 + $0x1548] sm:$0xff]
        %v916 = vld [vmem:[#allocation2 + $0x1550] sm:$0xff]
        %v917 = vld [vmem:[#allocation2 + $0x1558] sm:$0xff]
        %v918 = vld [vmem:[#allocation2 + $0x1560] sm:$0xff]
        %v919 = vld [vmem:[#allocation2 + $0x1568] sm:$0xff]
        %v920 = vld [vmem:[#allocation2 + $0x1570] sm:$0xff]
        %v921 = vld [vmem:[#allocation2 + $0x1578] sm:$0xff]
        %v922 = vld [vmem:[#allocation2 + $0x1580] sm:$0xff]
        %v923 = vld [vmem:[#allocation2 + $0x1588] sm:$0xff]
        %v924 = vld [vmem:[#allocation2 + $0x1590] sm:$0xff]
        %v925 = vld [vmem:[#allocation2 + $0x1598] sm:$0xff]
        %v926 = vld [vmem:[#allocation2 + $0x15a0] sm:$0xff]
        %v927 = vld [vmem:[#allocation2 + $0x15a8] sm:$0xff]
        %v928 = vld [vmem:[#allocation2 + $0x15b0] sm:$0xff]
        %v929 = vld [vmem:[#allocation2 + $0x15b8] sm:$0xff]
        %v930 = vld [vmem:[#allocation2 + $0x15c0] sm:$0xff]
        %v931 = vld [vmem:[#allocation2 + $0x15c8] sm:$0xff]
        %v932 = vld [vmem:[#allocation2 + $0x15d0] sm:$0xff]
        %v933 = vld [vmem:[#allocation2 + $0x15d8] sm:$0xff]
        %v934 = vld [vmem:[#allocation2 + $0x15e0] sm:$0xff]
        %v935 = vld [vmem:[#allocation2 + $0x15e8] sm:$0xff]
        %v936 = vld [vmem:[#allocation2 + $0x15f0] sm:$0xff]
        %v937 = vld [vmem:[#allocation2 + $0x15f8] sm:$0xff]
        %v938 = vld [vmem:[#allocation2 + $0x1600] sm:$0xff]
        %v939 = vld [vmem:[#allocation2 + $0x1608] sm:$0xff]
        %v940 = vld [vmem:[#allocation2 + $0x1610] sm:$0xff]
        %v941 = vld [vmem:[#allocation2 + $0x1618] sm:$0xff]
        %v942 = vld [vmem:[#allocation2 + $0x1620] sm:$0xff]
        %v943 = vld [vmem:[#allocation2 + $0x1628] sm:$0xff]
        %v944 = vld [vmem:[#allocation2 + $0x1630] sm:$0xff]
        %v945 = vld [vmem:[#allocation2 + $0x1638] sm:$0xff]
        %v946 = vld [vmem:[#allocation2 + $0x1640] sm:$0xff]
        %v947 = vld [vmem:[#allocation2 + $0x1648] sm:$0xff]
        %v948 = vld [vmem:[#allocation2 + $0x1650] sm:$0xff]
        %v949 = vld [vmem:[#allocation2 + $0x1658] sm:$0xff]
        %v950 = vld [vmem:[#allocation2 + $0x1660] sm:$0xff]
        %v951 = vld [vmem:[#allocation2 + $0x1668] sm:$0xff]
        %v952 = vld [vmem:[#allocation2 + $0x1670] sm:$0xff]
        %v953 = vld [vmem:[#allocation2 + $0x1678] sm:$0xff]
        %v954 = vld [vmem:[#allocation2 + $0x1680] sm:$0xff]
        %v955 = vld [vmem:[#allocation2 + $0x1688] sm:$0xff]
        %v956 = vld [vmem:[#allocation2 + $0x1690] sm:$0xff]
        %v957 = vld [vmem:[#allocation2 + $0x1698] sm:$0xff]
        %v958 = vld [vmem:[#allocation2 + $0x16a0] sm:$0xff]
        %v959 = vld [vmem:[#allocation2 + $0x16a8] sm:$0xff]
        %v960 = vld [vmem:[#allocation2 + $0x16b0] sm:$0xff]
        %v961 = vld [vmem:[#allocation2 + $0x16b8] sm:$0xff]
        %v962 = vld [vmem:[#allocation2 + $0x16c0] sm:$0xff]
        %v963 = vld [vmem:[#allocation2 + $0x16c8] sm:$0xff]
        %v964 = vld [vmem:[#allocation2 + $0x16d0] sm:$0xff]
        %v965 = vld [vmem:[#allocation2 + $0x16d8] sm:$0xff]
        %v966 = vld [vmem:[#allocation2 + $0x16e0] sm:$0xff]
        %v967 = vld [vmem:[#allocation2 + $0x16e8] sm:$0xff]
        %v968 = vld [vmem:[#allocation2 + $0x16f0] sm:$0xff]
        %v969 = vld [vmem:[#allocation2 + $0x16f8] sm:$0xff]
        %v970 = vld [vmem:[#allocation2 + $0x1700] sm:$0xff]
        %v971 = vld [vmem:[#allocation2 + $0x1708] sm:$0xff]
        %v972 = vld [vmem:[#allocation2 + $0x1710] sm:$0xff]
        %v973 = vld [vmem:[#allocation2 + $0x1718] sm:$0xff]
        %v974 = vld [vmem:[#allocation2 + $0x1720] sm:$0xff]
        %v975 = vld [vmem:[#allocation2 + $0x1728] sm:$0xff]
        %v976 = vld [vmem:[#allocation2 + $0x1730] sm:$0xff]
        %v977 = vld [vmem:[#allocation2 + $0x1738] sm:$0xff]
        %v978 = vld [vmem:[#allocation2 + $0x1740] sm:$0xff]
        %v979 = vld [vmem:[#allocation2 + $0x1748] sm:$0xff]
        %v980 = vld [vmem:[#allocation2 + $0x1750] sm:$0xff]
        %v981 = vld [vmem:[#allocation2 + $0x1758] sm:$0xff]
        %v982 = vld [vmem:[#allocation2 + $0x1760] sm:$0xff]
        %v983 = vld [vmem:[#allocation2 + $0x1768] sm:$0xff]
        %v984 = vld [vmem:[#allocation2 + $0x1770] sm:$0xff]
        %v985 = vld [vmem:[#allocation2 + $0x1778] sm:$0xff]
        %v986 = vld [vmem:[#allocation2 + $0x1780] sm:$0xff]
        %v987 = vld [vmem:[#allocation2 + $0x1788] sm:$0xff]
        %v988 = vld [vmem:[#allocation2 + $0x1790] sm:$0xff]
        %v989 = vld [vmem:[#allocation2 + $0x1798] sm:$0xff]
        %v990 = vld [vmem:[#allocation2 + $0x17a0] sm:$0xff]
        %v991 = vld [vmem:[#allocation2 + $0x17a8] sm:$0xff]
        %v992 = vld [vmem:[#allocation2 + $0x17b0] sm:$0xff]
        %v993 = vld [vmem:[#allocation2 + $0x17b8] sm:$0xff]
        %v994 = vld [vmem:[#allocation2 + $0x17c0] sm:$0xff]
        %v995 = vld [vmem:[#allocation2 + $0x17c8] sm:$0xff]
        %v996 = vld [vmem:[#allocation2 + $0x17d0] sm:$0xff]
        %v997 = vld [vmem:[#allocation2 + $0x17d8] sm:$0xff]
        %v998 = vld [vmem:[#allocation2 + $0x17e0] sm:$0xff]
        %v999 = vld [vmem:[#allocation2 + $0x17e8] sm:$0xff]
        %v1000 = vld [vmem:[#allocation2 + $0x17f0] sm:$0xff]
        %v1001 = vld [vmem:[#allocation2 + $0x17f8] sm:$0xff]
        %v1002 = vld [vmem:[#allocation2 + $0x1800] sm:$0xff]
        %v1003 = vld [vmem:[#allocation2 + $0x1808] sm:$0xff]
        %v1004 = vld [vmem:[#allocation2 + $0x1810] sm:$0xff]
        %v1005 = vld [vmem:[#allocation2 + $0x1818] sm:$0xff]
        %v1006 = vld [vmem:[#allocation2 + $0x1820] sm:$0xff]
        %v1007 = vld [vmem:[#allocation2 + $0x1828] sm:$0xff]
        %v1008 = vld [vmem:[#allocation2 + $0x1830] sm:$0xff]
        %v1009 = vld [vmem:[#allocation2 + $0x1838] sm:$0xff]
        %v1010 = vld [vmem:[#allocation2 + $0x1840] sm:$0xff]
        %v1011 = vld [vmem:[#allocation2 + $0x1848] sm:$0xff]
        %v1012 = vld [vmem:[#allocation2 + $0x1850] sm:$0xff]
        %v1013 = vld [vmem:[#allocation2 + $0x1858] sm:$0xff]
        %v1014 = vld [vmem:[#allocation2 + $0x1860] sm:$0xff]
        %v1015 = vld [vmem:[#allocation2 + $0x1868] sm:$0xff]
        %v1016 = vld [vmem:[#allocation2 + $0x1870] sm:$0xff]
        %v1017 = vld [vmem:[#allocation2 + $0x1878] sm:$0xff]
        %v1018 = vld [vmem:[#allocation2 + $0x1880] sm:$0xff]
        %v1019 = vld [vmem:[#allocation2 + $0x1888] sm:$0xff]
        %v1020 = vld [vmem:[#allocation2 + $0x1890] sm:$0xff]
        %v1021 = vld [vmem:[#allocation2 + $0x1898] sm:$0xff]
        %v1022 = vld [vmem:[#allocation2 + $0x18a0] sm:$0xff]
        %v1023 = vld [vmem:[#allocation2 + $0x18a8] sm:$0xff]
        %v1024 = vld [vmem:[#allocation2 + $0x18b0] sm:$0xff]
        %v1025 = vld [vmem:[#allocation2 + $0x18b8] sm:$0xff]
        %v1026 = vld [vmem:[#allocation2 + $0x18c0] sm:$0xff]
        %v1027 = vld [vmem:[#allocation2 + $0x18c8] sm:$0xff]
        %v1028 = vld [vmem:[#allocation2 + $0x18d0] sm:$0xff]
        %v1029 = vld [vmem:[#allocation2 + $0x18d8] sm:$0xff]
        %v1030 = vld [vmem:[#allocation2 + $0x18e0] sm:$0xff]
        %v1031 = vld [vmem:[#allocation2 + $0x18e8] sm:$0xff]
        %v1032 = vld [vmem:[#allocation2 + $0x18f0] sm:$0xff]
        %v1033 = vld [vmem:[#allocation2 + $0x18f8] sm:$0xff]
        %v1034 = vld [vmem:[#allocation2 + $0x1900] sm:$0xff]
        %v1035 = vld [vmem:[#allocation2 + $0x1908] sm:$0xff]
        %v1036 = vld [vmem:[#allocation2 + $0x1910] sm:$0xff]
        %v1037 = vld [vmem:[#allocation2 + $0x1918] sm:$0xff]
        %v1038 = vld [vmem:[#allocation2 + $0x1920] sm:$0xff]
        %v1039 = vld [vmem:[#allocation2 + $0x1928] sm:$0xff]
        %v1040 = vld [vmem:[#allocation2 + $0x1930] sm:$0xff]
        %v1041 = vld [vmem:[#allocation2 + $0x1938] sm:$0xff]
        %v1042 = vld [vmem:[#allocation2 + $0x1940] sm:$0xff]
        %v1043 = vld [vmem:[#allocation2 + $0x1948] sm:$0xff]
        %v1044 = vld [vmem:[#allocation2 + $0x1950] sm:$0xff]
        %v1045 = vld [vmem:[#allocation2 + $0x1958] sm:$0xff]
        %v1046 = vld [vmem:[#allocation2 + $0x1960] sm:$0xff]
        %v1047 = vld [vmem:[#allocation2 + $0x1968] sm:$0xff]
        %v1048 = vld [vmem:[#allocation2 + $0x1970] sm:$0xff]
        %v1049 = vld [vmem:[#allocation2 + $0x1978] sm:$0xff]
        %v1050 = vld [vmem:[#allocation2 + $0x1980] sm:$0xff]
        %v1051 = vld [vmem:[#allocation2 + $0x1988] sm:$0xff]
        %v1052 = vld [vmem:[#allocation2 + $0x1990] sm:$0xff]
        %v1053 = vld [vmem:[#allocation2 + $0x1998] sm:$0xff]
        %v1054 = vld [vmem:[#allocation2 + $0x19a0] sm:$0xff]
        %v1055 = vld [vmem:[#allocation2 + $0x19a8] sm:$0xff]
        %v1056 = vld [vmem:[#allocation2 + $0x19b0] sm:$0xff]
        %v1057 = vld [vmem:[#allocation2 + $0x19b8] sm:$0xff]
        %v1058 = vld [vmem:[#allocation2 + $0x19c0] sm:$0xff]
        %v1059 = vld [vmem:[#allocation2 + $0x19c8] sm:$0xff]
        %v1060 = vld [vmem:[#allocation2 + $0x19d0] sm:$0xff]
        %v1061 = vld [vmem:[#allocation2 + $0x19d8] sm:$0xff]
        %v1062 = vld [vmem:[#allocation2 + $0x19e0] sm:$0xff]
        %v1063 = vld [vmem:[#allocation2 + $0x19e8] sm:$0xff]
        %v1064 = vld [vmem:[#allocation2 + $0x19f0] sm:$0xff]
        %v1065 = vld [vmem:[#allocation2 + $0x19f8] sm:$0xff]
        %v1066 = vld [vmem:[#allocation2 + $0x1a00] sm:$0xff]
        %v1067 = vld [vmem:[#allocation2 + $0x1a08] sm:$0xff]
        %v1068 = vld [vmem:[#allocation2 + $0x1a10] sm:$0xff]
        %v1069 = vld [vmem:[#allocation2 + $0x1a18] sm:$0xff]
        %v1070 = vld [vmem:[#allocation2 + $0x1a20] sm:$0xff]
        %v1071 = vld [vmem:[#allocation2 + $0x1a28] sm:$0xff]
        %v1072 = vld [vmem:[#allocation2 + $0x1a30] sm:$0xff]
        %v1073 = vld [vmem:[#allocation2 + $0x1a38] sm:$0xff]
        %v1074 = vld [vmem:[#allocation2 + $0x1a40] sm:$0xff]
        %v1075 = vld [vmem:[#allocation2 + $0x1a48] sm:$0xff]
        %v1076 = vld [vmem:[#allocation2 + $0x1a50] sm:$0xff]
        %v1077 = vld [vmem:[#allocation2 + $0x1a58] sm:$0xff]
        %v1078 = vld [vmem:[#allocation2 + $0x1a60] sm:$0xff]
        %v1079 = vld [vmem:[#allocation2 + $0x1a68] sm:$0xff]
        %v1080 = vld [vmem:[#allocation2 + $0x1a70] sm:$0xff]
        %v1081 = vld [vmem:[#allocation2 + $0x1a78] sm:$0xff]
        %v1082 = vld [vmem:[#allocation2 + $0x1a80] sm:$0xff]
        %v1083 = vld [vmem:[#allocation2 + $0x1a88] sm:$0xff]
        %v1084 = vld [vmem:[#allocation2 + $0x1a90] sm:$0xff]
        %v1085 = vld [vmem:[#allocation2 + $0x1a98] sm:$0xff]
        %v1086 = vld [vmem:[#allocation2 + $0x1aa0] sm:$0xff]
        %v1087 = vld [vmem:[#allocation2 + $0x1aa8] sm:$0xff]
        %v1088 = vld [vmem:[#allocation2 + $0x1ab0] sm:$0xff]
        %v1089 = vld [vmem:[#allocation2 + $0x1ab8] sm:$0xff]
        %v1090 = vld [vmem:[#allocation2 + $0x1ac0] sm:$0xff]
        %v1091 = vld [vmem:[#allocation2 + $0x1ac8] sm:$0xff]
        %v1092 = vld [vmem:[#allocation2 + $0x1ad0] sm:$0xff]
        %v1093 = vld [vmem:[#allocation2 + $0x1ad8] sm:$0xff]
        %v1094 = vld [vmem:[#allocation2 + $0x1ae0] sm:$0xff]
        %v1095 = vld [vmem:[#allocation2 + $0x1ae8] sm:$0xff]
        %v1096 = vld [vmem:[#allocation2 + $0x1af0] sm:$0xff]
        %v1097 = vld [vmem:[#allocation2 + $0x1af8] sm:$0xff]
        %v1098 = vld [vmem:[#allocation2 + $0x1b00] sm:$0xff]
        %v1099 = vld [vmem:[#allocation2 + $0x1b08] sm:$0xff]
        %v1100 = vld [vmem:[#allocation2 + $0x1b10] sm:$0xff]
        %v1101 = vld [vmem:[#allocation2 + $0x1b18] sm:$0xff]
        %v1102 = vld [vmem:[#allocation2 + $0x1b20] sm:$0xff]
        %v1103 = vld [vmem:[#allocation2 + $0x1b28] sm:$0xff]
        %v1104 = vld [vmem:[#allocation2 + $0x1b30] sm:$0xff]
        %v1105 = vld [vmem:[#allocation2 + $0x1b38] sm:$0xff]
        %v1106 = vld [vmem:[#allocation2 + $0x1b40] sm:$0xff]
        %v1107 = vld [vmem:[#allocation2 + $0x1b48] sm:$0xff]
        %v1108 = vld [vmem:[#allocation2 + $0x1b50] sm:$0xff]
        %v1109 = vld [vmem:[#allocation2 + $0x1b58] sm:$0xff]
        %v1110 = vld [vmem:[#allocation2 + $0x1b60] sm:$0xff]
        %v1111 = vld [vmem:[#allocation2 + $0x1b68] sm:$0xff]
        %v1112 = vld [vmem:[#allocation2 + $0x1b70] sm:$0xff]
        %v1113 = vld [vmem:[#allocation2 + $0x1b78] sm:$0xff]
        %v1114 = vld [vmem:[#allocation2 + $0x1b80] sm:$0xff]
        %v1115 = vld [vmem:[#allocation2 + $0x1b88] sm:$0xff]
        %v1116 = vld [vmem:[#allocation2 + $0x1b90] sm:$0xff]
        %v1117 = vld [vmem:[#allocation2 + $0x1b98] sm:$0xff]
        %v1118 = vld [vmem:[#allocation2 + $0x1ba0] sm:$0xff]
        %v1119 = vld [vmem:[#allocation2 + $0x1ba8] sm:$0xff]
        %v1120 = vld [vmem:[#allocation2 + $0x1bb0] sm:$0xff]
        %v1121 = vld [vmem:[#allocation2 + $0x1bb8] sm:$0xff]
        %v1122 = vld [vmem:[#allocation2 + $0x1bc0] sm:$0xff]
        %v1123 = vld [vmem:[#allocation2 + $0x1bc8] sm:$0xff]
        %v1124 = vld [vmem:[#allocation2 + $0x1bd0] sm:$0xff]
        %v1125 = vld [vmem:[#allocation2 + $0x1bd8] sm:$0xff]
        %v1126 = vld [vmem:[#allocation2 + $0x1be0] sm:$0xff]
        %v1127 = vld [vmem:[#allocation2 + $0x1be8] sm:$0xff]
        %v1128 = vld [vmem:[#allocation2 + $0x1bf0] sm:$0xff]
        %v1129 = vld [vmem:[#allocation2 + $0x1bf8] sm:$0xff]
        %v1130 = vld [vmem:[#allocation2 + $0x1c00] sm:$0xff]
        %v1131 = vld [vmem:[#allocation2 + $0x1c08] sm:$0xff]
        %v1132 = vld [vmem:[#allocation2 + $0x1c10] sm:$0xff]
        %v1133 = vld [vmem:[#allocation2 + $0x1c18] sm:$0xff]
        %v1134 = vld [vmem:[#allocation2 + $0x1c20] sm:$0xff]
        %v1135 = vld [vmem:[#allocation2 + $0x1c28] sm:$0xff]
        %v1136 = vld [vmem:[#allocation2 + $0x1c30] sm:$0xff]
        %v1137 = vld [vmem:[#allocation2 + $0x1c38] sm:$0xff]
        %v1138 = vld [vmem:[#allocation2 + $0x1c40] sm:$0xff]
        %v1139 = vld [vmem:[#allocation2 + $0x1c48] sm:$0xff]
        %v1140 = vld [vmem:[#allocation2 + $0x1c50] sm:$0xff]
        %v1141 = vld [vmem:[#allocation2 + $0x1c58] sm:$0xff]
        %v1142 = vld [vmem:[#allocation2 + $0x1c60] sm:$0xff]
        %v1143 = vld [vmem:[#allocation2 + $0x1c68] sm:$0xff]
        %v1144 = vld [vmem:[#allocation2 + $0x1c70] sm:$0xff]
        %v1145 = vld [vmem:[#allocation2 + $0x1c78] sm:$0xff]
        %v1146 = vld [vmem:[#allocation2 + $0x1c80] sm:$0xff]
        %v1147 = vld [vmem:[#allocation2 + $0x1c88] sm:$0xff]
        %v1148 = vld [vmem:[#allocation2 + $0x1c90] sm:$0xff]
        %v1149 = vld [vmem:[#allocation2 + $0x1c98] sm:$0xff]
        %v1150 = vld [vmem:[#allocation2 + $0x1ca0] sm:$0xff]
        %v1151 = vld [vmem:[#allocation2 + $0x1ca8] sm:$0xff]
        %v1152 = vld [vmem:[#allocation2 + $0x1cb0] sm:$0xff]
        %v1153 = vld [vmem:[#allocation2 + $0x1cb8] sm:$0xff]
        %v1154 = vld [vmem:[#allocation2 + $0x1cc0] sm:$0xff]
        %v1155 = vld [vmem:[#allocation2 + $0x1cc8] sm:$0xff]
        %v1156 = vld [vmem:[#allocation2 + $0x1cd0] sm:$0xff]
        %v1157 = vld [vmem:[#allocation2 + $0x1cd8] sm:$0xff]
        %v1158 = vld [vmem:[#allocation2 + $0x1ce0] sm:$0xff]
        %v1159 = vld [vmem:[#allocation2 + $0x1ce8] sm:$0xff]
        %v1160 = vld [vmem:[#allocation2 + $0x1cf0] sm:$0xff]
        %v1161 = vld [vmem:[#allocation2 + $0x1cf8] sm:$0xff]
        %v1162 = vld [vmem:[#allocation2 + $0x1d00] sm:$0xff]
        %v1163 = vld [vmem:[#allocation2 + $0x1d08] sm:$0xff]
        %v1164 = vld [vmem:[#allocation2 + $0x1d10] sm:$0xff]
        %v1165 = vld [vmem:[#allocation2 + $0x1d18] sm:$0xff]
        %v1166 = vld [vmem:[#allocation2 + $0x1d20] sm:$0xff]
        %v1167 = vld [vmem:[#allocation2 + $0x1d28] sm:$0xff]
        %v1168 = vld [vmem:[#allocation2 + $0x1d30] sm:$0xff]
        %v1169 = vld [vmem:[#allocation2 + $0x1d38] sm:$0xff]
        %v1170 = vld [vmem:[#allocation2 + $0x1d40] sm:$0xff]
        %v1171 = vld [vmem:[#allocation2 + $0x1d48] sm:$0xff]
        %v1172 = vld [vmem:[#allocation2 + $0x1d50] sm:$0xff]
        %v1173 = vld [vmem:[#allocation2 + $0x1d58] sm:$0xff]
        %v1174 = vld [vmem:[#allocation2 + $0x1d60] sm:$0xff]
        %v1175 = vld [vmem:[#allocation2 + $0x1d68] sm:$0xff]
        %v1176 = vld [vmem:[#allocation2 + $0x1d70] sm:$0xff]
        %v1177 = vld [vmem:[#allocation2 + $0x1d78] sm:$0xff]
        %v1178 = vld [vmem:[#allocation2 + $0x1d80] sm:$0xff]
        %v1179 = vld [vmem:[#allocation2 + $0x1d88] sm:$0xff]
        %v1180 = vld [vmem:[#allocation2 + $0x1d90] sm:$0xff]
        %v1181 = vld [vmem:[#allocation2 + $0x1d98] sm:$0xff]
        %v1182 = vld [vmem:[#allocation2 + $0x1da0] sm:$0xff]
        %v1183 = vld [vmem:[#allocation2 + $0x1da8] sm:$0xff]
        %v1184 = vld [vmem:[#allocation2 + $0x1db0] sm:$0xff]
        %v1185 = vld [vmem:[#allocation2 + $0x1db8] sm:$0xff]
        %v1186 = vld [vmem:[#allocation2 + $0x1dc0] sm:$0xff]
        %v1187 = vld [vmem:[#allocation2 + $0x1dc8] sm:$0xff]
        %v1188 = vld [vmem:[#allocation2 + $0x1dd0] sm:$0xff]
        %v1189 = vld [vmem:[#allocation2 + $0x1dd8] sm:$0xff]
        %v1190 = vld [vmem:[#allocation2 + $0x1de0] sm:$0xff]
        %v1191 = vld [vmem:[#allocation2 + $0x1de8] sm:$0xff]
        %v1192 = vld [vmem:[#allocation2 + $0x1df0] sm:$0xff]
        %v1193 = vld [vmem:[#allocation2 + $0x1df8] sm:$0xff]
        %v1194 = vld [vmem:[#allocation2 + $0x1e00] sm:$0xff]
        %v1195 = vld [vmem:[#allocation2 + $0x1e08] sm:$0xff]
        %v1196 = vld [vmem:[#allocation2 + $0x1e10] sm:$0xff]
        %v1197 = vld [vmem:[#allocation2 + $0x1e18] sm:$0xff]
        %v1198 = vld [vmem:[#allocation2 + $0x1e20] sm:$0xff]
        %v1199 = vld [vmem:[#allocation2 + $0x1e28] sm:$0xff]
        %v1200 = vld [vmem:[#allocation2 + $0x1e30] sm:$0xff]
        %v1201 = vld [vmem:[#allocation2 + $0x1e38] sm:$0xff]
        %v1202 = vld [vmem:[#allocation2 + $0x1e40] sm:$0xff]
        %v1203 = vld [vmem:[#allocation2 + $0x1e48] sm:$0xff]
        %v1204 = vld [vmem:[#allocation2 + $0x1e50] sm:$0xff]
        %v1205 = vld [vmem:[#allocation2 + $0x1e58] sm:$0xff]
        %v1206 = vld [vmem:[#allocation2 + $0x1e60] sm:$0xff]
        %v1207 = vld [vmem:[#allocation2 + $0x1e68] sm:$0xff]
        %v1208 = vld [vmem:[#allocation2 + $0x1e70] sm:$0xff]
        %v1209 = vld [vmem:[#allocation2 + $0x1e78] sm:$0xff]
        %v1210 = vld [vmem:[#allocation2 + $0x1e80] sm:$0xff]
        %v1211 = vld [vmem:[#allocation2 + $0x1e88] sm:$0xff]
        %v1212 = vld [vmem:[#allocation2 + $0x1e90] sm:$0xff]
        %v1213 = vld [vmem:[#allocation2 + $0x1e98] sm:$0xff]
        %v1214 = vld [vmem:[#allocation2 + $0x1ea0] sm:$0xff]
        %v1215 = vld [vmem:[#allocation2 + $0x1ea8] sm:$0xff]
        %v1216 = vld [vmem:[#allocation2 + $0x1eb0] sm:$0xff]
        %v1217 = vld [vmem:[#allocation2 + $0x1eb8] sm:$0xff]
        %v1218 = vld [vmem:[#allocation2 + $0x1ec0] sm:$0xff]
        %v1219 = vld [vmem:[#allocation2 + $0x1ec8] sm:$0xff]
        %v1220 = vld [vmem:[#allocation2 + $0x1ed0] sm:$0xff]
        %v1221 = vld [vmem:[#allocation2 + $0x1ed8] sm:$0xff]
        %v1222 = vld [vmem:[#allocation2 + $0x1ee0] sm:$0xff]
        %v1223 = vld [vmem:[#allocation2 + $0x1ee8] sm:$0xff]
        %v1224 = vld [vmem:[#allocation2 + $0x1ef0] sm:$0xff]
        %v1225 = vld [vmem:[#allocation2 + $0x1ef8] sm:$0xff]
        %v1226 = vld [vmem:[#allocation2 + $0x1f00] sm:$0xff]
        %v1227 = vld [vmem:[#allocation2 + $0x1f08] sm:$0xff]
        %v1228 = vld [vmem:[#allocation2 + $0x1f10] sm:$0xff]
        %v1229 = vld [vmem:[#allocation2 + $0x1f18] sm:$0xff]
        %v1230 = vld [vmem:[#allocation2 + $0x1f20] sm:$0xff]
        %v1231 = vld [vmem:[#allocation2 + $0x1f28] sm:$0xff]
        %v1232 = vld [vmem:[#allocation2 + $0x1f30] sm:$0xff]
        %v1233 = vld [vmem:[#allocation2 + $0x1f38] sm:$0xff]
        %v1234 = vld [vmem:[#allocation2 + $0x1f40] sm:$0xff]
        %v1235 = vld [vmem:[#allocation2 + $0x1f48] sm:$0xff]
        %v1236 = vld [vmem:[#allocation2 + $0x1f50] sm:$0xff]
        %v1237 = vld [vmem:[#allocation2 + $0x1f58] sm:$0xff]
        %v1238 = vld [vmem:[#allocation2 + $0x1f60] sm:$0xff]
        %v1239 = vld [vmem:[#allocation2 + $0x1f68] sm:$0xff]
        %v1240 = vld [vmem:[#allocation2 + $0x1f70] sm:$0xff]
        %v1241 = vld [vmem:[#allocation2 + $0x1f78] sm:$0xff]
        %v1242 = vld [vmem:[#allocation2 + $0x1f80] sm:$0xff]
        %v1243 = vld [vmem:[#allocation2 + $0x1f88] sm:$0xff]
        %v1244 = vld [vmem:[#allocation2 + $0x1f90] sm:$0xff]
        %v1245 = vld [vmem:[#allocation2 + $0x1f98] sm:$0xff]
        %v1246 = vld [vmem:[#allocation2 + $0x1fa0] sm:$0xff]
        %v1247 = vld [vmem:[#allocation2 + $0x1fa8] sm:$0xff]
        %v1248 = vld [vmem:[#allocation2 + $0x1fb0] sm:$0xff]
        %v1249 = vld [vmem:[#allocation2 + $0x1fb8] sm:$0xff]
        %v1250 = vld [vmem:[#allocation2 + $0x1fc0] sm:$0xff]
        %v1251 = vld [vmem:[#allocation2 + $0x1fc8] sm:$0xff]
        %v1252 = vld [vmem:[#allocation2 + $0x1fd0] sm:$0xff]
        %v1253 = vld [vmem:[#allocation2 + $0x1fd8] sm:$0xff]
        %v1254 = vld [vmem:[#allocation2 + $0x1fe0] sm:$0xff]
        %v1255 = vld [vmem:[#allocation2 + $0x1fe8] sm:$0xff]
        %v1256 = vld [vmem:[#allocation2 + $0x1ff0] sm:$0xff]
        %v1257 = vld [vmem:[#allocation2 + $0x1ff8] sm:$0xff]
        %v1258 = vld [vmem:[#allocation2 + $0x2000] sm:$0xff]
        %v1259 = vld [vmem:[#allocation2 + $0x2008] sm:$0xff]
        %v1260 = vld [vmem:[#allocation2 + $0x2010] sm:$0xff]
        %v1261 = vld [vmem:[#allocation2 + $0x2018] sm:$0xff]
        %v1262 = vld [vmem:[#allocation2 + $0x2020] sm:$0xff]
        %v1263 = vld [vmem:[#allocation2 + $0x2028] sm:$0xff]
        %v1264 = vld [vmem:[#allocation2 + $0x2030] sm:$0xff]
        %v1265 = vld [vmem:[#allocation2 + $0x2038] sm:$0xff]
        %v1266 = vld [vmem:[#allocation2 + $0x2040] sm:$0xff]
        %v1267 = vld [vmem:[#allocation2 + $0x2048] sm:$0xff]
        %v1268 = vld [vmem:[#allocation2 + $0x2050] sm:$0xff]
        %v1269 = vld [vmem:[#allocation2 + $0x2058] sm:$0xff]
        %v1270 = vld [vmem:[#allocation2 + $0x2060] sm:$0xff]
        %v1271 = vld [vmem:[#allocation2 + $0x2068] sm:$0xff]
        %v1272 = vld [vmem:[#allocation2 + $0x2070] sm:$0xff]
        %v1273 = vld [vmem:[#allocation2 + $0x2078] sm:$0xff]
        %v1274 = vld [vmem:[#allocation2 + $0x2080] sm:$0xff]
        %v1275 = vld [vmem:[#allocation2 + $0x2088] sm:$0xff]
        %v1276 = vld [vmem:[#allocation2 + $0x2090] sm:$0xff]
        %v1277 = vld [vmem:[#allocation2 + $0x2098] sm:$0xff]
        %v1278 = vld [vmem:[#allocation2 + $0x20a0] sm:$0xff]
        %v1279 = vld [vmem:[#allocation2 + $0x20a8] sm:$0xff]
        %v1280 = vld [vmem:[#allocation2 + $0x20b0] sm:$0xff]
        %v1281 = vld [vmem:[#allocation2 + $0x20b8] sm:$0xff]
        %v1282 = vld [vmem:[#allocation2 + $0x20c0] sm:$0xff]
        %v1283 = vld [vmem:[#allocation2 + $0x20c8] sm:$0xff]
        %v1284 = vld [vmem:[#allocation2 + $0x20d0] sm:$0xff]
        %v1285 = vld [vmem:[#allocation2 + $0x20d8] sm:$0xff]
        %v1286 = vld [vmem:[#allocation2 + $0x20e0] sm:$0xff]
        %v1287 = vld [vmem:[#allocation2 + $0x20e8] sm:$0xff]
        %v1288 = vld [vmem:[#allocation2 + $0x20f0] sm:$0xff]
        %v1289 = vld [vmem:[#allocation2 + $0x20f8] sm:$0xff]
        %v1290 = vld [vmem:[#allocation2 + $0x2100] sm:$0xff]
        %v1291 = vld [vmem:[#allocation2 + $0x2108] sm:$0xff]
        %v1292 = vld [vmem:[#allocation2 + $0x2110] sm:$0xff]
        %v1293 = vld [vmem:[#allocation2 + $0x2118] sm:$0xff]
        %v1294 = vld [vmem:[#allocation2 + $0x2120] sm:$0xff]
        %v1295 = vld [vmem:[#allocation2 + $0x2128] sm:$0xff]
        %v1296 = vld [vmem:[#allocation2 + $0x2130] sm:$0xff]
        %v1297 = vld [vmem:[#allocation2 + $0x2138] sm:$0xff]
        %v1298 = vld [vmem:[#allocation2 + $0x2140] sm:$0xff]
        %v1299 = vld [vmem:[#allocation2 + $0x2148] sm:$0xff]
        %v1300 = vld [vmem:[#allocation2 + $0x2150] sm:$0xff]
        %v1301 = vld [vmem:[#allocation2 + $0x2158] sm:$0xff]
        %v1302 = vld [vmem:[#allocation2 + $0x2160] sm:$0xff]
        %v1303 = vld [vmem:[#allocation2 + $0x2168] sm:$0xff]
        %v1304 = vld [vmem:[#allocation2 + $0x2170] sm:$0xff]
        %v1305 = vld [vmem:[#allocation2 + $0x2178] sm:$0xff]
        %v1306 = vld [vmem:[#allocation2 + $0x2180] sm:$0xff]
        %v1307 = vld [vmem:[#allocation2 + $0x2188] sm:$0xff]
        %v1308 = vld [vmem:[#allocation2 + $0x2190] sm:$0xff]
        %v1309 = vld [vmem:[#allocation2 + $0x2198] sm:$0xff]
        %v1310 = vld [vmem:[#allocation2 + $0x21a0] sm:$0xff]
        %v1311 = vld [vmem:[#allocation2 + $0x21a8] sm:$0xff]
        %v1312 = vld [vmem:[#allocation2 + $0x21b0] sm:$0xff]
        %v1313 = vld [vmem:[#allocation2 + $0x21b8] sm:$0xff]
        %v1314 = vld [vmem:[#allocation2 + $0x21c0] sm:$0xff]
        %v1315 = vld [vmem:[#allocation2 + $0x21c8] sm:$0xff]
        %v1316 = vld [vmem:[#allocation2 + $0x21d0] sm:$0xff]
        %v1317 = vld [vmem:[#allocation2 + $0x21d8] sm:$0xff]
        %v1318 = vld [vmem:[#allocation2 + $0x21e0] sm:$0xff]
        %v1319 = vld [vmem:[#allocation2 + $0x21e8] sm:$0xff]
        %v1320 = vld [vmem:[#allocation2 + $0x21f0] sm:$0xff]
        %v1321 = vld [vmem:[#allocation2 + $0x21f8] sm:$0xff]
        %v1322 = vld [vmem:[#allocation2 + $0x2200] sm:$0xff]
        %v1323 = vld [vmem:[#allocation2 + $0x2208] sm:$0xff]
        %v1324 = vld [vmem:[#allocation2 + $0x2210] sm:$0xff]
        %v1325 = vld [vmem:[#allocation2 + $0x2218] sm:$0xff]
        %v1326 = vld [vmem:[#allocation2 + $0x2220] sm:$0xff]
        %v1327 = vld [vmem:[#allocation2 + $0x2228] sm:$0xff]
        %v1328 = vld [vmem:[#allocation2 + $0x2230] sm:$0xff]
        %v1329 = vld [vmem:[#allocation2 + $0x2238] sm:$0xff]
        %v1330 = vld [vmem:[#allocation2 + $0x2240] sm:$0xff]
        %v1331 = vld [vmem:[#allocation2 + $0x2248] sm:$0xff]
        %v1332 = vld [vmem:[#allocation2 + $0x2250] sm:$0xff]
        %v1333 = vld [vmem:[#allocation2 + $0x2258] sm:$0xff]
        %v1334 = vld [vmem:[#allocation2 + $0x2260] sm:$0xff]
        %v1335 = vld [vmem:[#allocation2 + $0x2268] sm:$0xff]
        %v1336 = vld [vmem:[#allocation2 + $0x2270] sm:$0xff]
        %v1337 = vld [vmem:[#allocation2 + $0x2278] sm:$0xff]
        %v1338 = vld [vmem:[#allocation2 + $0x2280] sm:$0xff]
        %v1339 = vld [vmem:[#allocation2 + $0x2288] sm:$0xff]
        %v1340 = vld [vmem:[#allocation2 + $0x2290] sm:$0xff]
        %v1341 = vld [vmem:[#allocation2 + $0x2298] sm:$0xff]
        %v1342 = vld [vmem:[#allocation2 + $0x22a0] sm:$0xff]
        %v1343 = vld [vmem:[#allocation2 + $0x22a8] sm:$0xff]
        %v1344 = vld [vmem:[#allocation2 + $0x22b0] sm:$0xff]
        %v1345 = vld [vmem:[#allocation2 + $0x22b8] sm:$0xff]
        %v1346 = vld [vmem:[#allocation2 + $0x22c0] sm:$0xff]
        %v1347 = vld [vmem:[#allocation2 + $0x22c8] sm:$0xff]
        %v1348 = vld [vmem:[#allocation2 + $0x22d0] sm:$0xff]
        %v1349 = vld [vmem:[#allocation2 + $0x22d8] sm:$0xff]
        %v1350 = vld [vmem:[#allocation2 + $0x22e0] sm:$0xff]
        %v1351 = vld [vmem:[#allocation2 + $0x22e8] sm:$0xff]
        %v1352 = vld [vmem:[#allocation2 + $0x22f0] sm:$0xff]
        %v1353 = vld [vmem:[#allocation2 + $0x22f8] sm:$0xff]
        %v1354 = vld [vmem:[#allocation2 + $0x2300] sm:$0xff]
        %v1355 = vld [vmem:[#allocation2 + $0x2308] sm:$0xff]
        %v1356 = vld [vmem:[#allocation2 + $0x2310] sm:$0xff]
        %v1357 = vld [vmem:[#allocation2 + $0x2318] sm:$0xff]
        %v1358 = vld [vmem:[#allocation2 + $0x2320] sm:$0xff]
        %v1359 = vld [vmem:[#allocation2 + $0x2328] sm:$0xff]
        %v1360 = vld [vmem:[#allocation2 + $0x2330] sm:$0xff]
        %v1361 = vld [vmem:[#allocation2 + $0x2338] sm:$0xff]
        %v1362 = vld [vmem:[#allocation2 + $0x2340] sm:$0xff]
        %v1363 = vld [vmem:[#allocation2 + $0x2348] sm:$0xff]
        %v1364 = vld [vmem:[#allocation2 + $0x2350] sm:$0xff]
        %v1365 = vld [vmem:[#allocation2 + $0x2358] sm:$0xff]
        %v1366 = vld [vmem:[#allocation2 + $0x2360] sm:$0xff]
        %v1367 = vld [vmem:[#allocation2 + $0x2368] sm:$0xff]
        %v1368 = vld [vmem:[#allocation2 + $0x2370] sm:$0xff]
        %v1369 = vld [vmem:[#allocation2 + $0x2378] sm:$0xff]
        %v1370 = vld [vmem:[#allocation2 + $0x2380] sm:$0xff]
        %v1371 = vld [vmem:[#allocation2 + $0x2388] sm:$0xff]
        %v1372 = vld [vmem:[#allocation2 + $0x2390] sm:$0xff]
        %v1373 = vld [vmem:[#allocation2 + $0x2398] sm:$0xff]
        %v1374 = vld [vmem:[#allocation2 + $0x23a0] sm:$0xff]
        %v1375 = vld [vmem:[#allocation2 + $0x23a8] sm:$0xff]
        %v1376 = vld [vmem:[#allocation2 + $0x23b0] sm:$0xff]
        %v1377 = vld [vmem:[#allocation2 + $0x23b8] sm:$0xff]
        %v1378 = vld [vmem:[#allocation2 + $0x23c0] sm:$0xff]
        %v1379 = vld [vmem:[#allocation2 + $0x23c8] sm:$0xff]
        %v1380 = vld [vmem:[#allocation2 + $0x23d0] sm:$0xff]
        %v1381 = vld [vmem:[#allocation2 + $0x23d8] sm:$0xff]
        %v1382 = vld [vmem:[#allocation2 + $0x23e0] sm:$0xff]
        %v1383 = vld [vmem:[#allocation2 + $0x23e8] sm:$0xff]
        %v1384 = vld [vmem:[#allocation2 + $0x23f0] sm:$0xff]
        %v1385 = vld [vmem:[#allocation2 + $0x23f8] sm:$0xff]
        %v1386 = vld [vmem:[%s199] sm:$0xff]
        %v1387 = vld [vmem:[%s199 + $0x8] sm:$0xff]
        %v1388 = vld [vmem:[%s199 + $0x10] sm:$0xff]
        %v1389 = vld [vmem:[%s199 + $0x18] sm:$0xff]
        %v1390 = vld [vmem:[%s199 + $0x20] sm:$0xff]
        %v1391 = vld [vmem:[%s199 + $0x28] sm:$0xff]
        %v1392 = vld [vmem:[%s199 + $0x30] sm:$0xff]
        %v1393 = vld [vmem:[%s199 + $0x38] sm:$0xff]
        %v1394 = vld [vmem:[%s199 + $0x40] sm:$0xff]
        %v1395 = vld [vmem:[%s199 + $0x48] sm:$0xff]
        %v1396 = vld [vmem:[%s199 + $0x50] sm:$0xff]
        %v1397 = vld [vmem:[%s199 + $0x58] sm:$0xff]
        %v1398 = vld [vmem:[%s199 + $0x60] sm:$0xff]
        %v1399 = vld [vmem:[%s199 + $0x68] sm:$0xff]
        %v1400 = vld [vmem:[%s199 + $0x70] sm:$0xff]
        %v1401 = vld [vmem:[%s199 + $0x78] sm:$0xff]
        %v1402 = vld [vmem:[%s199 + $0x80] sm:$0xff]
        %v1403 = vld [vmem:[%s199 + $0x88] sm:$0xff]
        %v1404 = vld [vmem:[%s199 + $0x90] sm:$0xff]
        %v1405 = vld [vmem:[%s199 + $0x98] sm:$0xff]
        %v1406 = vld [vmem:[%s199 + $0xa0] sm:$0xff]
        %v1407 = vld [vmem:[%s199 + $0xa8] sm:$0xff]
        %v1408 = vld [vmem:[%s199 + $0xb0] sm:$0xff]
        %v1409 = vld [vmem:[%s199 + $0xb8] sm:$0xff]
        %v1410 = vld [vmem:[%s199 + $0xc0] sm:$0xff]
        %v1411 = vld [vmem:[%s199 + $0xc8] sm:$0xff]
        %v1412 = vld [vmem:[%s199 + $0xd0] sm:$0xff]
        %v1413 = vld [vmem:[%s199 + $0xd8] sm:$0xff]
        %v1414 = vld [vmem:[%s199 + $0xe0] sm:$0xff]
        %v1415 = vld [vmem:[%s199 + $0xe8] sm:$0xff]
        %v1416 = vld [vmem:[%s199 + $0xf0] sm:$0xff]
        %v1417 = vld [vmem:[%s199 + $0xf8] sm:$0xff]
        %v1418 = vld [vmem:[%s199 + $0x100] sm:$0xff]
        %v1419 = vld [vmem:[%s199 + $0x108] sm:$0xff]
        %v1420 = vld [vmem:[%s199 + $0x110] sm:$0xff]
        %v1421 = vld [vmem:[%s199 + $0x118] sm:$0xff]
        %v1422 = vld [vmem:[%s199 + $0x120] sm:$0xff]
        %v1423 = vld [vmem:[%s199 + $0x128] sm:$0xff]
        %v1424 = vld [vmem:[%s199 + $0x130] sm:$0xff]
        %v1425 = vld [vmem:[%s199 + $0x138] sm:$0xff]
        %v1426 = vld [vmem:[%s199 + $0x140] sm:$0xff]
        %v1427 = vld [vmem:[%s199 + $0x148] sm:$0xff]
        %v1428 = vld [vmem:[%s199 + $0x150] sm:$0xff]
        %v1429 = vld [vmem:[%s199 + $0x158] sm:$0xff]
        %v1430 = vld [vmem:[%s199 + $0x160] sm:$0xff]
        %v1431 = vld [vmem:[%s199 + $0x168] sm:$0xff]
        %v1432 = vld [vmem:[%s199 + $0x170] sm:$0xff]
        %v1433 = vld [vmem:[%s199 + $0x178] sm:$0xff]
        %v1434 = vld [vmem:[%s199 + $0x180] sm:$0xff]
        %v1435 = vld [vmem:[%s199 + $0x188] sm:$0xff]
        %v1436 = vld [vmem:[%s199 + $0x190] sm:$0xff]
        %v1437 = vld [vmem:[%s199 + $0x198] sm:$0xff]
        %v1438 = vld [vmem:[%s199 + $0x1a0] sm:$0xff]
        %v1439 = vld [vmem:[%s199 + $0x1a8] sm:$0xff]
        %v1440 = vld [vmem:[%s199 + $0x1b0] sm:$0xff]
        %v1441 = vld [vmem:[%s199 + $0x1b8] sm:$0xff]
        %v1442 = vld [vmem:[%s199 + $0x1c0] sm:$0xff]
        %v1443 = vld [vmem:[%s199 + $0x1c8] sm:$0xff]
        %v1444 = vld [vmem:[%s199 + $0x1d0] sm:$0xff]
        %v1445 = vld [vmem:[%s199 + $0x1d8] sm:$0xff]
        %v1446 = vld [vmem:[%s199 + $0x1e0] sm:$0xff]
        %v1447 = vld [vmem:[%s199 + $0x1e8] sm:$0xff]
        %v1448 = vld [vmem:[%s199 + $0x1f0] sm:$0xff]
        %v1449 = vld [vmem:[%s199 + $0x1f8] sm:$0xff]
        %v1450 = vld [vmem:[%s199 + $0x200] sm:$0xff]
        %v1451 = vld [vmem:[%s199 + $0x208] sm:$0xff]
        %v1452 = vld [vmem:[%s199 + $0x210] sm:$0xff]
        %v1453 = vld [vmem:[%s199 + $0x218] sm:$0xff]
        %v1454 = vld [vmem:[%s199 + $0x220] sm:$0xff]
        %v1455 = vld [vmem:[%s199 + $0x228] sm:$0xff]
        %v1456 = vld [vmem:[%s199 + $0x230] sm:$0xff]
        %v1457 = vld [vmem:[%s199 + $0x238] sm:$0xff]
        %v1458 = vld [vmem:[%s199 + $0x240] sm:$0xff]
        %v1459 = vld [vmem:[%s199 + $0x248] sm:$0xff]
        %v1460 = vld [vmem:[%s199 + $0x250] sm:$0xff]
        %v1461 = vld [vmem:[%s199 + $0x258] sm:$0xff]
        %v1462 = vld [vmem:[%s199 + $0x260] sm:$0xff]
        %v1463 = vld [vmem:[%s199 + $0x268] sm:$0xff]
        %v1464 = vld [vmem:[%s199 + $0x270] sm:$0xff]
        %v1465 = vld [vmem:[%s199 + $0x278] sm:$0xff]
        %v1466 = vld [vmem:[%s199 + $0x280] sm:$0xff]
        %v1467 = vld [vmem:[%s199 + $0x288] sm:$0xff]
        %v1468 = vld [vmem:[%s199 + $0x290] sm:$0xff]
        %v1469 = vld [vmem:[%s199 + $0x298] sm:$0xff]
        %v1470 = vld [vmem:[%s199 + $0x2a0] sm:$0xff]
        %v1471 = vld [vmem:[%s199 + $0x2a8] sm:$0xff]
        %v1472 = vld [vmem:[%s199 + $0x2b0] sm:$0xff]
        %v1473 = vld [vmem:[%s199 + $0x2b8] sm:$0xff]
        %v1474 = vld [vmem:[%s199 + $0x2c0] sm:$0xff]
        %v1475 = vld [vmem:[%s199 + $0x2c8] sm:$0xff]
        %v1476 = vld [vmem:[%s199 + $0x2d0] sm:$0xff]
        %v1477 = vld [vmem:[%s199 + $0x2d8] sm:$0xff]
        %v1478 = vld [vmem:[%s199 + $0x2e0] sm:$0xff]
        %v1479 = vld [vmem:[%s199 + $0x2e8] sm:$0xff]
        %v1480 = vld [vmem:[%s199 + $0x2f0] sm:$0xff]
        %v1481 = vld [vmem:[%s199 + $0x2f8] sm:$0xff]
        %v1482 = vld [vmem:[%s199 + $0x300] sm:$0xff]
        %v1483 = vld [vmem:[%s199 + $0x308] sm:$0xff]
        %v1484 = vld [vmem:[%s199 + $0x310] sm:$0xff]
        %v1485 = vld [vmem:[%s199 + $0x318] sm:$0xff]
        %v1486 = vld [vmem:[%s199 + $0x320] sm:$0xff]
        %v1487 = vld [vmem:[%s199 + $0x328] sm:$0xff]
        %v1488 = vld [vmem:[%s199 + $0x330] sm:$0xff]
        %v1489 = vld [vmem:[%s199 + $0x338] sm:$0xff]
        %v1490 = vld [vmem:[%s199 + $0x340] sm:$0xff]
        %v1491 = vld [vmem:[%s199 + $0x348] sm:$0xff]
        %v1492 = vld [vmem:[%s199 + $0x350] sm:$0xff]
        %v1493 = vld [vmem:[%s199 + $0x358] sm:$0xff]
        %v1494 = vld [vmem:[%s199 + $0x360] sm:$0xff]
        %v1495 = vld [vmem:[%s199 + $0x368] sm:$0xff]
        %v1496 = vld [vmem:[%s199 + $0x370] sm:$0xff]
        %v1497 = vld [vmem:[%s199 + $0x378] sm:$0xff]
        %v1498 = vld [vmem:[%s199 + $0x380] sm:$0xff]
        %v1499 = vld [vmem:[%s199 + $0x388] sm:$0xff]
        %v1500 = vld [vmem:[%s199 + $0x390] sm:$0xff]
        %v1501 = vld [vmem:[%s199 + $0x398] sm:$0xff]
        %v1502 = vld [vmem:[%s199 + $0x3a0] sm:$0xff]
        %v1503 = vld [vmem:[%s199 + $0x3a8] sm:$0xff]
        %v1504 = vld [vmem:[%s199 + $0x3b0] sm:$0xff]
        %v1505 = vld [vmem:[%s199 + $0x3b8] sm:$0xff]
        %v1506 = vld [vmem:[%s199 + $0x3c0] sm:$0xff]
        %v1507 = vld [vmem:[%s199 + $0x3c8] sm:$0xff]
        %v1508 = vld [vmem:[%s199 + $0x3d0] sm:$0xff]
        %v1509 = vld [vmem:[%s199 + $0x3d8] sm:$0xff]
        %v1510 = vld [vmem:[%s199 + $0x3e0] sm:$0xff]
        %v1511 = vld [vmem:[%s199 + $0x3e8] sm:$0xff]
        %v1512 = vld [vmem:[%s199 + $0x3f0] sm:$0xff]
        %v1513 = vld [vmem:[%s199 + $0x3f8] sm:$0xff]
        %v1514 = vld [vmem:[%s199 + $0x400] sm:$0xff]
        %v1515 = vld [vmem:[%s199 + $0x408] sm:$0xff]
        %v1516 = vld [vmem:[%s199 + $0x410] sm:$0xff]
        %v1517 = vld [vmem:[%s199 + $0x418] sm:$0xff]
        %v1518 = vld [vmem:[%s199 + $0x420] sm:$0xff]
        %v1519 = vld [vmem:[%s199 + $0x428] sm:$0xff]
        %v1520 = vld [vmem:[%s199 + $0x430] sm:$0xff]
        %v1521 = vld [vmem:[%s199 + $0x438] sm:$0xff]
        %v1522 = vld [vmem:[%s199 + $0x440] sm:$0xff]
        %v1523 = vld [vmem:[%s199 + $0x448] sm:$0xff]
        %v1524 = vld [vmem:[%s199 + $0x450] sm:$0xff]
        %v1525 = vld [vmem:[%s199 + $0x458] sm:$0xff]
        %v1526 = vld [vmem:[%s199 + $0x460] sm:$0xff]
        %v1527 = vld [vmem:[%s199 + $0x468] sm:$0xff]
        %v1528 = vld [vmem:[%s199 + $0x470] sm:$0xff]
        %v1529 = vld [vmem:[%s199 + $0x478] sm:$0xff]
        %v1530 = vld [vmem:[%s199 + $0x480] sm:$0xff]
        %v1531 = vld [vmem:[%s199 + $0x488] sm:$0xff]
        %v1532 = vld [vmem:[%s199 + $0x490] sm:$0xff]
        %v1533 = vld [vmem:[%s199 + $0x498] sm:$0xff]
        %v1534 = vld [vmem:[%s199 + $0x4a0] sm:$0xff]
        %v1535 = vld [vmem:[%s199 + $0x4a8] sm:$0xff]
        %v1536 = vld [vmem:[%s199 + $0x4b0] sm:$0xff]
        %v1537 = vld [vmem:[%s199 + $0x4b8] sm:$0xff]
        %v1538 = vld [vmem:[%s199 + $0x4c0] sm:$0xff]
        %v1539 = vld [vmem:[%s199 + $0x4c8] sm:$0xff]
        %v1540 = vld [vmem:[%s199 + $0x4d0] sm:$0xff]
        %v1541 = vld [vmem:[%s199 + $0x4d8] sm:$0xff]
        %v1542 = vld [vmem:[%s199 + $0x4e0] sm:$0xff]
        %v1543 = vld [vmem:[%s199 + $0x4e8] sm:$0xff]
        %v1544 = vld [vmem:[%s199 + $0x4f0] sm:$0xff]
        %v1545 = vld [vmem:[%s199 + $0x4f8] sm:$0xff]
        %v1546 = vld [vmem:[%s199 + $0x500] sm:$0xff]
        %v1547 = vld [vmem:[%s199 + $0x508] sm:$0xff]
        %v1548 = vld [vmem:[%s199 + $0x510] sm:$0xff]
        %v1549 = vld [vmem:[%s199 + $0x518] sm:$0xff]
        %v1550 = vld [vmem:[%s199 + $0x520] sm:$0xff]
        %v1551 = vld [vmem:[%s199 + $0x528] sm:$0xff]
        %v1552 = vld [vmem:[%s199 + $0x530] sm:$0xff]
        %v1553 = vld [vmem:[%s199 + $0x538] sm:$0xff]
        %v1554 = vld [vmem:[%s199 + $0x540] sm:$0xff]
        %v1555 = vld [vmem:[%s199 + $0x548] sm:$0xff]
        %v1556 = vld [vmem:[%s199 + $0x550] sm:$0xff]
        %v1557 = vld [vmem:[%s199 + $0x558] sm:$0xff]
        %v1558 = vld [vmem:[%s199 + $0x560] sm:$0xff]
        %v1559 = vld [vmem:[%s199 + $0x568] sm:$0xff]
        %v1560 = vld [vmem:[%s199 + $0x570] sm:$0xff]
        %v1561 = vld [vmem:[%s199 + $0x578] sm:$0xff]
        %v1562 = vld [vmem:[%s199 + $0x580] sm:$0xff]
        %v1563 = vld [vmem:[%s199 + $0x588] sm:$0xff]
        %v1564 = vld [vmem:[%s199 + $0x590] sm:$0xff]
        %v1565 = vld [vmem:[%s199 + $0x598] sm:$0xff]
        %v1566 = vld [vmem:[%s199 + $0x5a0] sm:$0xff]
        %v1567 = vld [vmem:[%s199 + $0x5a8] sm:$0xff]
        %v1568 = vld [vmem:[%s199 + $0x5b0] sm:$0xff]
        %v1569 = vld [vmem:[%s199 + $0x5b8] sm:$0xff]
        %v1570 = vld [vmem:[%s199 + $0x5c0] sm:$0xff]
        %v1571 = vld [vmem:[%s199 + $0x5c8] sm:$0xff]
        %v1572 = vld [vmem:[%s199 + $0x5d0] sm:$0xff]
        %v1573 = vld [vmem:[%s199 + $0x5d8] sm:$0xff]
        %v1574 = vld [vmem:[%s199 + $0x5e0] sm:$0xff]
        %v1575 = vld [vmem:[%s199 + $0x5e8] sm:$0xff]
        %v1576 = vld [vmem:[%s199 + $0x5f0] sm:$0xff]
        %v1577 = vld [vmem:[%s199 + $0x5f8] sm:$0xff]
        %v1578 = vld [vmem:[%s199 + $0x600] sm:$0xff]
        %v1579 = vld [vmem:[%s199 + $0x608] sm:$0xff]
        %v1580 = vld [vmem:[%s199 + $0x610] sm:$0xff]
        %v1581 = vld [vmem:[%s199 + $0x618] sm:$0xff]
        %v1582 = vld [vmem:[%s199 + $0x620] sm:$0xff]
        %v1583 = vld [vmem:[%s199 + $0x628] sm:$0xff]
        %v1584 = vld [vmem:[%s199 + $0x630] sm:$0xff]
        %v1585 = vld [vmem:[%s199 + $0x638] sm:$0xff]
        %v1586 = vld [vmem:[%s199 + $0x640] sm:$0xff]
        %v1587 = vld [vmem:[%s199 + $0x648] sm:$0xff]
        %v1588 = vld [vmem:[%s199 + $0x650] sm:$0xff]
        %v1589 = vld [vmem:[%s199 + $0x658] sm:$0xff]
        %v1590 = vld [vmem:[%s199 + $0x660] sm:$0xff]
        %v1591 = vld [vmem:[%s199 + $0x668] sm:$0xff]
        %v1592 = vld [vmem:[%s199 + $0x670] sm:$0xff]
        %v1593 = vld [vmem:[%s199 + $0x678] sm:$0xff]
        %v1594 = vld [vmem:[%s199 + $0x680] sm:$0xff]
        %v1595 = vld [vmem:[%s199 + $0x688] sm:$0xff]
        %v1596 = vld [vmem:[%s199 + $0x690] sm:$0xff]
        %v1597 = vld [vmem:[%s199 + $0x698] sm:$0xff]
        %v1598 = vld [vmem:[%s199 + $0x6a0] sm:$0xff]
        %v1599 = vld [vmem:[%s199 + $0x6a8] sm:$0xff]
        %v1600 = vld [vmem:[%s199 + $0x6b0] sm:$0xff]
        %v1601 = vld [vmem:[%s199 + $0x6b8] sm:$0xff]
        %v1602 = vld [vmem:[%s199 + $0x6c0] sm:$0xff]
        %v1603 = vld [vmem:[%s199 + $0x6c8] sm:$0xff]
        %v1604 = vld [vmem:[%s199 + $0x6d0] sm:$0xff]
        %v1605 = vld [vmem:[%s199 + $0x6d8] sm:$0xff]
        %v1606 = vld [vmem:[%s199 + $0x6e0] sm:$0xff]
        %v1607 = vld [vmem:[%s199 + $0x6e8] sm:$0xff]
        %v1608 = vld [vmem:[%s199 + $0x6f0] sm:$0xff]
        %v1609 = vld [vmem:[%s199 + $0x6f8] sm:$0xff]
        %v1610 = vld [vmem:[%s199 + $0x700] sm:$0xff]
        %v1611 = vld [vmem:[%s199 + $0x708] sm:$0xff]
        %v1612 = vld [vmem:[%s199 + $0x710] sm:$0xff]
        %v1613 = vld [vmem:[%s199 + $0x718] sm:$0xff]
        %v1614 = vld [vmem:[%s199 + $0x720] sm:$0xff]
        %v1615 = vld [vmem:[%s199 + $0x728] sm:$0xff]
        %v1616 = vld [vmem:[%s199 + $0x730] sm:$0xff]
        %v1617 = vld [vmem:[%s199 + $0x738] sm:$0xff]
        %v1618 = vld [vmem:[%s199 + $0x740] sm:$0xff]
        %v1619 = vld [vmem:[%s199 + $0x748] sm:$0xff]
        %v1620 = vld [vmem:[%s199 + $0x750] sm:$0xff]
        %v1621 = vld [vmem:[%s199 + $0x758] sm:$0xff]
        %v1622 = vld [vmem:[%s199 + $0x760] sm:$0xff]
        %v1623 = vld [vmem:[%s199 + $0x768] sm:$0xff]
        %v1624 = vld [vmem:[%s199 + $0x770] sm:$0xff]
        %v1625 = vld [vmem:[%s199 + $0x778] sm:$0xff]
        %v1626 = vld [vmem:[%s199 + $0x780] sm:$0xff]
        %v1627 = vld [vmem:[%s199 + $0x788] sm:$0xff]
        %v1628 = vld [vmem:[%s199 + $0x790] sm:$0xff]
        %v1629 = vld [vmem:[%s199 + $0x798] sm:$0xff]
        %v1630 = vld [vmem:[%s199 + $0x7a0] sm:$0xff]
        %v1631 = vld [vmem:[%s199 + $0x7a8] sm:$0xff]
        %v1632 = vld [vmem:[%s199 + $0x7b0] sm:$0xff]
        %v1633 = vld [vmem:[%s199 + $0x7b8] sm:$0xff]
        %v1634 = vld [vmem:[%s199 + $0x7c0] sm:$0xff]
        %v1635 = vld [vmem:[%s199 + $0x7c8] sm:$0xff]
        %v1636 = vld [vmem:[%s199 + $0x7d0] sm:$0xff]
        %v1637 = vld [vmem:[%s199 + $0x7d8] sm:$0xff]
        %v1638 = vld [vmem:[%s199 + $0x7e0] sm:$0xff]
        %v1639 = vld [vmem:[%s199 + $0x7e8] sm:$0xff]
        %v1640 = vld [vmem:[%s199 + $0x7f0] sm:$0xff]
        %v1641 = vld [vmem:[%s199 + $0x7f8] sm:$0xff]
        %v1642 = vld [vmem:[%s199 + $0x800] sm:$0xff]
        %v1643 = vld [vmem:[%s199 + $0x808] sm:$0xff]
        %v1644 = vld [vmem:[%s199 + $0x810] sm:$0xff]
        %v1645 = vld [vmem:[%s199 + $0x818] sm:$0xff]
        %v1646 = vld [vmem:[%s199 + $0x820] sm:$0xff]
        %v1647 = vld [vmem:[%s199 + $0x828] sm:$0xff]
        %v1648 = vld [vmem:[%s199 + $0x830] sm:$0xff]
        %v1649 = vld [vmem:[%s199 + $0x838] sm:$0xff]
        %v1650 = vld [vmem:[%s199 + $0x840] sm:$0xff]
        %v1651 = vld [vmem:[%s199 + $0x848] sm:$0xff]
        %v1652 = vld [vmem:[%s199 + $0x850] sm:$0xff]
        %v1653 = vld [vmem:[%s199 + $0x858] sm:$0xff]
        %v1654 = vld [vmem:[%s199 + $0x860] sm:$0xff]
        %v1655 = vld [vmem:[%s199 + $0x868] sm:$0xff]
        %v1656 = vld [vmem:[%s199 + $0x870] sm:$0xff]
        %v1657 = vld [vmem:[%s199 + $0x878] sm:$0xff]
        %v1658 = vld [vmem:[%s199 + $0x880] sm:$0xff]
        %v1659 = vld [vmem:[%s199 + $0x888] sm:$0xff]
        %v1660 = vld [vmem:[%s199 + $0x890] sm:$0xff]
        %v1661 = vld [vmem:[%s199 + $0x898] sm:$0xff]
        %v1662 = vld [vmem:[%s199 + $0x8a0] sm:$0xff]
        %v1663 = vld [vmem:[%s199 + $0x8a8] sm:$0xff]
        %v1664 = vld [vmem:[%s199 + $0x8b0] sm:$0xff]
        %v1665 = vld [vmem:[%s199 + $0x8b8] sm:$0xff]
        %v1666 = vld [vmem:[%s199 + $0x8c0] sm:$0xff]
        %v1667 = vld [vmem:[%s199 + $0x8c8] sm:$0xff]
        %v1668 = vld [vmem:[%s199 + $0x8d0] sm:$0xff]
        %v1669 = vld [vmem:[%s199 + $0x8d8] sm:$0xff]
        %v1670 = vld [vmem:[%s199 + $0x8e0] sm:$0xff]
        %v1671 = vld [vmem:[%s199 + $0x8e8] sm:$0xff]
        %v1672 = vld [vmem:[%s199 + $0x8f0] sm:$0xff]
        %v1673 = vld [vmem:[%s199 + $0x8f8] sm:$0xff]
        %v1674 = vld [vmem:[%s199 + $0x900] sm:$0xff]
        %v1675 = vld [vmem:[%s199 + $0x908] sm:$0xff]
        %v1676 = vld [vmem:[%s199 + $0x910] sm:$0xff]
        %v1677 = vld [vmem:[%s199 + $0x918] sm:$0xff]
        %v1678 = vld [vmem:[%s199 + $0x920] sm:$0xff]
        %v1679 = vld [vmem:[%s199 + $0x928] sm:$0xff]
        %v1680 = vld [vmem:[%s199 + $0x930] sm:$0xff]
        %v1681 = vld [vmem:[%s199 + $0x938] sm:$0xff]
        %v1682 = vld [vmem:[%s199 + $0x940] sm:$0xff]
        %v1683 = vld [vmem:[%s199 + $0x948] sm:$0xff]
        %v1684 = vld [vmem:[%s199 + $0x950] sm:$0xff]
        %v1685 = vld [vmem:[%s199 + $0x958] sm:$0xff]
        %v1686 = vld [vmem:[%s199 + $0x960] sm:$0xff]
        %v1687 = vld [vmem:[%s199 + $0x968] sm:$0xff]
        %v1688 = vld [vmem:[%s199 + $0x970] sm:$0xff]
        %v1689 = vld [vmem:[%s199 + $0x978] sm:$0xff]
        %v1690 = vld [vmem:[%s199 + $0x980] sm:$0xff]
        %v1691 = vld [vmem:[%s199 + $0x988] sm:$0xff]
        %v1692 = vld [vmem:[%s199 + $0x990] sm:$0xff]
        %v1693 = vld [vmem:[%s199 + $0x998] sm:$0xff]
        %v1694 = vld [vmem:[%s199 + $0x9a0] sm:$0xff]
        %v1695 = vld [vmem:[%s199 + $0x9a8] sm:$0xff]
        %v1696 = vld [vmem:[%s199 + $0x9b0] sm:$0xff]
        %v1697 = vld [vmem:[%s199 + $0x9b8] sm:$0xff]
        %v1698 = vld [vmem:[%s199 + $0x9c0] sm:$0xff]
        %v1699 = vld [vmem:[%s199 + $0x9c8] sm:$0xff]
        %v1700 = vld [vmem:[%s199 + $0x9d0] sm:$0xff]
        %v1701 = vld [vmem:[%s199 + $0x9d8] sm:$0xff]
        %v1702 = vld [vmem:[%s199 + $0x9e0] sm:$0xff]
        %v1703 = vld [vmem:[%s199 + $0x9e8] sm:$0xff]
        %v1704 = vld [vmem:[%s199 + $0x9f0] sm:$0xff]
        %v1705 = vld [vmem:[%s199 + $0x9f8] sm:$0xff]
        %v1706 = vld [vmem:[%s199 + $0xa00] sm:$0xff]
        %v1707 = vld [vmem:[%s199 + $0xa08] sm:$0xff]
        %v1708 = vld [vmem:[%s199 + $0xa10] sm:$0xff]
        %v1709 = vld [vmem:[%s199 + $0xa18] sm:$0xff]
        %v1710 = vld [vmem:[%s199 + $0xa20] sm:$0xff]
        %v1711 = vld [vmem:[%s199 + $0xa28] sm:$0xff]
        %v1712 = vld [vmem:[%s199 + $0xa30] sm:$0xff]
        %v1713 = vld [vmem:[%s199 + $0xa38] sm:$0xff]
        %v1714 = vld [vmem:[%s199 + $0xa40] sm:$0xff]
        %v1715 = vld [vmem:[%s199 + $0xa48] sm:$0xff]
        %v1716 = vld [vmem:[%s199 + $0xa50] sm:$0xff]
        %v1717 = vld [vmem:[%s199 + $0xa58] sm:$0xff]
        %v1718 = vld [vmem:[%s199 + $0xa60] sm:$0xff]
        %v1719 = vld [vmem:[%s199 + $0xa68] sm:$0xff]
        %v1720 = vld [vmem:[%s199 + $0xa70] sm:$0xff]
        %v1721 = vld [vmem:[%s199 + $0xa78] sm:$0xff]
        %v1722 = vld [vmem:[%s199 + $0xa80] sm:$0xff]
        %v1723 = vld [vmem:[%s199 + $0xa88] sm:$0xff]
        %v1724 = vld [vmem:[%s199 + $0xa90] sm:$0xff]
        %v1725 = vld [vmem:[%s199 + $0xa98] sm:$0xff]
        %v1726 = vld [vmem:[%s199 + $0xaa0] sm:$0xff]
        %v1727 = vld [vmem:[%s199 + $0xaa8] sm:$0xff]
        %v1728 = vld [vmem:[%s199 + $0xab0] sm:$0xff]
        %v1729 = vld [vmem:[%s199 + $0xab8] sm:$0xff]
        %v1730 = vld [vmem:[%s199 + $0xac0] sm:$0xff]
        %v1731 = vld [vmem:[%s199 + $0xac8] sm:$0xff]
        %v1732 = vld [vmem:[%s199 + $0xad0] sm:$0xff]
        %v1733 = vld [vmem:[%s199 + $0xad8] sm:$0xff]
        %v1734 = vld [vmem:[%s199 + $0xae0] sm:$0xff]
        %v1735 = vld [vmem:[%s199 + $0xae8] sm:$0xff]
        %v1736 = vld [vmem:[%s199 + $0xaf0] sm:$0xff]
        %v1737 = vld [vmem:[%s199 + $0xaf8] sm:$0xff]
        %v1738 = vld [vmem:[%s199 + $0xb00] sm:$0xff]
        %v1739 = vld [vmem:[%s199 + $0xb08] sm:$0xff]
        %v1740 = vld [vmem:[%s199 + $0xb10] sm:$0xff]
        %v1741 = vld [vmem:[%s199 + $0xb18] sm:$0xff]
        %v1742 = vld [vmem:[%s199 + $0xb20] sm:$0xff]
        %v1743 = vld [vmem:[%s199 + $0xb28] sm:$0xff]
        %v1744 = vld [vmem:[%s199 + $0xb30] sm:$0xff]
        %v1745 = vld [vmem:[%s199 + $0xb38] sm:$0xff]
        %v1746 = vld [vmem:[%s199 + $0xb40] sm:$0xff]
        %v1747 = vld [vmem:[%s199 + $0xb48] sm:$0xff]
        %v1748 = vld [vmem:[%s199 + $0xb50] sm:$0xff]
        %v1749 = vld [vmem:[%s199 + $0xb58] sm:$0xff]
        %v1750 = vld [vmem:[%s199 + $0xb60] sm:$0xff]
        %v1751 = vld [vmem:[%s199 + $0xb68] sm:$0xff]
        %v1752 = vld [vmem:[%s199 + $0xb70] sm:$0xff]
        %v1753 = vld [vmem:[%s199 + $0xb78] sm:$0xff]
        %v1754 = vld [vmem:[%s199 + $0xb80] sm:$0xff]
        %v1755 = vld [vmem:[%s199 + $0xb88] sm:$0xff]
        %v1756 = vld [vmem:[%s199 + $0xb90] sm:$0xff]
        %v1757 = vld [vmem:[%s199 + $0xb98] sm:$0xff]
        %v1758 = vld [vmem:[%s199 + $0xba0] sm:$0xff]
        %v1759 = vld [vmem:[%s199 + $0xba8] sm:$0xff]
        %v1760 = vld [vmem:[%s199 + $0xbb0] sm:$0xff]
        %v1761 = vld [vmem:[%s199 + $0xbb8] sm:$0xff]
        %v1762 = vld [vmem:[%s199 + $0xbc0] sm:$0xff]
        %v1763 = vld [vmem:[%s199 + $0xbc8] sm:$0xff]
        %v1764 = vld [vmem:[%s199 + $0xbd0] sm:$0xff]
        %v1765 = vld [vmem:[%s199 + $0xbd8] sm:$0xff]
        %v1766 = vld [vmem:[%s199 + $0xbe0] sm:$0xff]
        %v1767 = vld [vmem:[%s199 + $0xbe8] sm:$0xff]
        %v1768 = vld [vmem:[%s199 + $0xbf0] sm:$0xff]
        %v1769 = vld [vmem:[%s199 + $0xbf8] sm:$0xff]
        %v1770 = vld [vmem:[%s207] sm:$0x1]
        %v1772 = vlaneseq
        %v1773 = vshrl.u32 %v1772, 7
        %v1774 = vsub.s32 0, %v1773
        %v1775 = vrot.slane %v1770, %v1774
        %1777 = vmatprep.subr.mxu0 0.0
        %1778 = vmatpush1.msra.mxu0 %v1386
        %1779 = vmatprep.subr.mxu0 0.0
        %1780 = vmatpush1.msra.mxu0 %v1387
        %1781 = vmatprep.subr.mxu0 0.0
        %1782 = vmatpush1.msra.mxu0 %v1388
        %1783 = vmatprep.subr.mxu0 0.0
        %1784 = vmatpush1.msra.mxu0 %v1389
        %1785 = vmatprep.subr.mxu0 0.0
        %1786 = vmatpush1.msra.mxu0 %v1390
        %1787 = vmatprep.subr.mxu0 0.0
        %1788 = vmatpush1.msra.mxu0 %v1391
        %1789 = vmatprep.subr.mxu0 0.0
        %1790 = vmatpush1.msra.mxu0 %v1392
        %1791 = vmatprep.subr.mxu0 0.0
        %1792 = vmatpush1.msra.mxu0 %v1393
        %1793 = vmatprep.subr.mxu0 0.0
        %1794 = vmatpush1.msra.mxu0 %v1394
        %1795 = vmatprep.subr.mxu0 0.0
        %1796 = vmatpush1.msra.mxu0 %v1395
        %1797 = vmatprep.subr.mxu0 0.0
        %1798 = vmatpush1.msra.mxu0 %v1396
        %1799 = vmatprep.subr.mxu0 0.0
        %1800 = vmatpush1.msra.mxu0 %v1397
        %1801 = vmatprep.subr.mxu0 0.0
        %1802 = vmatpush1.msra.mxu0 %v1398
        %1803 = vmatprep.subr.mxu0 0.0
        %1804 = vmatpush1.msra.mxu0 %v1399
        %1805 = vmatprep.subr.mxu0 0.0
        %1806 = vmatpush1.msra.mxu0 %v1400
        %1807 = vmatprep.subr.mxu0 0.0
        %1808 = vmatpush1.msra.mxu0 %v1401
        %1809 = vmatprep.subr.mxu0 0.0
        %1810 = vmatpush1.msra.mxu0 %v1402
        %1811 = vmatprep.subr.mxu0 0.0
        %1812 = vmatpush1.msra.mxu0 %v1403
        %1813 = vmatprep.subr.mxu0 0.0
        %1814 = vmatpush1.msra.mxu0 %v1404
        %1815 = vmatprep.subr.mxu0 0.0
        %1816 = vmatpush1.msra.mxu0 %v1405
        %1817 = vmatprep.subr.mxu0 0.0
        %1818 = vmatpush1.msra.mxu0 %v1406
        %1819 = vmatprep.subr.mxu0 0.0
        %1820 = vmatpush1.msra.mxu0 %v1407
        %1821 = vmatprep.subr.mxu0 0.0
        %1822 = vmatpush1.msra.mxu0 %v1408
        %1823 = vmatprep.subr.mxu0 0.0
        %1824 = vmatpush1.msra.mxu0 %v1409
        %1825 = vmatprep.subr.mxu0 0.0
        %1826 = vmatpush1.msra.mxu0 %v1410
        %1827 = vmatprep.subr.mxu0 0.0
        %1828 = vmatpush1.msra.mxu0 %v1411
        %1829 = vmatprep.subr.mxu0 0.0
        %1830 = vmatpush1.msra.mxu0 %v1412
        %1831 = vmatprep.subr.mxu0 0.0
        %1832 = vmatpush1.msra.mxu0 %v1413
        %1833 = vmatprep.subr.mxu0 0.0
        %1834 = vmatpush1.msra.mxu0 %v1414
        %1835 = vmatprep.subr.mxu0 0.0
        %1836 = vmatpush1.msra.mxu0 %v1415
        %1837 = vmatprep.subr.mxu0 0.0
        %1838 = vmatpush1.msra.mxu0 %v1416
        %1839 = vmatprep.subr.mxu0 0.0
        %1840 = vmatpush1.msra.mxu0 %v1417
        %1841 = vmatprep.mubr.f32.mxu0 %v235
        %1842 = vmatmul.mubr.f32.gmra.mrb[0].mxu0 %v234
        %v1843 = vpop.f32.mrb[0].mxu0
        %v1844 = vadd.f32 %v1775, %v1843
        %v1845 = vpop.f32.mrb[0].mxu0
        %1846 = vmatprep.mubr.f32.mxu0 %v259
        %1847 = vmatmul.mubr.f32.gmra.mrb[0].mxu0 %v258
        %v1848 = vpop.f32.mrb[0].mxu0
        %v1849 = vadd.f32 %v1775, %v1848
        %v1850 = vpop.f32.mrb[0].mxu0
        %1851 = vmatprep.mubr.f32.mxu0 %v283
        %1852 = vmatmul.mubr.f32.gmra.mrb[0].mxu0 %v282
        %v1853 = vpop.f32.mrb[0].mxu0
        %v1854 = vadd.f32 %v1775, %v1853
        %v1855 = vpop.f32.mrb[0].mxu0
        %1856 = vmatprep.mubr.f32.mxu0 %v307
        %1857 = vmatmul.mubr.f32.gmra.mrb[0].mxu0 %v306
        %v1858 = vpop.f32.mrb[0].mxu0
        %v1859 = vadd.f32 %v1775, %v1858
        %v1860 = vpop.f32.mrb[0].mxu0
        %1861 = vmatprep.mubr.f32.mxu0 %v331
        %1862 = vmatmul.mubr.f32.gmra.mrb[0].mxu0 %v330
        %v1863 = vpop.f32.mrb[0].mxu0
        %v1864 = vadd.f32 %v1775, %v1863
        %v1865 = vpop.f32.mrb[0].mxu0
        %1866 = vmatprep.mubr.f32.mxu0 %v355
        %1867 = vmatmul.mubr.f32.gmra.mrb[0].mxu0 %v354
        %v1868 = vpop.f32.mrb[0].mxu0
        %v1869 = vadd.f32 %v1775, %v1868
        %v1870 = vpop.f32.mrb[0].mxu0
        %1871 = vmatprep.mubr.f32.mxu0 %v379
        %1872 = vmatmul.mubr.f32.gmra.mrb[0].mxu0 %v378
        %v1873 = vpop.f32.mrb[0].mxu0
        %v1874 = vadd.f32 %v1775, %v1873
        %v1875 = vpop.f32.mrb[0].mxu0
        %1876 = vmatprep.mubr.f32.mxu0 %v403
        %1877 = vmatmul.mubr.f32.gmra.mrb[0].mxu0 %v402
        %v1878 = vpop.f32.mrb[0].mxu0
        %v1879 = vadd.f32 %v1775, %v1878
        %v1880 = vpop.f32.mrb[0].mxu0
        %1881 = vmatprep.mubr.f32.mxu0 %v427
        %1882 = vmatmul.mubr.f32.gmra.mrb[0].mxu0 %v426
        %v1883 = vpop.f32.mrb[0].mxu0
        %v1884 = vadd.f32 %v1775, %v1883
        %v1885 = vpop.f32.mrb[0].mxu0
        %1886 = vmatprep.mubr.f32.mxu0 %v451
        %1887 = vmatmul.mubr.f32.gmra.mrb[0].mxu0 %v450
        %v1888 = vpop.f32.mrb[0].mxu0
        %v1889 = vadd.f32 %v1775, %v1888
        %v1890 = vpop.f32.mrb[0].mxu0
        %1891 = vmatprep.mubr.f32.mxu0 %v475
        %1892 = vmatmul.mubr.f32.gmra.mrb[0].mxu0 %v474
        %v1893 = vpop.f32.mrb[0].mxu0
        %v1894 = vadd.f32 %v1775, %v1893
        %v1895 = vpop.f32.mrb[0].mxu0
        %1896 = vmatprep.mubr.f32.mxu0 %v499
        %1897 = vmatmul.mubr.f32.gmra.mrb[0].mxu0 %v498
        %v1898 = vpop.f32.mrb[0].mxu0
        %v1899 = vadd.f32 %v1775, %v1898
        %v1900 = vpop.f32.mrb[0].mxu0
        %1901 = vmatprep.mubr.f32.mxu0 %v523
        %1902 = vmatmul.mubr.f32.gmra.mrb[0].mxu0 %v522
        %v1903 = vpop.f32.mrb[0].mxu0
        %v1904 = vadd.f32 %v1775, %v1903
        %v1905 = vpop.f32.mrb[0].mxu0
        %1906 = vmatprep.mubr.f32.mxu0 %v547
        %1907 = vmatmul.mubr.f32.gmra.mrb[0].mxu0 %v546
        %v1908 = vpop.f32.mrb[0].mxu0
        %v1909 = vadd.f32 %v1775, %v1908
        %v1910 = vpop.f32.mrb[0].mxu0
        %1911 = vmatprep.mubr.f32.mxu0 %v571
        %1912 = vmatmul.mubr.f32.gmra.mrb[0].mxu0 %v570
        %v1913 = vpop.f32.mrb[0].mxu0
        %v1914 = vadd.f32 %v1775, %v1913
        %v1915 = vpop.f32.mrb[0].mxu0
        %1916 = vmatprep.mubr.f32.mxu0 %v595
        %1917 = vmatmul.mubr.f32.gmra.mrb[0].mxu0 %v594
        %v1918 = vpop.f32.mrb[0].mxu0
        %v1919 = vadd.f32 %v1775, %v1918
        %v1920 = vpop.f32.mrb[0].mxu0
        %1921 = vmatprep.mubr.f32.mxu0 %v619
        %1922 = vmatmul.mubr.f32.gmra.mrb[0].mxu0 %v618
        %v1923 = vpop.f32.mrb[0].mxu0
        %v1924 = vadd.f32 %v1775, %v1923
        %v1925 = vpop.f32.mrb[0].mxu0
        %1926 = vmatprep.mubr.f32.mxu0 %v643
        %1927 = vmatmul.mubr.f32.gmra.mrb[0].mxu0 %v642
        %v1928 = vpop.f32.mrb[0].mxu0
        %v1929 = vadd.f32 %v1775, %v1928
        %v1930 = vpop.f32.mrb[0].mxu0
        %1931 = vmatprep.mubr.f32.mxu0 %v667
        %1932 = vmatmul.mubr.f32.gmra.mrb[0].mxu0 %v666
        %v1933 = vpop.f32.mrb[0].mxu0
        %v1934 = vadd.f32 %v1775, %v1933
        %v1935 = vpop.f32.mrb[0].mxu0
        %1936 = vmatprep.mubr.f32.mxu0 %v691
        %1937 = vmatmul.mubr.f32.gmra.mrb[0].mxu0 %v690
        %v1938 = vpop.f32.mrb[0].mxu0
        %v1939 = vadd.f32 %v1775, %v1938
        %v1940 = vpop.f32.mrb[0].mxu0
        %1941 = vmatprep.mubr.f32.mxu0 %v715
        %1942 = vmatmul.mubr.f32.gmra.mrb[0].mxu0 %v714
        %v1943 = vpop.f32.mrb[0].mxu0
        %v1944 = vadd.f32 %v1775, %v1943
        %v1945 = vpop.f32.mrb[0].mxu0
        %1946 = vmatprep.mubr.f32.mxu0 %v739
        %1947 = vmatmul.mubr.f32.gmra.mrb[0].mxu0 %v738
        %v1948 = vpop.f32.mrb[0].mxu0
        %v1949 = vadd.f32 %v1775, %v1948
        %v1950 = vpop.f32.mrb[0].mxu0
        %1951 = vmatprep.mubr.f32.mxu0 %v763
        %1952 = vmatmul.mubr.f32.gmra.mrb[0].mxu0 %v762
        %v1953 = vpop.f32.mrb[0].mxu0
        %v1954 = vadd.f32 %v1775, %v1953
        %v1955 = vpop.f32.mrb[0].mxu0
        %1956 = vmatprep.mubr.f32.mxu0 %v787
        %1957 = vmatmul.mubr.f32.gmra.mrb[0].mxu0 %v786
        %v1958 = vpop.f32.mrb[0].mxu0
        %v1959 = vadd.f32 %v1775, %v1958
        %v1960 = vpop.f32.mrb[0].mxu0
        %1961 = vmatprep.mubr.f32.mxu0 %v811
        %1962 = vmatmul.mubr.f32.gmra.mrb[0].mxu0 %v810
        %v1963 = vpop.f32.mrb[0].mxu0
        %v1964 = vadd.f32 %v1775, %v1963
        %v1965 = vpop.f32.mrb[0].mxu0
        %1966 = vmatprep.mubr.f32.mxu0 %v835
        %1967 = vmatmul.mubr.f32.gmra.mrb[0].mxu0 %v834
        %v1968 = vpop.f32.mrb[0].mxu0
        %v1969 = vadd.f32 %v1775, %v1968
        %v1970 = vpop.f32.mrb[0].mxu0
        %1971 = vmatprep.mubr.f32.mxu0 %v859
        %1972 = vmatmul.mubr.f32.gmra.mrb[0].mxu0 %v858
        %v1973 = vpop.f32.mrb[0].mxu0
        %v1974 = vadd.f32 %v1775, %v1973
        %v1975 = vpop.f32.mrb[0].mxu0
        %1976 = vmatprep.mubr.f32.mxu0 %v883
        %1977 = vmatmul.mubr.f32.gmra.mrb[0].mxu0 %v882
        %v1978 = vpop.f32.mrb[0].mxu0
        %v1979 = vadd.f32 %v1775, %v1978
        %v1980 = vpop.f32.mrb[0].mxu0
        %1981 = vmatprep.mubr.f32.mxu0 %v907
        %1982 = vmatmul.mubr.f32.gmra.mrb[0].mxu0 %v906
        %v1983 = vpop.f32.mrb[0].mxu0
        %v1984 = vadd.f32 %v1775, %v1983
        %v1985 = vpop.f32.mrb[0].mxu0
        %1986 = vmatprep.mubr.f32.mxu0 %v931
        %1987 = vmatmul.mubr.f32.gmra.mrb[0].mxu0 %v930
        %v1988 = vpop.f32.mrb[0].mxu0
        %v1989 = vadd.f32 %v1775, %v1988
        %v1990 = vpop.f32.mrb[0].mxu0
        %1991 = vmatprep.mubr.f32.mxu0 %v955
        %1992 = vmatmul.mubr.f32.gmra.mrb[0].mxu0 %v954
        %v1993 = vpop.f32.mrb[0].mxu0
        %v1994 = vadd.f32 %v1775, %v1993
        %v1995 = vpop.f32.mrb[0].mxu0
        %1996 = vmatprep.mubr.f32.mxu0 %v979
        %1997 = vmatmul.mubr.f32.gmra.mrb[0].mxu0 %v978
        %v1998 = vpop.f32.mrb[0].mxu0
        %v1999 = vadd.f32 %v1775, %v1998
        %v2000 = vpop.f32.mrb[0].mxu0
        %2001 = vmatprep.mubr.f32.mxu0 %v1003
        %2002 = vmatmul.mubr.f32.gmra.mrb[0].mxu0 %v1002
        %v2003 = vpop.f32.mrb[0].mxu0
        %v2004 = vadd.f32 %v1775, %v2003
        %v2005 = vpop.f32.mrb[0].mxu0
        %2006 = vmatprep.mubr.f32.mxu0 %v1027
        %2007 = vmatmul.mubr.f32.gmra.mrb[0].mxu0 %v1026
        %v2008 = vpop.f32.mrb[0].mxu0
        %v2009 = vadd.f32 %v1775, %v2008
        %v2010 = vpop.f32.mrb[0].mxu0
        %2011 = vmatprep.mubr.f32.mxu0 %v1051
        %2012 = vmatmul.mubr.f32.gmra.mrb[0].mxu0 %v1050
        %v2013 = vpop.f32.mrb[0].mxu0
        %v2014 = vadd.f32 %v1775, %v2013
        %v2015 = vpop.f32.mrb[0].mxu0
        %2016 = vmatprep.mubr.f32.mxu0 %v1075
        %2017 = vmatmul.mubr.f32.gmra.mrb[0].mxu0 %v1074
        %v2018 = vpop.f32.mrb[0].mxu0
        %v2019 = vadd.f32 %v1775, %v2018
        %v2020 = vpop.f32.mrb[0].mxu0
        %2021 = vmatprep.mubr.f32.mxu0 %v1099
        %2022 = vmatmul.mubr.f32.gmra.mrb[0].mxu0 %v1098
        %v2023 = vpop.f32.mrb[0].mxu0
        %v2024 = vadd.f32 %v1775, %v2023
        %v2025 = vpop.f32.mrb[0].mxu0
        %2026 = vmatprep.mubr.f32.mxu0 %v1123
        %2027 = vmatmul.mubr.f32.gmra.mrb[0].mxu0 %v1122
        %v2028 = vpop.f32.mrb[0].mxu0
        %v2029 = vadd.f32 %v1775, %v2028
        %v2030 = vpop.f32.mrb[0].mxu0
        %2031 = vmatprep.mubr.f32.mxu0 %v1147
        %2032 = vmatmul.mubr.f32.gmra.mrb[0].mxu0 %v1146
        %v2033 = vpop.f32.mrb[0].mxu0
        %v2034 = vadd.f32 %v1775, %v2033
        %v2035 = vpop.f32.mrb[0].mxu0
        %2036 = vmatprep.mubr.f32.mxu0 %v1171
        %2037 = vmatmul.mubr.f32.gmra.mrb[0].mxu0 %v1170
        %v2038 = vpop.f32.mrb[0].mxu0
        %v2039 = vadd.f32 %v1775, %v2038
        %v2040 = vpop.f32.mrb[0].mxu0
        %2041 = vmatprep.mubr.f32.mxu0 %v1195
        %2042 = vmatmul.mubr.f32.gmra.mrb[0].mxu0 %v1194
        %v2043 = vpop.f32.mrb[0].mxu0
        %v2044 = vadd.f32 %v1775, %v2043
        %v2045 = vpop.f32.mrb[0].mxu0
        %2046 = vmatprep.mubr.f32.mxu0 %v1219
        %2047 = vmatmul.mubr.f32.gmra.mrb[0].mxu0 %v1218
        %v2048 = vpop.f32.mrb[0].mxu0
        %v2049 = vadd.f32 %v1775, %v2048
        %v2050 = vpop.f32.mrb[0].mxu0
        %2051 = vmatprep.mubr.f32.mxu0 %v1243
        %2052 = vmatmul.mubr.f32.gmra.mrb[0].mxu0 %v1242
        %v2053 = vpop.f32.mrb[0].mxu0
        %v2054 = vadd.f32 %v1775, %v2053
        %v2055 = vpop.f32.mrb[0].mxu0
        %2056 = vmatprep.mubr.f32.mxu0 %v1267
        %2057 = vmatmul.mubr.f32.gmra.mrb[0].mxu0 %v1266
        %v2058 = vpop.f32.mrb[0].mxu0
        %v2059 = vadd.f32 %v1775, %v2058
        %v2060 = vpop.f32.mrb[0].mxu0
        %2061 = vmatprep.mubr.f32.mxu0 %v1291
        %2062 = vmatmul.mubr.f32.gmra.mrb[0].mxu0 %v1290
        %v2063 = vpop.f32.mrb[0].mxu0
        %v2064 = vadd.f32 %v1775, %v2063
        %v2065 = vpop.f32.mrb[0].mxu0
        %2066 = vmatprep.mubr.f32.mxu0 %v1315
        %2067 = vmatmul.mubr.f32.gmra.mrb[0].mxu0 %v1314
        %v2068 = vpop.f32.mrb[0].mxu0
        %v2069 = vadd.f32 %v1775, %v2068
        %v2070 = vpop.f32.mrb[0].mxu0
        %2071 = vmatprep.mubr.f32.mxu0 %v1339
        %2072 = vmatmul.mubr.f32.gmra.mrb[0].mxu0 %v1338
        %v2073 = vpop.f32.mrb[0].mxu0
        %v2074 = vadd.f32 %v1775, %v2073
        %v2075 = vpop.f32.mrb[0].mxu0
        %2076 = vmatprep.mubr.f32.mxu0 %v1363
        %2077 = vmatmul.mubr.f32.gmra.mrb[0].mxu0 %v1362
        %v2078 = vpop.f32.mrb[0].mxu0
        %v2079 = vadd.f32 %v1775, %v2078
        %v2080 = vpop.f32.mrb[0].mxu0
        %2081 = vdwg.mxu0
        %2082 = vmatprep.subr.mxu0 0.0
        %2083 = vmatpush1.msra.mxu0 %v1418
        %2084 = vmatprep.subr.mxu0 0.0
        %2085 = vmatpush1.msra.mxu0 %v1419
        %2086 = vmatprep.subr.mxu0 0.0
        %2087 = vmatpush1.msra.mxu0 %v1420
        %2088 = vmatprep.subr.mxu0 0.0
        %2089 = vmatpush1.msra.mxu0 %v1421
        %2090 = vmatprep.subr.mxu0 0.0
        %2091 = vmatpush1.msra.mxu0 %v1422
        %2092 = vmatprep.subr.mxu0 0.0
        %2093 = vmatpush1.msra.mxu0 %v1423
        %2094 = vmatprep.subr.mxu0 0.0
        %2095 = vmatpush1.msra.mxu0 %v1424
        %2096 = vmatprep.subr.mxu0 0.0
        %2097 = vmatpush1.msra.mxu0 %v1425
        %2098 = vmatprep.subr.mxu0 0.0
        %2099 = vmatpush1.msra.mxu0 %v1426
        %2100 = vmatprep.subr.mxu0 0.0
        %2101 = vmatpush1.msra.mxu0 %v1427
        %2102 = vmatprep.subr.mxu0 0.0
        %2103 = vmatpush1.msra.mxu0 %v1428
        %2104 = vmatprep.subr.mxu0 0.0
        %2105 = vmatpush1.msra.mxu0 %v1429
        %2106 = vmatprep.subr.mxu0 0.0
        %2107 = vmatpush1.msra.mxu0 %v1430
        %2108 = vmatprep.subr.mxu0 0.0
        %2109 = vmatpush1.msra.mxu0 %v1431
        %2110 = vmatprep.subr.mxu0 0.0
        %2111 = vmatpush1.msra.mxu0 %v1432
        %2112 = vmatprep.subr.mxu0 0.0
        %2113 = vmatpush1.msra.mxu0 %v1433
        %2114 = vmatprep.subr.mxu0 0.0
        %2115 = vmatpush1.msra.mxu0 %v1434
        %2116 = vmatprep.subr.mxu0 0.0
        %2117 = vmatpush1.msra.mxu0 %v1435
        %2118 = vmatprep.subr.mxu0 0.0
        %2119 = vmatpush1.msra.mxu0 %v1436
        %2120 = vmatprep.subr.mxu0 0.0
        %2121 = vmatpush1.msra.mxu0 %v1437
        %2122 = vmatprep.subr.mxu0 0.0
        %2123 = vmatpush1.msra.mxu0 %v1438
        %2124 = vmatprep.subr.mxu0 0.0
        %2125 = vmatpush1.msra.mxu0 %v1439
        %2126 = vmatprep.subr.mxu0 0.0
        %2127 = vmatpush1.msra.mxu0 %v1440
        %2128 = vmatprep.subr.mxu0 0.0
        %2129 = vmatpush1.msra.mxu0 %v1441
        %2130 = vmatprep.subr.mxu0 0.0
        %2131 = vmatpush1.msra.mxu0 %v1442
        %2132 = vmatprep.subr.mxu0 0.0
        %2133 = vmatpush1.msra.mxu0 %v1443
        %2134 = vmatprep.subr.mxu0 0.0
        %2135 = vmatpush1.msra.mxu0 %v1444
        %2136 = vmatprep.subr.mxu0 0.0
        %2137 = vmatpush1.msra.mxu0 %v1445
        %2138 = vmatprep.subr.mxu0 0.0
        %2139 = vmatpush1.msra.mxu0 %v1446
        %2140 = vmatprep.subr.mxu0 0.0
        %2141 = vmatpush1.msra.mxu0 %v1447
        %2142 = vmatprep.subr.mxu0 0.0
        %2143 = vmatpush1.msra.mxu0 %v1448
        %2144 = vmatprep.subr.mxu0 0.0
        %2145 = vmatpush1.msra.mxu0 %v1449
        %2146 = vmatprep.mubr.f32.mxu0 %v237
        %2147 = vmatmul.mubr.f32.gmra.mrb[0].mxu0 %v236
        %v2148 = vpop.f32.mrb[0].mxu0
        %v2149 = vadd.f32 %v1844, %v2148
        %v2150 = vpop.f32.mrb[0].mxu0
        %2151 = vmatprep.mubr.f32.mxu0 %v261
        %2152 = vmatmul.mubr.f32.gmra.mrb[0].mxu0 %v260
        %v2153 = vpop.f32.mrb[0].mxu0
        %v2154 = vadd.f32 %v1849, %v2153
        %v2155 = vpop.f32.mrb[0].mxu0
        %2156 = vmatprep.mubr.f32.mxu0 %v285
        %2157 = vmatmul.mubr.f32.gmra.mrb[0].mxu0 %v284
        %v2158 = vpop.f32.mrb[0].mxu0
        %v2159 = vadd.f32 %v1854, %v2158
        %v2160 = vpop.f32.mrb[0].mxu0
        %2161 = vmatprep.mubr.f32.mxu0 %v309
        %2162 = vmatmul.mubr.f32.gmra.mrb[0].mxu0 %v308
        %v2163 = vpop.f32.mrb[0].mxu0
        %v2164 = vadd.f32 %v1859, %v2163
        %v2165 = vpop.f32.mrb[0].mxu0
        %2166 = vmatprep.mubr.f32.mxu0 %v333
        %2167 = vmatmul.mubr.f32.gmra.mrb[0].mxu0 %v332
        %v2168 = vpop.f32.mrb[0].mxu0
        %v2169 = vadd.f32 %v1864, %v2168
        %v2170 = vpop.f32.mrb[0].mxu0
        %2171 = vmatprep.mubr.f32.mxu0 %v357
        %2172 = vmatmul.mubr.f32.gmra.mrb[0].mxu0 %v356
        %v2173 = vpop.f32.mrb[0].mxu0
        %v2174 = vadd.f32 %v1869, %v2173
        %v2175 = vpop.f32.mrb[0].mxu0
        %2176 = vmatprep.mubr.f32.mxu0 %v381
        %2177 = vmatmul.mubr.f32.gmra.mrb[0].mxu0 %v380
        %v2178 = vpop.f32.mrb[0].mxu0
        %v2179 = vadd.f32 %v1874, %v2178
        %v2180 = vpop.f32.mrb[0].mxu0
        %2181 = vmatprep.mubr.f32.mxu0 %v405
        %2182 = vmatmul.mubr.f32.gmra.mrb[0].mxu0 %v404
        %v2183 = vpop.f32.mrb[0].mxu0
        %v2184 = vadd.f32 %v1879, %v2183
        %v2185 = vpop.f32.mrb[0].mxu0
        %2186 = vmatprep.mubr.f32.mxu0 %v429
        %2187 = vmatmul.mubr.f32.gmra.mrb[0].mxu0 %v428
        %v2188 = vpop.f32.mrb[0].mxu0
        %v2189 = vadd.f32 %v1884, %v2188
        %v2190 = vpop.f32.mrb[0].mxu0
        %2191 = vmatprep.mubr.f32.mxu0 %v453
        %2192 = vmatmul.mubr.f32.gmra.mrb[0].mxu0 %v452
        %v2193 = vpop.f32.mrb[0].mxu0
        %v2194 = vadd.f32 %v1889, %v2193
        %v2195 = vpop.f32.mrb[0].mxu0
        %2196 = vmatprep.mubr.f32.mxu0 %v477
        %2197 = vmatmul.mubr.f32.gmra.mrb[0].mxu0 %v476
        %v2198 = vpop.f32.mrb[0].mxu0
        %v2199 = vadd.f32 %v1894, %v2198
        %v2200 = vpop.f32.mrb[0].mxu0
        %2201 = vmatprep.mubr.f32.mxu0 %v501
        %2202 = vmatmul.mubr.f32.gmra.mrb[0].mxu0 %v500
        %v2203 = vpop.f32.mrb[0].mxu0
        %v2204 = vadd.f32 %v1899, %v2203
        %v2205 = vpop.f32.mrb[0].mxu0
        %2206 = vmatprep.mubr.f32.mxu0 %v525
        %2207 = vmatmul.mubr.f32.gmra.mrb[0].mxu0 %v524
        %v2208 = vpop.f32.mrb[0].mxu0
        %v2209 = vadd.f32 %v1904, %v2208
        %v2210 = vpop.f32.mrb[0].mxu0
        %2211 = vmatprep.mubr.f32.mxu0 %v549
        %2212 = vmatmul.mubr.f32.gmra.mrb[0].mxu0 %v548
        %v2213 = vpop.f32.mrb[0].mxu0
        %v2214 = vadd.f32 %v1909, %v2213
        %v2215 = vpop.f32.mrb[0].mxu0
        %2216 = vmatprep.mubr.f32.mxu0 %v573
        %2217 = vmatmul.mubr.f32.gmra.mrb[0].mxu0 %v572
        %v2218 = vpop.f32.mrb[0].mxu0
        %v2219 = vadd.f32 %v1914, %v2218
        %v2220 = vpop.f32.mrb[0].mxu0
        %2221 = vmatprep.mubr.f32.mxu0 %v597
        %2222 = vmatmul.mubr.f32.gmra.mrb[0].mxu0 %v596
        %v2223 = vpop.f32.mrb[0].mxu0
        %v2224 = vadd.f32 %v1919, %v2223
        %v2225 = vpop.f32.mrb[0].mxu0
        %2226 = vmatprep.mubr.f32.mxu0 %v621
        %2227 = vmatmul.mubr.f32.gmra.mrb[0].mxu0 %v620
        %v2228 = vpop.f32.mrb[0].mxu0
        %v2229 = vadd.f32 %v1924, %v2228
        %v2230 = vpop.f32.mrb[0].mxu0
        %2231 = vmatprep.mubr.f32.mxu0 %v645
        %2232 = vmatmul.mubr.f32.gmra.mrb[0].mxu0 %v644
        %v2233 = vpop.f32.mrb[0].mxu0
        %v2234 = vadd.f32 %v1929, %v2233
        %v2235 = vpop.f32.mrb[0].mxu0
        %2236 = vmatprep.mubr.f32.mxu0 %v669
        %2237 = vmatmul.mubr.f32.gmra.mrb[0].mxu0 %v668
        %v2238 = vpop.f32.mrb[0].mxu0
        %v2239 = vadd.f32 %v1934, %v2238
        %v2240 = vpop.f32.mrb[0].mxu0
        %2241 = vmatprep.mubr.f32.mxu0 %v693
        %2242 = vmatmul.mubr.f32.gmra.mrb[0].mxu0 %v692
        %v2243 = vpop.f32.mrb[0].mxu0
        %v2244 = vadd.f32 %v1939, %v2243
        %v2245 = vpop.f32.mrb[0].mxu0
        %2246 = vmatprep.mubr.f32.mxu0 %v717
        %2247 = vmatmul.mubr.f32.gmra.mrb[0].mxu0 %v716
        %v2248 = vpop.f32.mrb[0].mxu0
        %v2249 = vadd.f32 %v1944, %v2248
        %v2250 = vpop.f32.mrb[0].mxu0
        %2251 = vmatprep.mubr.f32.mxu0 %v741
        %2252 = vmatmul.mubr.f32.gmra.mrb[0].mxu0 %v740
        %v2253 = vpop.f32.mrb[0].mxu0
        %v2254 = vadd.f32 %v1949, %v2253
        %v2255 = vpop.f32.mrb[0].mxu0
        %2256 = vmatprep.mubr.f32.mxu0 %v765
        %2257 = vmatmul.mubr.f32.gmra.mrb[0].mxu0 %v764
        %v2258 = vpop.f32.mrb[0].mxu0
        %v2259 = vadd.f32 %v1954, %v2258
        %v2260 = vpop.f32.mrb[0].mxu0
        %2261 = vmatprep.mubr.f32.mxu0 %v789
        %2262 = vmatmul.mubr.f32.gmra.mrb[0].mxu0 %v788
        %v2263 = vpop.f32.mrb[0].mxu0
        %v2264 = vadd.f32 %v1959, %v2263
        %v2265 = vpop.f32.mrb[0].mxu0
        %2266 = vmatprep.mubr.f32.mxu0 %v813
        %2267 = vmatmul.mubr.f32.gmra.mrb[0].mxu0 %v812
        %v2268 = vpop.f32.mrb[0].mxu0
        %v2269 = vadd.f32 %v1964, %v2268
        %v2270 = vpop.f32.mrb[0].mxu0
        %2271 = vmatprep.mubr.f32.mxu0 %v837
        %2272 = vmatmul.mubr.f32.gmra.mrb[0].mxu0 %v836
        %v2273 = vpop.f32.mrb[0].mxu0
        %v2274 = vadd.f32 %v1969, %v2273
        %v2275 = vpop.f32.mrb[0].mxu0
        %2276 = vmatprep.mubr.f32.mxu0 %v861
        %2277 = vmatmul.mubr.f32.gmra.mrb[0].mxu0 %v860
        %v2278 = vpop.f32.mrb[0].mxu0
        %v2279 = vadd.f32 %v1974, %v2278
        %v2280 = vpop.f32.mrb[0].mxu0
        %2281 = vmatprep.mubr.f32.mxu0 %v885
        %2282 = vmatmul.mubr.f32.gmra.mrb[0].mxu0 %v884
        %v2283 = vpop.f32.mrb[0].mxu0
        %v2284 = vadd.f32 %v1979, %v2283
        %v2285 = vpop.f32.mrb[0].mxu0
        %2286 = vmatprep.mubr.f32.mxu0 %v909
        %2287 = vmatmul.mubr.f32.gmra.mrb[0].mxu0 %v908
        %v2288 = vpop.f32.mrb[0].mxu0
        %v2289 = vadd.f32 %v1984, %v2288
        %v2290 = vpop.f32.mrb[0].mxu0
        %2291 = vmatprep.mubr.f32.mxu0 %v933
        %2292 = vmatmul.mubr.f32.gmra.mrb[0].mxu0 %v932
        %v2293 = vpop.f32.mrb[0].mxu0
        %v2294 = vadd.f32 %v1989, %v2293
        %v2295 = vpop.f32.mrb[0].mxu0
        %2296 = vmatprep.mubr.f32.mxu0 %v957
        %2297 = vmatmul.mubr.f32.gmra.mrb[0].mxu0 %v956
        %v2298 = vpop.f32.mrb[0].mxu0
        %v2299 = vadd.f32 %v1994, %v2298
        %v2300 = vpop.f32.mrb[0].mxu0
        %2301 = vmatprep.mubr.f32.mxu0 %v981
        %2302 = vmatmul.mubr.f32.gmra.mrb[0].mxu0 %v980
        %v2303 = vpop.f32.mrb[0].mxu0
        %v2304 = vadd.f32 %v1999, %v2303
        %v2305 = vpop.f32.mrb[0].mxu0
        %2306 = vmatprep.mubr.f32.mxu0 %v1005
        %2307 = vmatmul.mubr.f32.gmra.mrb[0].mxu0 %v1004
        %v2308 = vpop.f32.mrb[0].mxu0
        %v2309 = vadd.f32 %v2004, %v2308
        %v2310 = vpop.f32.mrb[0].mxu0
        %2311 = vmatprep.mubr.f32.mxu0 %v1029
        %2312 = vmatmul.mubr.f32.gmra.mrb[0].mxu0 %v1028
        %v2313 = vpop.f32.mrb[0].mxu0
        %v2314 = vadd.f32 %v2009, %v2313
        %v2315 = vpop.f32.mrb[0].mxu0
        %2316 = vmatprep.mubr.f32.mxu0 %v1053
        %2317 = vmatmul.mubr.f32.gmra.mrb[0].mxu0 %v1052
        %v2318 = vpop.f32.mrb[0].mxu0
        %v2319 = vadd.f32 %v2014, %v2318
        %v2320 = vpop.f32.mrb[0].mxu0
        %2321 = vmatprep.mubr.f32.mxu0 %v1077
        %2322 = vmatmul.mubr.f32.gmra.mrb[0].mxu0 %v1076
        %v2323 = vpop.f32.mrb[0].mxu0
        %v2324 = vadd.f32 %v2019, %v2323
        %v2325 = vpop.f32.mrb[0].mxu0
        %2326 = vmatprep.mubr.f32.mxu0 %v1101
        %2327 = vmatmul.mubr.f32.gmra.mrb[0].mxu0 %v1100
        %v2328 = vpop.f32.mrb[0].mxu0
        %v2329 = vadd.f32 %v2024, %v2328
        %v2330 = vpop.f32.mrb[0].mxu0
        %2331 = vmatprep.mubr.f32.mxu0 %v1125
        %2332 = vmatmul.mubr.f32.gmra.mrb[0].mxu0 %v1124
        %v2333 = vpop.f32.mrb[0].mxu0
        %v2334 = vadd.f32 %v2029, %v2333
        %v2335 = vpop.f32.mrb[0].mxu0
        %2336 = vmatprep.mubr.f32.mxu0 %v1149
        %2337 = vmatmul.mubr.f32.gmra.mrb[0].mxu0 %v1148
        %v2338 = vpop.f32.mrb[0].mxu0
        %v2339 = vadd.f32 %v2034, %v2338
        %v2340 = vpop.f32.mrb[0].mxu0
        %2341 = vmatprep.mubr.f32.mxu0 %v1173
        %2342 = vmatmul.mubr.f32.gmra.mrb[0].mxu0 %v1172
        %v2343 = vpop.f32.mrb[0].mxu0
        %v2344 = vadd.f32 %v2039, %v2343
        %v2345 = vpop.f32.mrb[0].mxu0
        %2346 = vmatprep.mubr.f32.mxu0 %v1197
        %2347 = vmatmul.mubr.f32.gmra.mrb[0].mxu0 %v1196
        %v2348 = vpop.f32.mrb[0].mxu0
        %v2349 = vadd.f32 %v2044, %v2348
        %v2350 = vpop.f32.mrb[0].mxu0
        %2351 = vmatprep.mubr.f32.mxu0 %v1221
        %2352 = vmatmul.mubr.f32.gmra.mrb[0].mxu0 %v1220
        %v2353 = vpop.f32.mrb[0].mxu0
        %v2354 = vadd.f32 %v2049, %v2353
        %v2355 = vpop.f32.mrb[0].mxu0
        %2356 = vmatprep.mubr.f32.mxu0 %v1245
        %2357 = vmatmul.mubr.f32.gmra.mrb[0].mxu0 %v1244
        %v2358 = vpop.f32.mrb[0].mxu0
        %v2359 = vadd.f32 %v2054, %v2358
        %v2360 = vpop.f32.mrb[0].mxu0
        %2361 = vmatprep.mubr.f32.mxu0 %v1269
        %2362 = vmatmul.mubr.f32.gmra.mrb[0].mxu0 %v1268
        %v2363 = vpop.f32.mrb[0].mxu0
        %v2364 = vadd.f32 %v2059, %v2363
        %v2365 = vpop.f32.mrb[0].mxu0
        %2366 = vmatprep.mubr.f32.mxu0 %v1293
        %2367 = vmatmul.mubr.f32.gmra.mrb[0].mxu0 %v1292
        %v2368 = vpop.f32.mrb[0].mxu0
        %v2369 = vadd.f32 %v2064, %v2368
        %v2370 = vpop.f32.mrb[0].mxu0
        %2371 = vmatprep.mubr.f32.mxu0 %v1317
        %2372 = vmatmul.mubr.f32.gmra.mrb[0].mxu0 %v1316
        %v2373 = vpop.f32.mrb[0].mxu0
        %v2374 = vadd.f32 %v2069, %v2373
        %v2375 = vpop.f32.mrb[0].mxu0
        %2376 = vmatprep.mubr.f32.mxu0 %v1341
        %2377 = vmatmul.mubr.f32.gmra.mrb[0].mxu0 %v1340
        %v2378 = vpop.f32.mrb[0].mxu0
        %v2379 = vadd.f32 %v2074, %v2378
        %v2380 = vpop.f32.mrb[0].mxu0
        %2381 = vmatprep.mubr.f32.mxu0 %v1365
        %2382 = vmatmul.mubr.f32.gmra.mrb[0].mxu0 %v1364
        %v2383 = vpop.f32.mrb[0].mxu0
        %v2384 = vadd.f32 %v2079, %v2383
        %v2385 = vpop.f32.mrb[0].mxu0
        %2386 = vdwg.mxu0
        %2387 = vmatprep.subr.mxu0 0.0
        %2388 = vmatpush1.msra.mxu0 %v1450
        %2389 = vmatprep.subr.mxu0 0.0
        %2390 = vmatpush1.msra.mxu0 %v1451
        %2391 = vmatprep.subr.mxu0 0.0
        %2392 = vmatpush1.msra.mxu0 %v1452
        %2393 = vmatprep.subr.mxu0 0.0
        %2394 = vmatpush1.msra.mxu0 %v1453
        %2395 = vmatprep.subr.mxu0 0.0
        %2396 = vmatpush1.msra.mxu0 %v1454
        %2397 = vmatprep.subr.mxu0 0.0
        %2398 = vmatpush1.msra.mxu0 %v1455
        %2399 = vmatprep.subr.mxu0 0.0
        %2400 = vmatpush1.msra.mxu0 %v1456
        %2401 = vmatprep.subr.mxu0 0.0
        %2402 = vmatpush1.msra.mxu0 %v1457
        %2403 = vmatprep.subr.mxu0 0.0
        %2404 = vmatpush1.msra.mxu0 %v1458
        %2405 = vmatprep.subr.mxu0 0.0
        %2406 = vmatpush1.msra.mxu0 %v1459
        %2407 = vmatprep.subr.mxu0 0.0
        %2408 = vmatpush1.msra.mxu0 %v1460
        %2409 = vmatprep.subr.mxu0 0.0
        %2410 = vmatpush1.msra.mxu0 %v1461
        %2411 = vmatprep.subr.mxu0 0.0
        %2412 = vmatpush1.msra.mxu0 %v1462
        %2413 = vmatprep.subr.mxu0 0.0
        %2414 = vmatpush1.msra.mxu0 %v1463
        %2415 = vmatprep.subr.mxu0 0.0
        %2416 = vmatpush1.msra.mxu0 %v1464
        %2417 = vmatprep.subr.mxu0 0.0
        %2418 = vmatpush1.msra.mxu0 %v1465
        %2419 = vmatprep.subr.mxu0 0.0
        %2420 = vmatpush1.msra.mxu0 %v1466
        %2421 = vmatprep.subr.mxu0 0.0
        %2422 = vmatpush1.msra.mxu0 %v1467
        %2423 = vmatprep.subr.mxu0 0.0
        %2424 = vmatpush1.msra.mxu0 %v1468
        %2425 = vmatprep.subr.mxu0 0.0
        %2426 = vmatpush1.msra.mxu0 %v1469
        %2427 = vmatprep.subr.mxu0 0.0
        %2428 = vmatpush1.msra.mxu0 %v1470
        %2429 = vmatprep.subr.mxu0 0.0
        %2430 = vmatpush1.msra.mxu0 %v1471
        %2431 = vmatprep.subr.mxu0 0.0
        %2432 = vmatpush1.msra.mxu0 %v1472
        %2433 = vmatprep.subr.mxu0 0.0
        %2434 = vmatpush1.msra.mxu0 %v1473
        %2435 = vmatprep.subr.mxu0 0.0
        %2436 = vmatpush1.msra.mxu0 %v1474
        %2437 = vmatprep.subr.mxu0 0.0
        %2438 = vmatpush1.msra.mxu0 %v1475
        %2439 = vmatprep.subr.mxu0 0.0
        %2440 = vmatpush1.msra.mxu0 %v1476
        %2441 = vmatprep.subr.mxu0 0.0
        %2442 = vmatpush1.msra.mxu0 %v1477
        %2443 = vmatprep.subr.mxu0 0.0
        %2444 = vmatpush1.msra.mxu0 %v1478
        %2445 = vmatprep.subr.mxu0 0.0
        %2446 = vmatpush1.msra.mxu0 %v1479
        %2447 = vmatprep.subr.mxu0 0.0
        %2448 = vmatpush1.msra.mxu0 %v1480
        %2449 = vmatprep.subr.mxu0 0.0
        %2450 = vmatpush1.msra.mxu0 %v1481
        %2451 = vmatprep.mubr.f32.mxu0 %v239
        %2452 = vmatmul.mubr.f32.gmra.mrb[0].mxu0 %v238
        %v2453 = vpop.f32.mrb[0].mxu0
        %v2454 = vadd.f32 %v2149, %v2453
        %v2455 = vpop.f32.mrb[0].mxu0
        %2456 = vmatprep.mubr.f32.mxu0 %v263
        %2457 = vmatmul.mubr.f32.gmra.mrb[0].mxu0 %v262
        %v2458 = vpop.f32.mrb[0].mxu0
        %v2459 = vadd.f32 %v2154, %v2458
        %v2460 = vpop.f32.mrb[0].mxu0
        %2461 = vmatprep.mubr.f32.mxu0 %v287
        %2462 = vmatmul.mubr.f32.gmra.mrb[0].mxu0 %v286
        %v2463 = vpop.f32.mrb[0].mxu0
        %v2464 = vadd.f32 %v2159, %v2463
        %v2465 = vpop.f32.mrb[0].mxu0
        %2466 = vmatprep.mubr.f32.mxu0 %v311
        %2467 = vmatmul.mubr.f32.gmra.mrb[0].mxu0 %v310
        %v2468 = vpop.f32.mrb[0].mxu0
        %v2469 = vadd.f32 %v2164, %v2468
        %v2470 = vpop.f32.mrb[0].mxu0
        %2471 = vmatprep.mubr.f32.mxu0 %v335
        %2472 = vmatmul.mubr.f32.gmra.mrb[0].mxu0 %v334
        %v2473 = vpop.f32.mrb[0].mxu0
        %v2474 = vadd.f32 %v2169, %v2473
        %v2475 = vpop.f32.mrb[0].mxu0
        %2476 = vmatprep.mubr.f32.mxu0 %v359
        %2477 = vmatmul.mubr.f32.gmra.mrb[0].mxu0 %v358
        %v2478 = vpop.f32.mrb[0].mxu0
        %v2479 = vadd.f32 %v2174, %v2478
        %v2480 = vpop.f32.mrb[0].mxu0
        %2481 = vmatprep.mubr.f32.mxu0 %v383
        %2482 = vmatmul.mubr.f32.gmra.mrb[0].mxu0 %v382
        %v2483 = vpop.f32.mrb[0].mxu0
        %v2484 = vadd.f32 %v2179, %v2483
        %v2485 = vpop.f32.mrb[0].mxu0
        %2486 = vmatprep.mubr.f32.mxu0 %v407
        %2487 = vmatmul.mubr.f32.gmra.mrb[0].mxu0 %v406
        %v2488 = vpop.f32.mrb[0].mxu0
        %v2489 = vadd.f32 %v2184, %v2488
        %v2490 = vpop.f32.mrb[0].mxu0
        %2491 = vmatprep.mubr.f32.mxu0 %v431
        %2492 = vmatmul.mubr.f32.gmra.mrb[0].mxu0 %v430
        %v2493 = vpop.f32.mrb[0].mxu0
        %v2494 = vadd.f32 %v2189, %v2493
        %v2495 = vpop.f32.mrb[0].mxu0
        %2496 = vmatprep.mubr.f32.mxu0 %v455
        %2497 = vmatmul.mubr.f32.gmra.mrb[0].mxu0 %v454
        %v2498 = vpop.f32.mrb[0].mxu0
        %v2499 = vadd.f32 %v2194, %v2498
        %v2500 = vpop.f32.mrb[0].mxu0
        %2501 = vmatprep.mubr.f32.mxu0 %v479
        %2502 = vmatmul.mubr.f32.gmra.mrb[0].mxu0 %v478
        %v2503 = vpop.f32.mrb[0].mxu0
        %v2504 = vadd.f32 %v2199, %v2503
        %v2505 = vpop.f32.mrb[0].mxu0
        %2506 = vmatprep.mubr.f32.mxu0 %v503
        %2507 = vmatmul.mubr.f32.gmra.mrb[0].mxu0 %v502
        %v2508 = vpop.f32.mrb[0].mxu0
        %v2509 = vadd.f32 %v2204, %v2508
        %v2510 = vpop.f32.mrb[0].mxu0
        %2511 = vmatprep.mubr.f32.mxu0 %v527
        %2512 = vmatmul.mubr.f32.gmra.mrb[0].mxu0 %v526
        %v2513 = vpop.f32.mrb[0].mxu0
        %v2514 = vadd.f32 %v2209, %v2513
        %v2515 = vpop.f32.mrb[0].mxu0
        %2516 = vmatprep.mubr.f32.mxu0 %v551
        %2517 = vmatmul.mubr.f32.gmra.mrb[0].mxu0 %v550
        %v2518 = vpop.f32.mrb[0].mxu0
        %v2519 = vadd.f32 %v2214, %v2518
        %v2520 = vpop.f32.mrb[0].mxu0
        %2521 = vmatprep.mubr.f32.mxu0 %v575
        %2522 = vmatmul.mubr.f32.gmra.mrb[0].mxu0 %v574
        %v2523 = vpop.f32.mrb[0].mxu0
        %v2524 = vadd.f32 %v2219, %v2523
        %v2525 = vpop.f32.mrb[0].mxu0
        %2526 = vmatprep.mubr.f32.mxu0 %v599
        %2527 = vmatmul.mubr.f32.gmra.mrb[0].mxu0 %v598
        %v2528 = vpop.f32.mrb[0].mxu0
        %v2529 = vadd.f32 %v2224, %v2528
        %v2530 = vpop.f32.mrb[0].mxu0
        %2531 = vmatprep.mubr.f32.mxu0 %v623
        %2532 = vmatmul.mubr.f32.gmra.mrb[0].mxu0 %v622
        %v2533 = vpop.f32.mrb[0].mxu0
        %v2534 = vadd.f32 %v2229, %v2533
        %v2535 = vpop.f32.mrb[0].mxu0
        %2536 = vmatprep.mubr.f32.mxu0 %v647
        %2537 = vmatmul.mubr.f32.gmra.mrb[0].mxu0 %v646
        %v2538 = vpop.f32.mrb[0].mxu0
        %v2539 = vadd.f32 %v2234, %v2538
        %v2540 = vpop.f32.mrb[0].mxu0
        %2541 = vmatprep.mubr.f32.mxu0 %v671
        %2542 = vmatmul.mubr.f32.gmra.mrb[0].mxu0 %v670
        %v2543 = vpop.f32.mrb[0].mxu0
        %v2544 = vadd.f32 %v2239, %v2543
        %v2545 = vpop.f32.mrb[0].mxu0
        %2546 = vmatprep.mubr.f32.mxu0 %v695
        %2547 = vmatmul.mubr.f32.gmra.mrb[0].mxu0 %v694
        %v2548 = vpop.f32.mrb[0].mxu0
        %v2549 = vadd.f32 %v2244, %v2548
        %v2550 = vpop.f32.mrb[0].mxu0
        %2551 = vmatprep.mubr.f32.mxu0 %v719
        %2552 = vmatmul.mubr.f32.gmra.mrb[0].mxu0 %v718
        %v2553 = vpop.f32.mrb[0].mxu0
        %v2554 = vadd.f32 %v2249, %v2553
        %v2555 = vpop.f32.mrb[0].mxu0
        %2556 = vmatprep.mubr.f32.mxu0 %v743
        %2557 = vmatmul.mubr.f32.gmra.mrb[0].mxu0 %v742
        %v2558 = vpop.f32.mrb[0].mxu0
        %v2559 = vadd.f32 %v2254, %v2558
        %v2560 = vpop.f32.mrb[0].mxu0
        %2561 = vmatprep.mubr.f32.mxu0 %v767
        %2562 = vmatmul.mubr.f32.gmra.mrb[0].mxu0 %v766
        %v2563 = vpop.f32.mrb[0].mxu0
        %v2564 = vadd.f32 %v2259, %v2563
        %v2565 = vpop.f32.mrb[0].mxu0
        %2566 = vmatprep.mubr.f32.mxu0 %v791
        %2567 = vmatmul.mubr.f32.gmra.mrb[0].mxu0 %v790
        %v2568 = vpop.f32.mrb[0].mxu0
        %v2569 = vadd.f32 %v2264, %v2568
        %v2570 = vpop.f32.mrb[0].mxu0
        %2571 = vmatprep.mubr.f32.mxu0 %v815
        %2572 = vmatmul.mubr.f32.gmra.mrb[0].mxu0 %v814
        %v2573 = vpop.f32.mrb[0].mxu0
        %v2574 = vadd.f32 %v2269, %v2573
        %v2575 = vpop.f32.mrb[0].mxu0
        %2576 = vmatprep.mubr.f32.mxu0 %v839
        %2577 = vmatmul.mubr.f32.gmra.mrb[0].mxu0 %v838
        %v2578 = vpop.f32.mrb[0].mxu0
        %v2579 = vadd.f32 %v2274, %v2578
        %v2580 = vpop.f32.mrb[0].mxu0
        %2581 = vmatprep.mubr.f32.mxu0 %v863
        %2582 = vmatmul.mubr.f32.gmra.mrb[0].mxu0 %v862
        %v2583 = vpop.f32.mrb[0].mxu0
        %v2584 = vadd.f32 %v2279, %v2583
        %v2585 = vpop.f32.mrb[0].mxu0
        %2586 = vmatprep.mubr.f32.mxu0 %v887
        %2587 = vmatmul.mubr.f32.gmra.mrb[0].mxu0 %v886
        %v2588 = vpop.f32.mrb[0].mxu0
        %v2589 = vadd.f32 %v2284, %v2588
        %v2590 = vpop.f32.mrb[0].mxu0
        %2591 = vmatprep.mubr.f32.mxu0 %v911
        %2592 = vmatmul.mubr.f32.gmra.mrb[0].mxu0 %v910
        %v2593 = vpop.f32.mrb[0].mxu0
        %v2594 = vadd.f32 %v2289, %v2593
        %v2595 = vpop.f32.mrb[0].mxu0
        %2596 = vmatprep.mubr.f32.mxu0 %v935
        %2597 = vmatmul.mubr.f32.gmra.mrb[0].mxu0 %v934
        %v2598 = vpop.f32.mrb[0].mxu0
        %v2599 = vadd.f32 %v2294, %v2598
        %v2600 = vpop.f32.mrb[0].mxu0
        %2601 = vmatprep.mubr.f32.mxu0 %v959
        %2602 = vmatmul.mubr.f32.gmra.mrb[0].mxu0 %v958
        %v2603 = vpop.f32.mrb[0].mxu0
        %v2604 = vadd.f32 %v2299, %v2603
        %v2605 = vpop.f32.mrb[0].mxu0
        %2606 = vmatprep.mubr.f32.mxu0 %v983
        %2607 = vmatmul.mubr.f32.gmra.mrb[0].mxu0 %v982
        %v2608 = vpop.f32.mrb[0].mxu0
        %v2609 = vadd.f32 %v2304, %v2608
        %v2610 = vpop.f32.mrb[0].mxu0
        %2611 = vmatprep.mubr.f32.mxu0 %v1007
        %2612 = vmatmul.mubr.f32.gmra.mrb[0].mxu0 %v1006
        %v2613 = vpop.f32.mrb[0].mxu0
        %v2614 = vadd.f32 %v2309, %v2613
        %v2615 = vpop.f32.mrb[0].mxu0
        %2616 = vmatprep.mubr.f32.mxu0 %v1031
        %2617 = vmatmul.mubr.f32.gmra.mrb[0].mxu0 %v1030
        %v2618 = vpop.f32.mrb[0].mxu0
        %v2619 = vadd.f32 %v2314, %v2618
        %v2620 = vpop.f32.mrb[0].mxu0
        %2621 = vmatprep.mubr.f32.mxu0 %v1055
        %2622 = vmatmul.mubr.f32.gmra.mrb[0].mxu0 %v1054
        %v2623 = vpop.f32.mrb[0].mxu0
        %v2624 = vadd.f32 %v2319, %v2623
        %v2625 = vpop.f32.mrb[0].mxu0
        %2626 = vmatprep.mubr.f32.mxu0 %v1079
        %2627 = vmatmul.mubr.f32.gmra.mrb[0].mxu0 %v1078
        %v2628 = vpop.f32.mrb[0].mxu0
        %v2629 = vadd.f32 %v2324, %v2628
        %v2630 = vpop.f32.mrb[0].mxu0
        %2631 = vmatprep.mubr.f32.mxu0 %v1103
        %2632 = vmatmul.mubr.f32.gmra.mrb[0].mxu0 %v1102
        %v2633 = vpop.f32.mrb[0].mxu0
        %v2634 = vadd.f32 %v2329, %v2633
        %v2635 = vpop.f32.mrb[0].mxu0
        %2636 = vmatprep.mubr.f32.mxu0 %v1127
        %2637 = vmatmul.mubr.f32.gmra.mrb[0].mxu0 %v1126
        %v2638 = vpop.f32.mrb[0].mxu0
        %v2639 = vadd.f32 %v2334, %v2638
        %v2640 = vpop.f32.mrb[0].mxu0
        %2641 = vmatprep.mubr.f32.mxu0 %v1151
        %2642 = vmatmul.mubr.f32.gmra.mrb[0].mxu0 %v1150
        %v2643 = vpop.f32.mrb[0].mxu0
        %v2644 = vadd.f32 %v2339, %v2643
        %v2645 = vpop.f32.mrb[0].mxu0
        %2646 = vmatprep.mubr.f32.mxu0 %v1175
        %2647 = vmatmul.mubr.f32.gmra.mrb[0].mxu0 %v1174
        %v2648 = vpop.f32.mrb[0].mxu0
        %v2649 = vadd.f32 %v2344, %v2648
        %v2650 = vpop.f32.mrb[0].mxu0
        %2651 = vmatprep.mubr.f32.mxu0 %v1199
        %2652 = vmatmul.mubr.f32.gmra.mrb[0].mxu0 %v1198
        %v2653 = vpop.f32.mrb[0].mxu0
        %v2654 = vadd.f32 %v2349, %v2653
        %v2655 = vpop.f32.mrb[0].mxu0
        %2656 = vmatprep.mubr.f32.mxu0 %v1223
        %2657 = vmatmul.mubr.f32.gmra.mrb[0].mxu0 %v1222
        %v2658 = vpop.f32.mrb[0].mxu0
        %v2659 = vadd.f32 %v2354, %v2658
        %v2660 = vpop.f32.mrb[0].mxu0
        %2661 = vmatprep.mubr.f32.mxu0 %v1247
        %2662 = vmatmul.mubr.f32.gmra.mrb[0].mxu0 %v1246
        %v2663 = vpop.f32.mrb[0].mxu0
        %v2664 = vadd.f32 %v2359, %v2663
        %v2665 = vpop.f32.mrb[0].mxu0
        %2666 = vmatprep.mubr.f32.mxu0 %v1271
        %2667 = vmatmul.mubr.f32.gmra.mrb[0].mxu0 %v1270
        %v2668 = vpop.f32.mrb[0].mxu0
        %v2669 = vadd.f32 %v2364, %v2668
        %v2670 = vpop.f32.mrb[0].mxu0
        %2671 = vmatprep.mubr.f32.mxu0 %v1295
        %2672 = vmatmul.mubr.f32.gmra.mrb[0].mxu0 %v1294
        %v2673 = vpop.f32.mrb[0].mxu0
        %v2674 = vadd.f32 %v2369, %v2673
        %v2675 = vpop.f32.mrb[0].mxu0
        %2676 = vmatprep.mubr.f32.mxu0 %v1319
        %2677 = vmatmul.mubr.f32.gmra.mrb[0].mxu0 %v1318
        %v2678 = vpop.f32.mrb[0].mxu0
        %v2679 = vadd.f32 %v2374, %v2678
        %v2680 = vpop.f32.mrb[0].mxu0
        %2681 = vmatprep.mubr.f32.mxu0 %v1343
        %2682 = vmatmul.mubr.f32.gmra.mrb[0].mxu0 %v1342
        %v2683 = vpop.f32.mrb[0].mxu0
        %v2684 = vadd.f32 %v2379, %v2683
        %v2685 = vpop.f32.mrb[0].mxu0
        %2686 = vmatprep.mubr.f32.mxu0 %v1367
        %2687 = vmatmul.mubr.f32.gmra.mrb[0].mxu0 %v1366
        %v2688 = vpop.f32.mrb[0].mxu0
        %v2689 = vadd.f32 %v2384, %v2688
        %v2690 = vpop.f32.mrb[0].mxu0
        %2691 = vdwg.mxu0
        %2692 = vmatprep.subr.mxu0 0.0
        %2693 = vmatpush1.msra.mxu0 %v1482
        %2694 = vmatprep.subr.mxu0 0.0
        %2695 = vmatpush1.msra.mxu0 %v1483
        %2696 = vmatprep.subr.mxu0 0.0
        %2697 = vmatpush1.msra.mxu0 %v1484
        %2698 = vmatprep.subr.mxu0 0.0
        %2699 = vmatpush1.msra.mxu0 %v1485
        %2700 = vmatprep.subr.mxu0 0.0
        %2701 = vmatpush1.msra.mxu0 %v1486
        %2702 = vmatprep.subr.mxu0 0.0
        %2703 = vmatpush1.msra.mxu0 %v1487
        %2704 = vmatprep.subr.mxu0 0.0
        %2705 = vmatpush1.msra.mxu0 %v1488
        %2706 = vmatprep.subr.mxu0 0.0
        %2707 = vmatpush1.msra.mxu0 %v1489
        %2708 = vmatprep.subr.mxu0 0.0
        %2709 = vmatpush1.msra.mxu0 %v1490
        %2710 = vmatprep.subr.mxu0 0.0
        %2711 = vmatpush1.msra.mxu0 %v1491
        %2712 = vmatprep.subr.mxu0 0.0
        %2713 = vmatpush1.msra.mxu0 %v1492
        %2714 = vmatprep.subr.mxu0 0.0
        %2715 = vmatpush1.msra.mxu0 %v1493
        %2716 = vmatprep.subr.mxu0 0.0
        %2717 = vmatpush1.msra.mxu0 %v1494
        %2718 = vmatprep.subr.mxu0 0.0
        %2719 = vmatpush1.msra.mxu0 %v1495
        %2720 = vmatprep.subr.mxu0 0.0
        %2721 = vmatpush1.msra.mxu0 %v1496
        %2722 = vmatprep.subr.mxu0 0.0
        %2723 = vmatpush1.msra.mxu0 %v1497
        %2724 = vmatprep.subr.mxu0 0.0
        %2725 = vmatpush1.msra.mxu0 %v1498
        %2726 = vmatprep.subr.mxu0 0.0
        %2727 = vmatpush1.msra.mxu0 %v1499
        %2728 = vmatprep.subr.mxu0 0.0
        %2729 = vmatpush1.msra.mxu0 %v1500
        %2730 = vmatprep.subr.mxu0 0.0
        %2731 = vmatpush1.msra.mxu0 %v1501
        %2732 = vmatprep.subr.mxu0 0.0
        %2733 = vmatpush1.msra.mxu0 %v1502
        %2734 = vmatprep.subr.mxu0 0.0
        %2735 = vmatpush1.msra.mxu0 %v1503
        %2736 = vmatprep.subr.mxu0 0.0
        %2737 = vmatpush1.msra.mxu0 %v1504
        %2738 = vmatprep.subr.mxu0 0.0
        %2739 = vmatpush1.msra.mxu0 %v1505
        %2740 = vmatprep.subr.mxu0 0.0
        %2741 = vmatpush1.msra.mxu0 %v1506
        %2742 = vmatprep.subr.mxu0 0.0
        %2743 = vmatpush1.msra.mxu0 %v1507
        %2744 = vmatprep.subr.mxu0 0.0
        %2745 = vmatpush1.msra.mxu0 %v1508
        %2746 = vmatprep.subr.mxu0 0.0
        %2747 = vmatpush1.msra.mxu0 %v1509
        %2748 = vmatprep.subr.mxu0 0.0
        %2749 = vmatpush1.msra.mxu0 %v1510
        %2750 = vmatprep.subr.mxu0 0.0
        %2751 = vmatpush1.msra.mxu0 %v1511
        %2752 = vmatprep.subr.mxu0 0.0
        %2753 = vmatpush1.msra.mxu0 %v1512
        %2754 = vmatprep.subr.mxu0 0.0
        %2755 = vmatpush1.msra.mxu0 %v1513
        %2756 = vmatprep.mubr.f32.mxu0 %v241
        %2757 = vmatmul.mubr.f32.gmra.mrb[0].mxu0 %v240
        %v2758 = vpop.f32.mrb[0].mxu0
        %v2759 = vadd.f32 %v2454, %v2758
        %v2760 = vpop.f32.mrb[0].mxu0
        %2761 = vmatprep.mubr.f32.mxu0 %v265
        %2762 = vmatmul.mubr.f32.gmra.mrb[0].mxu0 %v264
        %v2763 = vpop.f32.mrb[0].mxu0
        %v2764 = vadd.f32 %v2459, %v2763
        %v2765 = vpop.f32.mrb[0].mxu0
        %2766 = vmatprep.mubr.f32.mxu0 %v289
        %2767 = vmatmul.mubr.f32.gmra.mrb[0].mxu0 %v288
        %v2768 = vpop.f32.mrb[0].mxu0
        %v2769 = vadd.f32 %v2464, %v2768
        %v2770 = vpop.f32.mrb[0].mxu0
        %2771 = vmatprep.mubr.f32.mxu0 %v313
        %2772 = vmatmul.mubr.f32.gmra.mrb[0].mxu0 %v312
        %v2773 = vpop.f32.mrb[0].mxu0
        %v2774 = vadd.f32 %v2469, %v2773
        %v2775 = vpop.f32.mrb[0].mxu0
        %2776 = vmatprep.mubr.f32.mxu0 %v337
        %2777 = vmatmul.mubr.f32.gmra.mrb[0].mxu0 %v336
        %v2778 = vpop.f32.mrb[0].mxu0
        %v2779 = vadd.f32 %v2474, %v2778
        %v2780 = vpop.f32.mrb[0].mxu0
        %2781 = vmatprep.mubr.f32.mxu0 %v361
        %2782 = vmatmul.mubr.f32.gmra.mrb[0].mxu0 %v360
        %v2783 = vpop.f32.mrb[0].mxu0
        %v2784 = vadd.f32 %v2479, %v2783
        %v2785 = vpop.f32.mrb[0].mxu0
        %2786 = vmatprep.mubr.f32.mxu0 %v385
        %2787 = vmatmul.mubr.f32.gmra.mrb[0].mxu0 %v384
        %v2788 = vpop.f32.mrb[0].mxu0
        %v2789 = vadd.f32 %v2484, %v2788
        %v2790 = vpop.f32.mrb[0].mxu0
        %2791 = vmatprep.mubr.f32.mxu0 %v409
        %2792 = vmatmul.mubr.f32.gmra.mrb[0].mxu0 %v408
        %v2793 = vpop.f32.mrb[0].mxu0
        %v2794 = vadd.f32 %v2489, %v2793
        %v2795 = vpop.f32.mrb[0].mxu0
        %2796 = vmatprep.mubr.f32.mxu0 %v433
        %2797 = vmatmul.mubr.f32.gmra.mrb[0].mxu0 %v432
        %v2798 = vpop.f32.mrb[0].mxu0
        %v2799 = vadd.f32 %v2494, %v2798
        %v2800 = vpop.f32.mrb[0].mxu0
        %2801 = vmatprep.mubr.f32.mxu0 %v457
        %2802 = vmatmul.mubr.f32.gmra.mrb[0].mxu0 %v456
        %v2803 = vpop.f32.mrb[0].mxu0
        %v2804 = vadd.f32 %v2499, %v2803
        %v2805 = vpop.f32.mrb[0].mxu0
        %2806 = vmatprep.mubr.f32.mxu0 %v481
        %2807 = vmatmul.mubr.f32.gmra.mrb[0].mxu0 %v480
        %v2808 = vpop.f32.mrb[0].mxu0
        %v2809 = vadd.f32 %v2504, %v2808
        %v2810 = vpop.f32.mrb[0].mxu0
        %2811 = vmatprep.mubr.f32.mxu0 %v505
        %2812 = vmatmul.mubr.f32.gmra.mrb[0].mxu0 %v504
        %v2813 = vpop.f32.mrb[0].mxu0
        %v2814 = vadd.f32 %v2509, %v2813
        %v2815 = vpop.f32.mrb[0].mxu0
        %2816 = vmatprep.mubr.f32.mxu0 %v529
        %2817 = vmatmul.mubr.f32.gmra.mrb[0].mxu0 %v528
        %v2818 = vpop.f32.mrb[0].mxu0
        %v2819 = vadd.f32 %v2514, %v2818
        %v2820 = vpop.f32.mrb[0].mxu0
        %2821 = vmatprep.mubr.f32.mxu0 %v553
        %2822 = vmatmul.mubr.f32.gmra.mrb[0].mxu0 %v552
        %v2823 = vpop.f32.mrb[0].mxu0
        %v2824 = vadd.f32 %v2519, %v2823
        %v2825 = vpop.f32.mrb[0].mxu0
        %2826 = vmatprep.mubr.f32.mxu0 %v577
        %2827 = vmatmul.mubr.f32.gmra.mrb[0].mxu0 %v576
        %v2828 = vpop.f32.mrb[0].mxu0
        %v2829 = vadd.f32 %v2524, %v2828
        %v2830 = vpop.f32.mrb[0].mxu0
        %2831 = vmatprep.mubr.f32.mxu0 %v601
        %2832 = vmatmul.mubr.f32.gmra.mrb[0].mxu0 %v600
        %v2833 = vpop.f32.mrb[0].mxu0
        %v2834 = vadd.f32 %v2529, %v2833
        %v2835 = vpop.f32.mrb[0].mxu0
        %2836 = vmatprep.mubr.f32.mxu0 %v625
        %2837 = vmatmul.mubr.f32.gmra.mrb[0].mxu0 %v624
        %v2838 = vpop.f32.mrb[0].mxu0
        %v2839 = vadd.f32 %v2534, %v2838
        %v2840 = vpop.f32.mrb[0].mxu0
        %2841 = vmatprep.mubr.f32.mxu0 %v649
        %2842 = vmatmul.mubr.f32.gmra.mrb[0].mxu0 %v648
        %v2843 = vpop.f32.mrb[0].mxu0
        %v2844 = vadd.f32 %v2539, %v2843
        %v2845 = vpop.f32.mrb[0].mxu0
        %2846 = vmatprep.mubr.f32.mxu0 %v673
        %2847 = vmatmul.mubr.f32.gmra.mrb[0].mxu0 %v672
        %v2848 = vpop.f32.mrb[0].mxu0
        %v2849 = vadd.f32 %v2544, %v2848
        %v2850 = vpop.f32.mrb[0].mxu0
        %2851 = vmatprep.mubr.f32.mxu0 %v697
        %2852 = vmatmul.mubr.f32.gmra.mrb[0].mxu0 %v696
        %v2853 = vpop.f32.mrb[0].mxu0
        %v2854 = vadd.f32 %v2549, %v2853
        %v2855 = vpop.f32.mrb[0].mxu0
        %2856 = vmatprep.mubr.f32.mxu0 %v721
        %2857 = vmatmul.mubr.f32.gmra.mrb[0].mxu0 %v720
        %v2858 = vpop.f32.mrb[0].mxu0
        %v2859 = vadd.f32 %v2554, %v2858
        %v2860 = vpop.f32.mrb[0].mxu0
        %2861 = vmatprep.mubr.f32.mxu0 %v745
        %2862 = vmatmul.mubr.f32.gmra.mrb[0].mxu0 %v744
        %v2863 = vpop.f32.mrb[0].mxu0
        %v2864 = vadd.f32 %v2559, %v2863
        %v2865 = vpop.f32.mrb[0].mxu0
        %2866 = vmatprep.mubr.f32.mxu0 %v769
        %2867 = vmatmul.mubr.f32.gmra.mrb[0].mxu0 %v768
        %v2868 = vpop.f32.mrb[0].mxu0
        %v2869 = vadd.f32 %v2564, %v2868
        %v2870 = vpop.f32.mrb[0].mxu0
        %2871 = vmatprep.mubr.f32.mxu0 %v793
        %2872 = vmatmul.mubr.f32.gmra.mrb[0].mxu0 %v792
        %v2873 = vpop.f32.mrb[0].mxu0
        %v2874 = vadd.f32 %v2569, %v2873
        %v2875 = vpop.f32.mrb[0].mxu0
        %2876 = vmatprep.mubr.f32.mxu0 %v817
        %2877 = vmatmul.mubr.f32.gmra.mrb[0].mxu0 %v816
        %v2878 = vpop.f32.mrb[0].mxu0
        %v2879 = vadd.f32 %v2574, %v2878
        %v2880 = vpop.f32.mrb[0].mxu0
        %2881 = vmatprep.mubr.f32.mxu0 %v841
        %2882 = vmatmul.mubr.f32.gmra.mrb[0].mxu0 %v840
        %v2883 = vpop.f32.mrb[0].mxu0
        %v2884 = vadd.f32 %v2579, %v2883
        %v2885 = vpop.f32.mrb[0].mxu0
        %2886 = vmatprep.mubr.f32.mxu0 %v865
        %2887 = vmatmul.mubr.f32.gmra.mrb[0].mxu0 %v864
        %v2888 = vpop.f32.mrb[0].mxu0
        %v2889 = vadd.f32 %v2584, %v2888
        %v2890 = vpop.f32.mrb[0].mxu0
        %2891 = vmatprep.mubr.f32.mxu0 %v889
        %2892 = vmatmul.mubr.f32.gmra.mrb[0].mxu0 %v888
        %v2893 = vpop.f32.mrb[0].mxu0
        %v2894 = vadd.f32 %v2589, %v2893
        %v2895 = vpop.f32.mrb[0].mxu0
        %2896 = vmatprep.mubr.f32.mxu0 %v913
        %2897 = vmatmul.mubr.f32.gmra.mrb[0].mxu0 %v912
        %v2898 = vpop.f32.mrb[0].mxu0
        %v2899 = vadd.f32 %v2594, %v2898
        %v2900 = vpop.f32.mrb[0].mxu0
        %2901 = vmatprep.mubr.f32.mxu0 %v937
        %2902 = vmatmul.mubr.f32.gmra.mrb[0].mxu0 %v936
        %v2903 = vpop.f32.mrb[0].mxu0
        %v2904 = vadd.f32 %v2599, %v2903
        %v2905 = vpop.f32.mrb[0].mxu0
        %2906 = vmatprep.mubr.f32.mxu0 %v961
        %2907 = vmatmul.mubr.f32.gmra.mrb[0].mxu0 %v960
        %v2908 = vpop.f32.mrb[0].mxu0
        %v2909 = vadd.f32 %v2604, %v2908
        %v2910 = vpop.f32.mrb[0].mxu0
        %2911 = vmatprep.mubr.f32.mxu0 %v985
        %2912 = vmatmul.mubr.f32.gmra.mrb[0].mxu0 %v984
        %v2913 = vpop.f32.mrb[0].mxu0
        %v2914 = vadd.f32 %v2609, %v2913
        %v2915 = vpop.f32.mrb[0].mxu0
        %2916 = vmatprep.mubr.f32.mxu0 %v1009
        %2917 = vmatmul.mubr.f32.gmra.mrb[0].mxu0 %v1008
        %v2918 = vpop.f32.mrb[0].mxu0
        %v2919 = vadd.f32 %v2614, %v2918
        %v2920 = vpop.f32.mrb[0].mxu0
        %2921 = vmatprep.mubr.f32.mxu0 %v1033
        %2922 = vmatmul.mubr.f32.gmra.mrb[0].mxu0 %v1032
        %v2923 = vpop.f32.mrb[0].mxu0
        %v2924 = vadd.f32 %v2619, %v2923
        %v2925 = vpop.f32.mrb[0].mxu0
        %2926 = vmatprep.mubr.f32.mxu0 %v1057
        %2927 = vmatmul.mubr.f32.gmra.mrb[0].mxu0 %v1056
        %v2928 = vpop.f32.mrb[0].mxu0
        %v2929 = vadd.f32 %v2624, %v2928
        %v2930 = vpop.f32.mrb[0].mxu0
        %2931 = vmatprep.mubr.f32.mxu0 %v1081
        %2932 = vmatmul.mubr.f32.gmra.mrb[0].mxu0 %v1080
        %v2933 = vpop.f32.mrb[0].mxu0
        %v2934 = vadd.f32 %v2629, %v2933
        %v2935 = vpop.f32.mrb[0].mxu0
        %2936 = vmatprep.mubr.f32.mxu0 %v1105
        %2937 = vmatmul.mubr.f32.gmra.mrb[0].mxu0 %v1104
        %v2938 = vpop.f32.mrb[0].mxu0
        %v2939 = vadd.f32 %v2634, %v2938
        %v2940 = vpop.f32.mrb[0].mxu0
        %2941 = vmatprep.mubr.f32.mxu0 %v1129
        %2942 = vmatmul.mubr.f32.gmra.mrb[0].mxu0 %v1128
        %v2943 = vpop.f32.mrb[0].mxu0
        %v2944 = vadd.f32 %v2639, %v2943
        %v2945 = vpop.f32.mrb[0].mxu0
        %2946 = vmatprep.mubr.f32.mxu0 %v1153
        %2947 = vmatmul.mubr.f32.gmra.mrb[0].mxu0 %v1152
        %v2948 = vpop.f32.mrb[0].mxu0
        %v2949 = vadd.f32 %v2644, %v2948
        %v2950 = vpop.f32.mrb[0].mxu0
        %2951 = vmatprep.mubr.f32.mxu0 %v1177
        %2952 = vmatmul.mubr.f32.gmra.mrb[0].mxu0 %v1176
        %v2953 = vpop.f32.mrb[0].mxu0
        %v2954 = vadd.f32 %v2649, %v2953
        %v2955 = vpop.f32.mrb[0].mxu0
        %2956 = vmatprep.mubr.f32.mxu0 %v1201
        %2957 = vmatmul.mubr.f32.gmra.mrb[0].mxu0 %v1200
        %v2958 = vpop.f32.mrb[0].mxu0
        %v2959 = vadd.f32 %v2654, %v2958
        %v2960 = vpop.f32.mrb[0].mxu0
        %2961 = vmatprep.mubr.f32.mxu0 %v1225
        %2962 = vmatmul.mubr.f32.gmra.mrb[0].mxu0 %v1224
        %v2963 = vpop.f32.mrb[0].mxu0
        %v2964 = vadd.f32 %v2659, %v2963
        %v2965 = vpop.f32.mrb[0].mxu0
        %2966 = vmatprep.mubr.f32.mxu0 %v1249
        %2967 = vmatmul.mubr.f32.gmra.mrb[0].mxu0 %v1248
        %v2968 = vpop.f32.mrb[0].mxu0
        %v2969 = vadd.f32 %v2664, %v2968
        %v2970 = vpop.f32.mrb[0].mxu0
        %2971 = vmatprep.mubr.f32.mxu0 %v1273
        %2972 = vmatmul.mubr.f32.gmra.mrb[0].mxu0 %v1272
        %v2973 = vpop.f32.mrb[0].mxu0
        %v2974 = vadd.f32 %v2669, %v2973
        %v2975 = vpop.f32.mrb[0].mxu0
        %2976 = vmatprep.mubr.f32.mxu0 %v1297
        %2977 = vmatmul.mubr.f32.gmra.mrb[0].mxu0 %v1296
        %v2978 = vpop.f32.mrb[0].mxu0
        %v2979 = vadd.f32 %v2674, %v2978
        %v2980 = vpop.f32.mrb[0].mxu0
        %2981 = vmatprep.mubr.f32.mxu0 %v1321
        %2982 = vmatmul.mubr.f32.gmra.mrb[0].mxu0 %v1320
        %v2983 = vpop.f32.mrb[0].mxu0
        %v2984 = vadd.f32 %v2679, %v2983
        %v2985 = vpop.f32.mrb[0].mxu0
        %2986 = vmatprep.mubr.f32.mxu0 %v1345
        %2987 = vmatmul.mubr.f32.gmra.mrb[0].mxu0 %v1344
        %v2988 = vpop.f32.mrb[0].mxu0
        %v2989 = vadd.f32 %v2684, %v2988
        %v2990 = vpop.f32.mrb[0].mxu0
        %2991 = vmatprep.mubr.f32.mxu0 %v1369
        %2992 = vmatmul.mubr.f32.gmra.mrb[0].mxu0 %v1368
        %v2993 = vpop.f32.mrb[0].mxu0
        %v2994 = vadd.f32 %v2689, %v2993
        %v2995 = vpop.f32.mrb[0].mxu0
        %2996 = vdwg.mxu0
        %2997 = vmatprep.subr.mxu0 0.0
        %2998 = vmatpush1.msra.mxu0 %v1514
        %2999 = vmatprep.subr.mxu0 0.0
        %3000 = vmatpush1.msra.mxu0 %v1515
        %3001 = vmatprep.subr.mxu0 0.0
        %3002 = vmatpush1.msra.mxu0 %v1516
        %3003 = vmatprep.subr.mxu0 0.0
        %3004 = vmatpush1.msra.mxu0 %v1517
        %3005 = vmatprep.subr.mxu0 0.0
        %3006 = vmatpush1.msra.mxu0 %v1518
        %3007 = vmatprep.subr.mxu0 0.0
        %3008 = vmatpush1.msra.mxu0 %v1519
        %3009 = vmatprep.subr.mxu0 0.0
        %3010 = vmatpush1.msra.mxu0 %v1520
        %3011 = vmatprep.subr.mxu0 0.0
        %3012 = vmatpush1.msra.mxu0 %v1521
        %3013 = vmatprep.subr.mxu0 0.0
        %3014 = vmatpush1.msra.mxu0 %v1522
        %3015 = vmatprep.subr.mxu0 0.0
        %3016 = vmatpush1.msra.mxu0 %v1523
        %3017 = vmatprep.subr.mxu0 0.0
        %3018 = vmatpush1.msra.mxu0 %v1524
        %3019 = vmatprep.subr.mxu0 0.0
        %3020 = vmatpush1.msra.mxu0 %v1525
        %3021 = vmatprep.subr.mxu0 0.0
        %3022 = vmatpush1.msra.mxu0 %v1526
        %3023 = vmatprep.subr.mxu0 0.0
        %3024 = vmatpush1.msra.mxu0 %v1527
        %3025 = vmatprep.subr.mxu0 0.0
        %3026 = vmatpush1.msra.mxu0 %v1528
        %3027 = vmatprep.subr.mxu0 0.0
        %3028 = vmatpush1.msra.mxu0 %v1529
        %3029 = vmatprep.subr.mxu0 0.0
        %3030 = vmatpush1.msra.mxu0 %v1530
        %3031 = vmatprep.subr.mxu0 0.0
        %3032 = vmatpush1.msra.mxu0 %v1531
        %3033 = vmatprep.subr.mxu0 0.0
        %3034 = vmatpush1.msra.mxu0 %v1532
        %3035 = vmatprep.subr.mxu0 0.0
        %3036 = vmatpush1.msra.mxu0 %v1533
        %3037 = vmatprep.subr.mxu0 0.0
        %3038 = vmatpush1.msra.mxu0 %v1534
        %3039 = vmatprep.subr.mxu0 0.0
        %3040 = vmatpush1.msra.mxu0 %v1535
        %3041 = vmatprep.subr.mxu0 0.0
        %3042 = vmatpush1.msra.mxu0 %v1536
        %3043 = vmatprep.subr.mxu0 0.0
        %3044 = vmatpush1.msra.mxu0 %v1537
        %3045 = vmatprep.subr.mxu0 0.0
        %3046 = vmatpush1.msra.mxu0 %v1538
        %3047 = vmatprep.subr.mxu0 0.0
        %3048 = vmatpush1.msra.mxu0 %v1539
        %3049 = vmatprep.subr.mxu0 0.0
        %3050 = vmatpush1.msra.mxu0 %v1540
        %3051 = vmatprep.subr.mxu0 0.0
        %3052 = vmatpush1.msra.mxu0 %v1541
        %3053 = vmatprep.subr.mxu0 0.0
        %3054 = vmatpush1.msra.mxu0 %v1542
        %3055 = vmatprep.subr.mxu0 0.0
        %3056 = vmatpush1.msra.mxu0 %v1543
        %3057 = vmatprep.subr.mxu0 0.0
        %3058 = vmatpush1.msra.mxu0 %v1544
        %3059 = vmatprep.subr.mxu0 0.0
        %3060 = vmatpush1.msra.mxu0 %v1545
        %3061 = vmatprep.mubr.f32.mxu0 %v243
        %3062 = vmatmul.mubr.f32.gmra.mrb[0].mxu0 %v242
        %v3063 = vpop.f32.mrb[0].mxu0
        %v3064 = vadd.f32 %v2759, %v3063
        %v3065 = vpop.f32.mrb[0].mxu0
        %3066 = vmatprep.mubr.f32.mxu0 %v267
        %3067 = vmatmul.mubr.f32.gmra.mrb[0].mxu0 %v266
        %v3068 = vpop.f32.mrb[0].mxu0
        %v3069 = vadd.f32 %v2764, %v3068
        %v3070 = vpop.f32.mrb[0].mxu0
        %3071 = vmatprep.mubr.f32.mxu0 %v291
        %3072 = vmatmul.mubr.f32.gmra.mrb[0].mxu0 %v290
        %v3073 = vpop.f32.mrb[0].mxu0
        %v3074 = vadd.f32 %v2769, %v3073
        %v3075 = vpop.f32.mrb[0].mxu0
        %3076 = vmatprep.mubr.f32.mxu0 %v315
        %3077 = vmatmul.mubr.f32.gmra.mrb[0].mxu0 %v314
        %v3078 = vpop.f32.mrb[0].mxu0
        %v3079 = vadd.f32 %v2774, %v3078
        %v3080 = vpop.f32.mrb[0].mxu0
        %3081 = vmatprep.mubr.f32.mxu0 %v339
        %3082 = vmatmul.mubr.f32.gmra.mrb[0].mxu0 %v338
        %v3083 = vpop.f32.mrb[0].mxu0
        %v3084 = vadd.f32 %v2779, %v3083
        %v3085 = vpop.f32.mrb[0].mxu0
        %3086 = vmatprep.mubr.f32.mxu0 %v363
        %3087 = vmatmul.mubr.f32.gmra.mrb[0].mxu0 %v362
        %v3088 = vpop.f32.mrb[0].mxu0
        %v3089 = vadd.f32 %v2784, %v3088
        %v3090 = vpop.f32.mrb[0].mxu0
        %3091 = vmatprep.mubr.f32.mxu0 %v387
        %3092 = vmatmul.mubr.f32.gmra.mrb[0].mxu0 %v386
        %v3093 = vpop.f32.mrb[0].mxu0
        %v3094 = vadd.f32 %v2789, %v3093
        %v3095 = vpop.f32.mrb[0].mxu0
        %3096 = vmatprep.mubr.f32.mxu0 %v411
        %3097 = vmatmul.mubr.f32.gmra.mrb[0].mxu0 %v410
        %v3098 = vpop.f32.mrb[0].mxu0
        %v3099 = vadd.f32 %v2794, %v3098
        %v3100 = vpop.f32.mrb[0].mxu0
        %3101 = vmatprep.mubr.f32.mxu0 %v435
        %3102 = vmatmul.mubr.f32.gmra.mrb[0].mxu0 %v434
        %v3103 = vpop.f32.mrb[0].mxu0
        %v3104 = vadd.f32 %v2799, %v3103
        %v3105 = vpop.f32.mrb[0].mxu0
        %3106 = vmatprep.mubr.f32.mxu0 %v459
        %3107 = vmatmul.mubr.f32.gmra.mrb[0].mxu0 %v458
        %v3108 = vpop.f32.mrb[0].mxu0
        %v3109 = vadd.f32 %v2804, %v3108
        %v3110 = vpop.f32.mrb[0].mxu0
        %3111 = vmatprep.mubr.f32.mxu0 %v483
        %3112 = vmatmul.mubr.f32.gmra.mrb[0].mxu0 %v482
        %v3113 = vpop.f32.mrb[0].mxu0
        %v3114 = vadd.f32 %v2809, %v3113
        %v3115 = vpop.f32.mrb[0].mxu0
        %3116 = vmatprep.mubr.f32.mxu0 %v507
        %3117 = vmatmul.mubr.f32.gmra.mrb[0].mxu0 %v506
        %v3118 = vpop.f32.mrb[0].mxu0
        %v3119 = vadd.f32 %v2814, %v3118
        %v3120 = vpop.f32.mrb[0].mxu0
        %3121 = vmatprep.mubr.f32.mxu0 %v531
        %3122 = vmatmul.mubr.f32.gmra.mrb[0].mxu0 %v530
        %v3123 = vpop.f32.mrb[0].mxu0
        %v3124 = vadd.f32 %v2819, %v3123
        %v3125 = vpop.f32.mrb[0].mxu0
        %3126 = vmatprep.mubr.f32.mxu0 %v555
        %3127 = vmatmul.mubr.f32.gmra.mrb[0].mxu0 %v554
        %v3128 = vpop.f32.mrb[0].mxu0
        %v3129 = vadd.f32 %v2824, %v3128
        %v3130 = vpop.f32.mrb[0].mxu0
        %3131 = vmatprep.mubr.f32.mxu0 %v579
        %3132 = vmatmul.mubr.f32.gmra.mrb[0].mxu0 %v578
        %v3133 = vpop.f32.mrb[0].mxu0
        %v3134 = vadd.f32 %v2829, %v3133
        %v3135 = vpop.f32.mrb[0].mxu0
        %3136 = vmatprep.mubr.f32.mxu0 %v603
        %3137 = vmatmul.mubr.f32.gmra.mrb[0].mxu0 %v602
        %v3138 = vpop.f32.mrb[0].mxu0
        %v3139 = vadd.f32 %v2834, %v3138
        %v3140 = vpop.f32.mrb[0].mxu0
        %3141 = vmatprep.mubr.f32.mxu0 %v627
        %3142 = vmatmul.mubr.f32.gmra.mrb[0].mxu0 %v626
        %v3143 = vpop.f32.mrb[0].mxu0
        %v3144 = vadd.f32 %v2839, %v3143
        %v3145 = vpop.f32.mrb[0].mxu0
        %3146 = vmatprep.mubr.f32.mxu0 %v651
        %3147 = vmatmul.mubr.f32.gmra.mrb[0].mxu0 %v650
        %v3148 = vpop.f32.mrb[0].mxu0
        %v3149 = vadd.f32 %v2844, %v3148
        %v3150 = vpop.f32.mrb[0].mxu0
        %3151 = vmatprep.mubr.f32.mxu0 %v675
        %3152 = vmatmul.mubr.f32.gmra.mrb[0].mxu0 %v674
        %v3153 = vpop.f32.mrb[0].mxu0
        %v3154 = vadd.f32 %v2849, %v3153
        %v3155 = vpop.f32.mrb[0].mxu0
        %3156 = vmatprep.mubr.f32.mxu0 %v699
        %3157 = vmatmul.mubr.f32.gmra.mrb[0].mxu0 %v698
        %v3158 = vpop.f32.mrb[0].mxu0
        %v3159 = vadd.f32 %v2854, %v3158
        %v3160 = vpop.f32.mrb[0].mxu0
        %3161 = vmatprep.mubr.f32.mxu0 %v723
        %3162 = vmatmul.mubr.f32.gmra.mrb[0].mxu0 %v722
        %v3163 = vpop.f32.mrb[0].mxu0
        %v3164 = vadd.f32 %v2859, %v3163
        %v3165 = vpop.f32.mrb[0].mxu0
        %3166 = vmatprep.mubr.f32.mxu0 %v747
        %3167 = vmatmul.mubr.f32.gmra.mrb[0].mxu0 %v746
        %v3168 = vpop.f32.mrb[0].mxu0
        %v3169 = vadd.f32 %v2864, %v3168
        %v3170 = vpop.f32.mrb[0].mxu0
        %3171 = vmatprep.mubr.f32.mxu0 %v771
        %3172 = vmatmul.mubr.f32.gmra.mrb[0].mxu0 %v770
        %v3173 = vpop.f32.mrb[0].mxu0
        %v3174 = vadd.f32 %v2869, %v3173
        %v3175 = vpop.f32.mrb[0].mxu0
        %3176 = vmatprep.mubr.f32.mxu0 %v795
        %3177 = vmatmul.mubr.f32.gmra.mrb[0].mxu0 %v794
        %v3178 = vpop.f32.mrb[0].mxu0
        %v3179 = vadd.f32 %v2874, %v3178
        %v3180 = vpop.f32.mrb[0].mxu0
        %3181 = vmatprep.mubr.f32.mxu0 %v819
        %3182 = vmatmul.mubr.f32.gmra.mrb[0].mxu0 %v818
        %v3183 = vpop.f32.mrb[0].mxu0
        %v3184 = vadd.f32 %v2879, %v3183
        %v3185 = vpop.f32.mrb[0].mxu0
        %3186 = vmatprep.mubr.f32.mxu0 %v843
        %3187 = vmatmul.mubr.f32.gmra.mrb[0].mxu0 %v842
        %v3188 = vpop.f32.mrb[0].mxu0
        %v3189 = vadd.f32 %v2884, %v3188
        %v3190 = vpop.f32.mrb[0].mxu0
        %3191 = vmatprep.mubr.f32.mxu0 %v867
        %3192 = vmatmul.mubr.f32.gmra.mrb[0].mxu0 %v866
        %v3193 = vpop.f32.mrb[0].mxu0
        %v3194 = vadd.f32 %v2889, %v3193
        %v3195 = vpop.f32.mrb[0].mxu0
        %3196 = vmatprep.mubr.f32.mxu0 %v891
        %3197 = vmatmul.mubr.f32.gmra.mrb[0].mxu0 %v890
        %v3198 = vpop.f32.mrb[0].mxu0
        %v3199 = vadd.f32 %v2894, %v3198
        %v3200 = vpop.f32.mrb[0].mxu0
        %3201 = vmatprep.mubr.f32.mxu0 %v915
        %3202 = vmatmul.mubr.f32.gmra.mrb[0].mxu0 %v914
        %v3203 = vpop.f32.mrb[0].mxu0
        %v3204 = vadd.f32 %v2899, %v3203
        %v3205 = vpop.f32.mrb[0].mxu0
        %3206 = vmatprep.mubr.f32.mxu0 %v939
        %3207 = vmatmul.mubr.f32.gmra.mrb[0].mxu0 %v938
        %v3208 = vpop.f32.mrb[0].mxu0
        %v3209 = vadd.f32 %v2904, %v3208
        %v3210 = vpop.f32.mrb[0].mxu0
        %3211 = vmatprep.mubr.f32.mxu0 %v963
        %3212 = vmatmul.mubr.f32.gmra.mrb[0].mxu0 %v962
        %v3213 = vpop.f32.mrb[0].mxu0
        %v3214 = vadd.f32 %v2909, %v3213
        %v3215 = vpop.f32.mrb[0].mxu0
        %3216 = vmatprep.mubr.f32.mxu0 %v987
        %3217 = vmatmul.mubr.f32.gmra.mrb[0].mxu0 %v986
        %v3218 = vpop.f32.mrb[0].mxu0
        %v3219 = vadd.f32 %v2914, %v3218
        %v3220 = vpop.f32.mrb[0].mxu0
        %3221 = vmatprep.mubr.f32.mxu0 %v1011
        %3222 = vmatmul.mubr.f32.gmra.mrb[0].mxu0 %v1010
        %v3223 = vpop.f32.mrb[0].mxu0
        %v3224 = vadd.f32 %v2919, %v3223
        %v3225 = vpop.f32.mrb[0].mxu0
        %3226 = vmatprep.mubr.f32.mxu0 %v1035
        %3227 = vmatmul.mubr.f32.gmra.mrb[0].mxu0 %v1034
        %v3228 = vpop.f32.mrb[0].mxu0
        %v3229 = vadd.f32 %v2924, %v3228
        %v3230 = vpop.f32.mrb[0].mxu0
        %3231 = vmatprep.mubr.f32.mxu0 %v1059
        %3232 = vmatmul.mubr.f32.gmra.mrb[0].mxu0 %v1058
        %v3233 = vpop.f32.mrb[0].mxu0
        %v3234 = vadd.f32 %v2929, %v3233
        %v3235 = vpop.f32.mrb[0].mxu0
        %3236 = vmatprep.mubr.f32.mxu0 %v1083
        %3237 = vmatmul.mubr.f32.gmra.mrb[0].mxu0 %v1082
        %v3238 = vpop.f32.mrb[0].mxu0
        %v3239 = vadd.f32 %v2934, %v3238
        %v3240 = vpop.f32.mrb[0].mxu0
        %3241 = vmatprep.mubr.f32.mxu0 %v1107
        %3242 = vmatmul.mubr.f32.gmra.mrb[0].mxu0 %v1106
        %v3243 = vpop.f32.mrb[0].mxu0
        %v3244 = vadd.f32 %v2939, %v3243
        %v3245 = vpop.f32.mrb[0].mxu0
        %3246 = vmatprep.mubr.f32.mxu0 %v1131
        %3247 = vmatmul.mubr.f32.gmra.mrb[0].mxu0 %v1130
        %v3248 = vpop.f32.mrb[0].mxu0
        %v3249 = vadd.f32 %v2944, %v3248
        %v3250 = vpop.f32.mrb[0].mxu0
        %3251 = vmatprep.mubr.f32.mxu0 %v1155
        %3252 = vmatmul.mubr.f32.gmra.mrb[0].mxu0 %v1154
        %v3253 = vpop.f32.mrb[0].mxu0
        %v3254 = vadd.f32 %v2949, %v3253
        %v3255 = vpop.f32.mrb[0].mxu0
        %3256 = vmatprep.mubr.f32.mxu0 %v1179
        %3257 = vmatmul.mubr.f32.gmra.mrb[0].mxu0 %v1178
        %v3258 = vpop.f32.mrb[0].mxu0
        %v3259 = vadd.f32 %v2954, %v3258
        %v3260 = vpop.f32.mrb[0].mxu0
        %3261 = vmatprep.mubr.f32.mxu0 %v1203
        %3262 = vmatmul.mubr.f32.gmra.mrb[0].mxu0 %v1202
        %v3263 = vpop.f32.mrb[0].mxu0
        %v3264 = vadd.f32 %v2959, %v3263
        %v3265 = vpop.f32.mrb[0].mxu0
        %3266 = vmatprep.mubr.f32.mxu0 %v1227
        %3267 = vmatmul.mubr.f32.gmra.mrb[0].mxu0 %v1226
        %v3268 = vpop.f32.mrb[0].mxu0
        %v3269 = vadd.f32 %v2964, %v3268
        %v3270 = vpop.f32.mrb[0].mxu0
        %3271 = vmatprep.mubr.f32.mxu0 %v1251
        %3272 = vmatmul.mubr.f32.gmra.mrb[0].mxu0 %v1250
        %v3273 = vpop.f32.mrb[0].mxu0
        %v3274 = vadd.f32 %v2969, %v3273
        %v3275 = vpop.f32.mrb[0].mxu0
        %3276 = vmatprep.mubr.f32.mxu0 %v1275
        %3277 = vmatmul.mubr.f32.gmra.mrb[0].mxu0 %v1274
        %v3278 = vpop.f32.mrb[0].mxu0
        %v3279 = vadd.f32 %v2974, %v3278
        %v3280 = vpop.f32.mrb[0].mxu0
        %3281 = vmatprep.mubr.f32.mxu0 %v1299
        %3282 = vmatmul.mubr.f32.gmra.mrb[0].mxu0 %v1298
        %v3283 = vpop.f32.mrb[0].mxu0
        %v3284 = vadd.f32 %v2979, %v3283
        %v3285 = vpop.f32.mrb[0].mxu0
        %3286 = vmatprep.mubr.f32.mxu0 %v1323
        %3287 = vmatmul.mubr.f32.gmra.mrb[0].mxu0 %v1322
        %v3288 = vpop.f32.mrb[0].mxu0
        %v3289 = vadd.f32 %v2984, %v3288
        %v3290 = vpop.f32.mrb[0].mxu0
        %3291 = vmatprep.mubr.f32.mxu0 %v1347
        %3292 = vmatmul.mubr.f32.gmra.mrb[0].mxu0 %v1346
        %v3293 = vpop.f32.mrb[0].mxu0
        %v3294 = vadd.f32 %v2989, %v3293
        %v3295 = vpop.f32.mrb[0].mxu0
        %3296 = vmatprep.mubr.f32.mxu0 %v1371
        %3297 = vmatmul.mubr.f32.gmra.mrb[0].mxu0 %v1370
        %v3298 = vpop.f32.mrb[0].mxu0
        %v3299 = vadd.f32 %v2994, %v3298
        %v3300 = vpop.f32.mrb[0].mxu0
        %3301 = vdwg.mxu0
        %3302 = vmatprep.subr.mxu0 0.0
        %3303 = vmatpush1.msra.mxu0 %v1546
        %3304 = vmatprep.subr.mxu0 0.0
        %3305 = vmatpush1.msra.mxu0 %v1547
        %3306 = vmatprep.subr.mxu0 0.0
        %3307 = vmatpush1.msra.mxu0 %v1548
        %3308 = vmatprep.subr.mxu0 0.0
        %3309 = vmatpush1.msra.mxu0 %v1549
        %3310 = vmatprep.subr.mxu0 0.0
        %3311 = vmatpush1.msra.mxu0 %v1550
        %3312 = vmatprep.subr.mxu0 0.0
        %3313 = vmatpush1.msra.mxu0 %v1551
        %3314 = vmatprep.subr.mxu0 0.0
        %3315 = vmatpush1.msra.mxu0 %v1552
        %3316 = vmatprep.subr.mxu0 0.0
        %3317 = vmatpush1.msra.mxu0 %v1553
        %3318 = vmatprep.subr.mxu0 0.0
        %3319 = vmatpush1.msra.mxu0 %v1554
        %3320 = vmatprep.subr.mxu0 0.0
        %3321 = vmatpush1.msra.mxu0 %v1555
        %3322 = vmatprep.subr.mxu0 0.0
        %3323 = vmatpush1.msra.mxu0 %v1556
        %3324 = vmatprep.subr.mxu0 0.0
        %3325 = vmatpush1.msra.mxu0 %v1557
        %3326 = vmatprep.subr.mxu0 0.0
        %3327 = vmatpush1.msra.mxu0 %v1558
        %3328 = vmatprep.subr.mxu0 0.0
        %3329 = vmatpush1.msra.mxu0 %v1559
        %3330 = vmatprep.subr.mxu0 0.0
        %3331 = vmatpush1.msra.mxu0 %v1560
        %3332 = vmatprep.subr.mxu0 0.0
        %3333 = vmatpush1.msra.mxu0 %v1561
        %3334 = vmatprep.subr.mxu0 0.0
        %3335 = vmatpush1.msra.mxu0 %v1562
        %3336 = vmatprep.subr.mxu0 0.0
        %3337 = vmatpush1.msra.mxu0 %v1563
        %3338 = vmatprep.subr.mxu0 0.0
        %3339 = vmatpush1.msra.mxu0 %v1564
        %3340 = vmatprep.subr.mxu0 0.0
        %3341 = vmatpush1.msra.mxu0 %v1565
        %3342 = vmatprep.subr.mxu0 0.0
        %3343 = vmatpush1.msra.mxu0 %v1566
        %3344 = vmatprep.subr.mxu0 0.0
        %3345 = vmatpush1.msra.mxu0 %v1567
        %3346 = vmatprep.subr.mxu0 0.0
        %3347 = vmatpush1.msra.mxu0 %v1568
        %3348 = vmatprep.subr.mxu0 0.0
        %3349 = vmatpush1.msra.mxu0 %v1569
        %3350 = vmatprep.subr.mxu0 0.0
        %3351 = vmatpush1.msra.mxu0 %v1570
        %3352 = vmatprep.subr.mxu0 0.0
        %3353 = vmatpush1.msra.mxu0 %v1571
        %3354 = vmatprep.subr.mxu0 0.0
        %3355 = vmatpush1.msra.mxu0 %v1572
        %3356 = vmatprep.subr.mxu0 0.0
        %3357 = vmatpush1.msra.mxu0 %v1573
        %3358 = vmatprep.subr.mxu0 0.0
        %3359 = vmatpush1.msra.mxu0 %v1574
        %3360 = vmatprep.subr.mxu0 0.0
        %3361 = vmatpush1.msra.mxu0 %v1575
        %3362 = vmatprep.subr.mxu0 0.0
        %3363 = vmatpush1.msra.mxu0 %v1576
        %3364 = vmatprep.subr.mxu0 0.0
        %3365 = vmatpush1.msra.mxu0 %v1577
        %3366 = vmatprep.mubr.f32.mxu0 %v245
        %3367 = vmatmul.mubr.f32.gmra.mrb[0].mxu0 %v244
        %v3368 = vpop.f32.mrb[0].mxu0
        %v3369 = vadd.f32 %v3064, %v3368
        %v3370 = vpop.f32.mrb[0].mxu0
        %3371 = vmatprep.mubr.f32.mxu0 %v269
        %3372 = vmatmul.mubr.f32.gmra.mrb[0].mxu0 %v268
        %v3373 = vpop.f32.mrb[0].mxu0
        %v3374 = vadd.f32 %v3069, %v3373
        %v3375 = vpop.f32.mrb[0].mxu0
        %3376 = vmatprep.mubr.f32.mxu0 %v293
        %3377 = vmatmul.mubr.f32.gmra.mrb[0].mxu0 %v292
        %v3378 = vpop.f32.mrb[0].mxu0
        %v3379 = vadd.f32 %v3074, %v3378
        %v3380 = vpop.f32.mrb[0].mxu0
        %3381 = vmatprep.mubr.f32.mxu0 %v317
        %3382 = vmatmul.mubr.f32.gmra.mrb[0].mxu0 %v316
        %v3383 = vpop.f32.mrb[0].mxu0
        %v3384 = vadd.f32 %v3079, %v3383
        %v3385 = vpop.f32.mrb[0].mxu0
        %3386 = vmatprep.mubr.f32.mxu0 %v341
        %3387 = vmatmul.mubr.f32.gmra.mrb[0].mxu0 %v340
        %v3388 = vpop.f32.mrb[0].mxu0
        %v3389 = vadd.f32 %v3084, %v3388
        %v3390 = vpop.f32.mrb[0].mxu0
        %3391 = vmatprep.mubr.f32.mxu0 %v365
        %3392 = vmatmul.mubr.f32.gmra.mrb[0].mxu0 %v364
        %v3393 = vpop.f32.mrb[0].mxu0
        %v3394 = vadd.f32 %v3089, %v3393
        %v3395 = vpop.f32.mrb[0].mxu0
        %3396 = vmatprep.mubr.f32.mxu0 %v389
        %3397 = vmatmul.mubr.f32.gmra.mrb[0].mxu0 %v388
        %v3398 = vpop.f32.mrb[0].mxu0
        %v3399 = vadd.f32 %v3094, %v3398
        %v3400 = vpop.f32.mrb[0].mxu0
        %3401 = vmatprep.mubr.f32.mxu0 %v413
        %3402 = vmatmul.mubr.f32.gmra.mrb[0].mxu0 %v412
        %v3403 = vpop.f32.mrb[0].mxu0
        %v3404 = vadd.f32 %v3099, %v3403
        %v3405 = vpop.f32.mrb[0].mxu0
        %3406 = vmatprep.mubr.f32.mxu0 %v437
        %3407 = vmatmul.mubr.f32.gmra.mrb[0].mxu0 %v436
        %v3408 = vpop.f32.mrb[0].mxu0
        %v3409 = vadd.f32 %v3104, %v3408
        %v3410 = vpop.f32.mrb[0].mxu0
        %3411 = vmatprep.mubr.f32.mxu0 %v461
        %3412 = vmatmul.mubr.f32.gmra.mrb[0].mxu0 %v460
        %v3413 = vpop.f32.mrb[0].mxu0
        %v3414 = vadd.f32 %v3109, %v3413
        %v3415 = vpop.f32.mrb[0].mxu0
        %3416 = vmatprep.mubr.f32.mxu0 %v485
        %3417 = vmatmul.mubr.f32.gmra.mrb[0].mxu0 %v484
        %v3418 = vpop.f32.mrb[0].mxu0
        %v3419 = vadd.f32 %v3114, %v3418
        %v3420 = vpop.f32.mrb[0].mxu0
        %3421 = vmatprep.mubr.f32.mxu0 %v509
        %3422 = vmatmul.mubr.f32.gmra.mrb[0].mxu0 %v508
        %v3423 = vpop.f32.mrb[0].mxu0
        %v3424 = vadd.f32 %v3119, %v3423
        %v3425 = vpop.f32.mrb[0].mxu0
        %3426 = vmatprep.mubr.f32.mxu0 %v533
        %3427 = vmatmul.mubr.f32.gmra.mrb[0].mxu0 %v532
        %v3428 = vpop.f32.mrb[0].mxu0
        %v3429 = vadd.f32 %v3124, %v3428
        %v3430 = vpop.f32.mrb[0].mxu0
        %3431 = vmatprep.mubr.f32.mxu0 %v557
        %3432 = vmatmul.mubr.f32.gmra.mrb[0].mxu0 %v556
        %v3433 = vpop.f32.mrb[0].mxu0
        %v3434 = vadd.f32 %v3129, %v3433
        %v3435 = vpop.f32.mrb[0].mxu0
        %3436 = vmatprep.mubr.f32.mxu0 %v581
        %3437 = vmatmul.mubr.f32.gmra.mrb[0].mxu0 %v580
        %v3438 = vpop.f32.mrb[0].mxu0
        %v3439 = vadd.f32 %v3134, %v3438
        %v3440 = vpop.f32.mrb[0].mxu0
        %3441 = vmatprep.mubr.f32.mxu0 %v605
        %3442 = vmatmul.mubr.f32.gmra.mrb[0].mxu0 %v604
        %v3443 = vpop.f32.mrb[0].mxu0
        %v3444 = vadd.f32 %v3139, %v3443
        %v3445 = vpop.f32.mrb[0].mxu0
        %3446 = vmatprep.mubr.f32.mxu0 %v629
        %3447 = vmatmul.mubr.f32.gmra.mrb[0].mxu0 %v628
        %v3448 = vpop.f32.mrb[0].mxu0
        %v3449 = vadd.f32 %v3144, %v3448
        %v3450 = vpop.f32.mrb[0].mxu0
        %3451 = vmatprep.mubr.f32.mxu0 %v653
        %3452 = vmatmul.mubr.f32.gmra.mrb[0].mxu0 %v652
        %v3453 = vpop.f32.mrb[0].mxu0
        %v3454 = vadd.f32 %v3149, %v3453
        %v3455 = vpop.f32.mrb[0].mxu0
        %3456 = vmatprep.mubr.f32.mxu0 %v677
        %3457 = vmatmul.mubr.f32.gmra.mrb[0].mxu0 %v676
        %v3458 = vpop.f32.mrb[0].mxu0
        %v3459 = vadd.f32 %v3154, %v3458
        %v3460 = vpop.f32.mrb[0].mxu0
        %3461 = vmatprep.mubr.f32.mxu0 %v701
        %3462 = vmatmul.mubr.f32.gmra.mrb[0].mxu0 %v700
        %v3463 = vpop.f32.mrb[0].mxu0
        %v3464 = vadd.f32 %v3159, %v3463
        %v3465 = vpop.f32.mrb[0].mxu0
        %3466 = vmatprep.mubr.f32.mxu0 %v725
        %3467 = vmatmul.mubr.f32.gmra.mrb[0].mxu0 %v724
        %v3468 = vpop.f32.mrb[0].mxu0
        %v3469 = vadd.f32 %v3164, %v3468
        %v3470 = vpop.f32.mrb[0].mxu0
        %3471 = vmatprep.mubr.f32.mxu0 %v749
        %3472 = vmatmul.mubr.f32.gmra.mrb[0].mxu0 %v748
        %v3473 = vpop.f32.mrb[0].mxu0
        %v3474 = vadd.f32 %v3169, %v3473
        %v3475 = vpop.f32.mrb[0].mxu0
        %3476 = vmatprep.mubr.f32.mxu0 %v773
        %3477 = vmatmul.mubr.f32.gmra.mrb[0].mxu0 %v772
        %v3478 = vpop.f32.mrb[0].mxu0
        %v3479 = vadd.f32 %v3174, %v3478
        %v3480 = vpop.f32.mrb[0].mxu0
        %3481 = vmatprep.mubr.f32.mxu0 %v797
        %3482 = vmatmul.mubr.f32.gmra.mrb[0].mxu0 %v796
        %v3483 = vpop.f32.mrb[0].mxu0
        %v3484 = vadd.f32 %v3179, %v3483
        %v3485 = vpop.f32.mrb[0].mxu0
        %3486 = vmatprep.mubr.f32.mxu0 %v821
        %3487 = vmatmul.mubr.f32.gmra.mrb[0].mxu0 %v820
        %v3488 = vpop.f32.mrb[0].mxu0
        %v3489 = vadd.f32 %v3184, %v3488
        %v3490 = vpop.f32.mrb[0].mxu0
        %3491 = vmatprep.mubr.f32.mxu0 %v845
        %3492 = vmatmul.mubr.f32.gmra.mrb[0].mxu0 %v844
        %v3493 = vpop.f32.mrb[0].mxu0
        %v3494 = vadd.f32 %v3189, %v3493
        %v3495 = vpop.f32.mrb[0].mxu0
        %3496 = vmatprep.mubr.f32.mxu0 %v869
        %3497 = vmatmul.mubr.f32.gmra.mrb[0].mxu0 %v868
        %v3498 = vpop.f32.mrb[0].mxu0
        %v3499 = vadd.f32 %v3194, %v3498
        %v3500 = vpop.f32.mrb[0].mxu0
        %3501 = vmatprep.mubr.f32.mxu0 %v893
        %3502 = vmatmul.mubr.f32.gmra.mrb[0].mxu0 %v892
        %v3503 = vpop.f32.mrb[0].mxu0
        %v3504 = vadd.f32 %v3199, %v3503
        %v3505 = vpop.f32.mrb[0].mxu0
        %3506 = vmatprep.mubr.f32.mxu0 %v917
        %3507 = vmatmul.mubr.f32.gmra.mrb[0].mxu0 %v916
        %v3508 = vpop.f32.mrb[0].mxu0
        %v3509 = vadd.f32 %v3204, %v3508
        %v3510 = vpop.f32.mrb[0].mxu0
        %3511 = vmatprep.mubr.f32.mxu0 %v941
        %3512 = vmatmul.mubr.f32.gmra.mrb[0].mxu0 %v940
        %v3513 = vpop.f32.mrb[0].mxu0
        %v3514 = vadd.f32 %v3209, %v3513
        %v3515 = vpop.f32.mrb[0].mxu0
        %3516 = vmatprep.mubr.f32.mxu0 %v965
        %3517 = vmatmul.mubr.f32.gmra.mrb[0].mxu0 %v964
        %v3518 = vpop.f32.mrb[0].mxu0
        %v3519 = vadd.f32 %v3214, %v3518
        %v3520 = vpop.f32.mrb[0].mxu0
        %3521 = vmatprep.mubr.f32.mxu0 %v989
        %3522 = vmatmul.mubr.f32.gmra.mrb[0].mxu0 %v988
        %v3523 = vpop.f32.mrb[0].mxu0
        %v3524 = vadd.f32 %v3219, %v3523
        %v3525 = vpop.f32.mrb[0].mxu0
        %3526 = vmatprep.mubr.f32.mxu0 %v1013
        %3527 = vmatmul.mubr.f32.gmra.mrb[0].mxu0 %v1012
        %v3528 = vpop.f32.mrb[0].mxu0
        %v3529 = vadd.f32 %v3224, %v3528
        %v3530 = vpop.f32.mrb[0].mxu0
        %3531 = vmatprep.mubr.f32.mxu0 %v1037
        %3532 = vmatmul.mubr.f32.gmra.mrb[0].mxu0 %v1036
        %v3533 = vpop.f32.mrb[0].mxu0
        %v3534 = vadd.f32 %v3229, %v3533
        %v3535 = vpop.f32.mrb[0].mxu0
        %3536 = vmatprep.mubr.f32.mxu0 %v1061
        %3537 = vmatmul.mubr.f32.gmra.mrb[0].mxu0 %v1060
        %v3538 = vpop.f32.mrb[0].mxu0
        %v3539 = vadd.f32 %v3234, %v3538
        %v3540 = vpop.f32.mrb[0].mxu0
        %3541 = vmatprep.mubr.f32.mxu0 %v1085
        %3542 = vmatmul.mubr.f32.gmra.mrb[0].mxu0 %v1084
        %v3543 = vpop.f32.mrb[0].mxu0
        %v3544 = vadd.f32 %v3239, %v3543
        %v3545 = vpop.f32.mrb[0].mxu0
        %3546 = vmatprep.mubr.f32.mxu0 %v1109
        %3547 = vmatmul.mubr.f32.gmra.mrb[0].mxu0 %v1108
        %v3548 = vpop.f32.mrb[0].mxu0
        %v3549 = vadd.f32 %v3244, %v3548
        %v3550 = vpop.f32.mrb[0].mxu0
        %3551 = vmatprep.mubr.f32.mxu0 %v1133
        %3552 = vmatmul.mubr.f32.gmra.mrb[0].mxu0 %v1132
        %v3553 = vpop.f32.mrb[0].mxu0
        %v3554 = vadd.f32 %v3249, %v3553
        %v3555 = vpop.f32.mrb[0].mxu0
        %3556 = vmatprep.mubr.f32.mxu0 %v1157
        %3557 = vmatmul.mubr.f32.gmra.mrb[0].mxu0 %v1156
        %v3558 = vpop.f32.mrb[0].mxu0
        %v3559 = vadd.f32 %v3254, %v3558
        %v3560 = vpop.f32.mrb[0].mxu0
        %3561 = vmatprep.mubr.f32.mxu0 %v1181
        %3562 = vmatmul.mubr.f32.gmra.mrb[0].mxu0 %v1180
        %v3563 = vpop.f32.mrb[0].mxu0
        %v3564 = vadd.f32 %v3259, %v3563
        %v3565 = vpop.f32.mrb[0].mxu0
        %3566 = vmatprep.mubr.f32.mxu0 %v1205
        %3567 = vmatmul.mubr.f32.gmra.mrb[0].mxu0 %v1204
        %v3568 = vpop.f32.mrb[0].mxu0
        %v3569 = vadd.f32 %v3264, %v3568
        %v3570 = vpop.f32.mrb[0].mxu0
        %3571 = vmatprep.mubr.f32.mxu0 %v1229
        %3572 = vmatmul.mubr.f32.gmra.mrb[0].mxu0 %v1228
        %v3573 = vpop.f32.mrb[0].mxu0
        %v3574 = vadd.f32 %v3269, %v3573
        %v3575 = vpop.f32.mrb[0].mxu0
        %3576 = vmatprep.mubr.f32.mxu0 %v1253
        %3577 = vmatmul.mubr.f32.gmra.mrb[0].mxu0 %v1252
        %v3578 = vpop.f32.mrb[0].mxu0
        %v3579 = vadd.f32 %v3274, %v3578
        %v3580 = vpop.f32.mrb[0].mxu0
        %3581 = vmatprep.mubr.f32.mxu0 %v1277
        %3582 = vmatmul.mubr.f32.gmra.mrb[0].mxu0 %v1276
        %v3583 = vpop.f32.mrb[0].mxu0
        %v3584 = vadd.f32 %v3279, %v3583
        %v3585 = vpop.f32.mrb[0].mxu0
        %3586 = vmatprep.mubr.f32.mxu0 %v1301
        %3587 = vmatmul.mubr.f32.gmra.mrb[0].mxu0 %v1300
        %v3588 = vpop.f32.mrb[0].mxu0
        %v3589 = vadd.f32 %v3284, %v3588
        %v3590 = vpop.f32.mrb[0].mxu0
        %3591 = vmatprep.mubr.f32.mxu0 %v1325
        %3592 = vmatmul.mubr.f32.gmra.mrb[0].mxu0 %v1324
        %v3593 = vpop.f32.mrb[0].mxu0
        %v3594 = vadd.f32 %v3289, %v3593
        %v3595 = vpop.f32.mrb[0].mxu0
        %3596 = vmatprep.mubr.f32.mxu0 %v1349
        %3597 = vmatmul.mubr.f32.gmra.mrb[0].mxu0 %v1348
        %v3598 = vpop.f32.mrb[0].mxu0
        %v3599 = vadd.f32 %v3294, %v3598
        %v3600 = vpop.f32.mrb[0].mxu0
        %3601 = vmatprep.mubr.f32.mxu0 %v1373
        %3602 = vmatmul.mubr.f32.gmra.mrb[0].mxu0 %v1372
        %v3603 = vpop.f32.mrb[0].mxu0
        %v3604 = vadd.f32 %v3299, %v3603
        %v3605 = vpop.f32.mrb[0].mxu0
        %3606 = vdwg.mxu0
        %3607 = vmatprep.subr.mxu0 0.0
        %3608 = vmatpush1.msra.mxu0 %v1578
        %3609 = vmatprep.subr.mxu0 0.0
        %3610 = vmatpush1.msra.mxu0 %v1579
        %3611 = vmatprep.subr.mxu0 0.0
        %3612 = vmatpush1.msra.mxu0 %v1580
        %3613 = vmatprep.subr.mxu0 0.0
        %3614 = vmatpush1.msra.mxu0 %v1581
        %3615 = vmatprep.subr.mxu0 0.0
        %3616 = vmatpush1.msra.mxu0 %v1582
        %3617 = vmatprep.subr.mxu0 0.0
        %3618 = vmatpush1.msra.mxu0 %v1583
        %3619 = vmatprep.subr.mxu0 0.0
        %3620 = vmatpush1.msra.mxu0 %v1584
        %3621 = vmatprep.subr.mxu0 0.0
        %3622 = vmatpush1.msra.mxu0 %v1585
        %3623 = vmatprep.subr.mxu0 0.0
        %3624 = vmatpush1.msra.mxu0 %v1586
        %3625 = vmatprep.subr.mxu0 0.0
        %3626 = vmatpush1.msra.mxu0 %v1587
        %3627 = vmatprep.subr.mxu0 0.0
        %3628 = vmatpush1.msra.mxu0 %v1588
        %3629 = vmatprep.subr.mxu0 0.0
        %3630 = vmatpush1.msra.mxu0 %v1589
        %3631 = vmatprep.subr.mxu0 0.0
        %3632 = vmatpush1.msra.mxu0 %v1590
        %3633 = vmatprep.subr.mxu0 0.0
        %3634 = vmatpush1.msra.mxu0 %v1591
        %3635 = vmatprep.subr.mxu0 0.0
        %3636 = vmatpush1.msra.mxu0 %v1592
        %3637 = vmatprep.subr.mxu0 0.0
        %3638 = vmatpush1.msra.mxu0 %v1593
        %3639 = vmatprep.subr.mxu0 0.0
        %3640 = vmatpush1.msra.mxu0 %v1594
        %3641 = vmatprep.subr.mxu0 0.0
        %3642 = vmatpush1.msra.mxu0 %v1595
        %3643 = vmatprep.subr.mxu0 0.0
        %3644 = vmatpush1.msra.mxu0 %v1596
        %3645 = vmatprep.subr.mxu0 0.0
        %3646 = vmatpush1.msra.mxu0 %v1597
        %3647 = vmatprep.subr.mxu0 0.0
        %3648 = vmatpush1.msra.mxu0 %v1598
        %3649 = vmatprep.subr.mxu0 0.0
        %3650 = vmatpush1.msra.mxu0 %v1599
        %3651 = vmatprep.subr.mxu0 0.0
        %3652 = vmatpush1.msra.mxu0 %v1600
        %3653 = vmatprep.subr.mxu0 0.0
        %3654 = vmatpush1.msra.mxu0 %v1601
        %3655 = vmatprep.subr.mxu0 0.0
        %3656 = vmatpush1.msra.mxu0 %v1602
        %3657 = vmatprep.subr.mxu0 0.0
        %3658 = vmatpush1.msra.mxu0 %v1603
        %3659 = vmatprep.subr.mxu0 0.0
        %3660 = vmatpush1.msra.mxu0 %v1604
        %3661 = vmatprep.subr.mxu0 0.0
        %3662 = vmatpush1.msra.mxu0 %v1605
        %3663 = vmatprep.subr.mxu0 0.0
        %3664 = vmatpush1.msra.mxu0 %v1606
        %3665 = vmatprep.subr.mxu0 0.0
        %3666 = vmatpush1.msra.mxu0 %v1607
        %3667 = vmatprep.subr.mxu0 0.0
        %3668 = vmatpush1.msra.mxu0 %v1608
        %3669 = vmatprep.subr.mxu0 0.0
        %3670 = vmatpush1.msra.mxu0 %v1609
        %3671 = vmatprep.mubr.f32.mxu0 %v247
        %3672 = vmatmul.mubr.f32.gmra.mrb[0].mxu0 %v246
        %v3673 = vpop.f32.mrb[0].mxu0
        %v3674 = vadd.f32 %v3369, %v3673
        %v3675 = vpop.f32.mrb[0].mxu0
        %3676 = vmatprep.mubr.f32.mxu0 %v271
        %3677 = vmatmul.mubr.f32.gmra.mrb[0].mxu0 %v270
        %v3678 = vpop.f32.mrb[0].mxu0
        %v3679 = vadd.f32 %v3374, %v3678
        %v3680 = vpop.f32.mrb[0].mxu0
        %3681 = vmatprep.mubr.f32.mxu0 %v295
        %3682 = vmatmul.mubr.f32.gmra.mrb[0].mxu0 %v294
        %v3683 = vpop.f32.mrb[0].mxu0
        %v3684 = vadd.f32 %v3379, %v3683
        %v3685 = vpop.f32.mrb[0].mxu0
        %3686 = vmatprep.mubr.f32.mxu0 %v319
        %3687 = vmatmul.mubr.f32.gmra.mrb[0].mxu0 %v318
        %v3688 = vpop.f32.mrb[0].mxu0
        %v3689 = vadd.f32 %v3384, %v3688
        %v3690 = vpop.f32.mrb[0].mxu0
        %3691 = vmatprep.mubr.f32.mxu0 %v343
        %3692 = vmatmul.mubr.f32.gmra.mrb[0].mxu0 %v342
        %v3693 = vpop.f32.mrb[0].mxu0
        %v3694 = vadd.f32 %v3389, %v3693
        %v3695 = vpop.f32.mrb[0].mxu0
        %3696 = vmatprep.mubr.f32.mxu0 %v367
        %3697 = vmatmul.mubr.f32.gmra.mrb[0].mxu0 %v366
        %v3698 = vpop.f32.mrb[0].mxu0
        %v3699 = vadd.f32 %v3394, %v3698
        %v3700 = vpop.f32.mrb[0].mxu0
        %3701 = vmatprep.mubr.f32.mxu0 %v391
        %3702 = vmatmul.mubr.f32.gmra.mrb[0].mxu0 %v390
        %v3703 = vpop.f32.mrb[0].mxu0
        %v3704 = vadd.f32 %v3399, %v3703
        %v3705 = vpop.f32.mrb[0].mxu0
        %3706 = vmatprep.mubr.f32.mxu0 %v415
        %3707 = vmatmul.mubr.f32.gmra.mrb[0].mxu0 %v414
        %v3708 = vpop.f32.mrb[0].mxu0
        %v3709 = vadd.f32 %v3404, %v3708
        %v3710 = vpop.f32.mrb[0].mxu0
        %3711 = vmatprep.mubr.f32.mxu0 %v439
        %3712 = vmatmul.mubr.f32.gmra.mrb[0].mxu0 %v438
        %v3713 = vpop.f32.mrb[0].mxu0
        %v3714 = vadd.f32 %v3409, %v3713
        %v3715 = vpop.f32.mrb[0].mxu0
        %3716 = vmatprep.mubr.f32.mxu0 %v463
        %3717 = vmatmul.mubr.f32.gmra.mrb[0].mxu0 %v462
        %v3718 = vpop.f32.mrb[0].mxu0
        %v3719 = vadd.f32 %v3414, %v3718
        %v3720 = vpop.f32.mrb[0].mxu0
        %3721 = vmatprep.mubr.f32.mxu0 %v487
        %3722 = vmatmul.mubr.f32.gmra.mrb[0].mxu0 %v486
        %v3723 = vpop.f32.mrb[0].mxu0
        %v3724 = vadd.f32 %v3419, %v3723
        %v3725 = vpop.f32.mrb[0].mxu0
        %3726 = vmatprep.mubr.f32.mxu0 %v511
        %3727 = vmatmul.mubr.f32.gmra.mrb[0].mxu0 %v510
        %v3728 = vpop.f32.mrb[0].mxu0
        %v3729 = vadd.f32 %v3424, %v3728
        %v3730 = vpop.f32.mrb[0].mxu0
        %3731 = vmatprep.mubr.f32.mxu0 %v535
        %3732 = vmatmul.mubr.f32.gmra.mrb[0].mxu0 %v534
        %v3733 = vpop.f32.mrb[0].mxu0
        %v3734 = vadd.f32 %v3429, %v3733
        %v3735 = vpop.f32.mrb[0].mxu0
        %3736 = vmatprep.mubr.f32.mxu0 %v559
        %3737 = vmatmul.mubr.f32.gmra.mrb[0].mxu0 %v558
        %v3738 = vpop.f32.mrb[0].mxu0
        %v3739 = vadd.f32 %v3434, %v3738
        %v3740 = vpop.f32.mrb[0].mxu0
        %3741 = vmatprep.mubr.f32.mxu0 %v583
        %3742 = vmatmul.mubr.f32.gmra.mrb[0].mxu0 %v582
        %v3743 = vpop.f32.mrb[0].mxu0
        %v3744 = vadd.f32 %v3439, %v3743
        %v3745 = vpop.f32.mrb[0].mxu0
        %3746 = vmatprep.mubr.f32.mxu0 %v607
        %3747 = vmatmul.mubr.f32.gmra.mrb[0].mxu0 %v606
        %v3748 = vpop.f32.mrb[0].mxu0
        %v3749 = vadd.f32 %v3444, %v3748
        %v3750 = vpop.f32.mrb[0].mxu0
        %3751 = vmatprep.mubr.f32.mxu0 %v631
        %3752 = vmatmul.mubr.f32.gmra.mrb[0].mxu0 %v630
        %v3753 = vpop.f32.mrb[0].mxu0
        %v3754 = vadd.f32 %v3449, %v3753
        %v3755 = vpop.f32.mrb[0].mxu0
        %3756 = vmatprep.mubr.f32.mxu0 %v655
        %3757 = vmatmul.mubr.f32.gmra.mrb[0].mxu0 %v654
        %v3758 = vpop.f32.mrb[0].mxu0
        %v3759 = vadd.f32 %v3454, %v3758
        %v3760 = vpop.f32.mrb[0].mxu0
        %3761 = vmatprep.mubr.f32.mxu0 %v679
        %3762 = vmatmul.mubr.f32.gmra.mrb[0].mxu0 %v678
        %v3763 = vpop.f32.mrb[0].mxu0
        %v3764 = vadd.f32 %v3459, %v3763
        %v3765 = vpop.f32.mrb[0].mxu0
        %3766 = vmatprep.mubr.f32.mxu0 %v703
        %3767 = vmatmul.mubr.f32.gmra.mrb[0].mxu0 %v702
        %v3768 = vpop.f32.mrb[0].mxu0
        %v3769 = vadd.f32 %v3464, %v3768
        %v3770 = vpop.f32.mrb[0].mxu0
        %3771 = vmatprep.mubr.f32.mxu0 %v727
        %3772 = vmatmul.mubr.f32.gmra.mrb[0].mxu0 %v726
        %v3773 = vpop.f32.mrb[0].mxu0
        %v3774 = vadd.f32 %v3469, %v3773
        %v3775 = vpop.f32.mrb[0].mxu0
        %3776 = vmatprep.mubr.f32.mxu0 %v751
        %3777 = vmatmul.mubr.f32.gmra.mrb[0].mxu0 %v750
        %v3778 = vpop.f32.mrb[0].mxu0
        %v3779 = vadd.f32 %v3474, %v3778
        %v3780 = vpop.f32.mrb[0].mxu0
        %3781 = vmatprep.mubr.f32.mxu0 %v775
        %3782 = vmatmul.mubr.f32.gmra.mrb[0].mxu0 %v774
        %v3783 = vpop.f32.mrb[0].mxu0
        %v3784 = vadd.f32 %v3479, %v3783
        %v3785 = vpop.f32.mrb[0].mxu0
        %3786 = vmatprep.mubr.f32.mxu0 %v799
        %3787 = vmatmul.mubr.f32.gmra.mrb[0].mxu0 %v798
        %v3788 = vpop.f32.mrb[0].mxu0
        %v3789 = vadd.f32 %v3484, %v3788
        %v3790 = vpop.f32.mrb[0].mxu0
        %3791 = vmatprep.mubr.f32.mxu0 %v823
        %3792 = vmatmul.mubr.f32.gmra.mrb[0].mxu0 %v822
        %v3793 = vpop.f32.mrb[0].mxu0
        %v3794 = vadd.f32 %v3489, %v3793
        %v3795 = vpop.f32.mrb[0].mxu0
        %3796 = vmatprep.mubr.f32.mxu0 %v847
        %3797 = vmatmul.mubr.f32.gmra.mrb[0].mxu0 %v846
        %v3798 = vpop.f32.mrb[0].mxu0
        %v3799 = vadd.f32 %v3494, %v3798
        %v3800 = vpop.f32.mrb[0].mxu0
        %3801 = vmatprep.mubr.f32.mxu0 %v871
        %3802 = vmatmul.mubr.f32.gmra.mrb[0].mxu0 %v870
        %v3803 = vpop.f32.mrb[0].mxu0
        %v3804 = vadd.f32 %v3499, %v3803
        %v3805 = vpop.f32.mrb[0].mxu0
        %3806 = vmatprep.mubr.f32.mxu0 %v895
        %3807 = vmatmul.mubr.f32.gmra.mrb[0].mxu0 %v894
        %v3808 = vpop.f32.mrb[0].mxu0
        %v3809 = vadd.f32 %v3504, %v3808
        %v3810 = vpop.f32.mrb[0].mxu0
        %3811 = vmatprep.mubr.f32.mxu0 %v919
        %3812 = vmatmul.mubr.f32.gmra.mrb[0].mxu0 %v918
        %v3813 = vpop.f32.mrb[0].mxu0
        %v3814 = vadd.f32 %v3509, %v3813
        %v3815 = vpop.f32.mrb[0].mxu0
        %3816 = vmatprep.mubr.f32.mxu0 %v943
        %3817 = vmatmul.mubr.f32.gmra.mrb[0].mxu0 %v942
        %v3818 = vpop.f32.mrb[0].mxu0
        %v3819 = vadd.f32 %v3514, %v3818
        %v3820 = vpop.f32.mrb[0].mxu0
        %3821 = vmatprep.mubr.f32.mxu0 %v967
        %3822 = vmatmul.mubr.f32.gmra.mrb[0].mxu0 %v966
        %v3823 = vpop.f32.mrb[0].mxu0
        %v3824 = vadd.f32 %v3519, %v3823
        %v3825 = vpop.f32.mrb[0].mxu0
        %3826 = vmatprep.mubr.f32.mxu0 %v991
        %3827 = vmatmul.mubr.f32.gmra.mrb[0].mxu0 %v990
        %v3828 = vpop.f32.mrb[0].mxu0
        %v3829 = vadd.f32 %v3524, %v3828
        %v3830 = vpop.f32.mrb[0].mxu0
        %3831 = vmatprep.mubr.f32.mxu0 %v1015
        %3832 = vmatmul.mubr.f32.gmra.mrb[0].mxu0 %v1014
        %v3833 = vpop.f32.mrb[0].mxu0
        %v3834 = vadd.f32 %v3529, %v3833
        %v3835 = vpop.f32.mrb[0].mxu0
        %3836 = vmatprep.mubr.f32.mxu0 %v1039
        %3837 = vmatmul.mubr.f32.gmra.mrb[0].mxu0 %v1038
        %v3838 = vpop.f32.mrb[0].mxu0
        %v3839 = vadd.f32 %v3534, %v3838
        %v3840 = vpop.f32.mrb[0].mxu0
        %3841 = vmatprep.mubr.f32.mxu0 %v1063
        %3842 = vmatmul.mubr.f32.gmra.mrb[0].mxu0 %v1062
        %v3843 = vpop.f32.mrb[0].mxu0
        %v3844 = vadd.f32 %v3539, %v3843
        %v3845 = vpop.f32.mrb[0].mxu0
        %3846 = vmatprep.mubr.f32.mxu0 %v1087
        %3847 = vmatmul.mubr.f32.gmra.mrb[0].mxu0 %v1086
        %v3848 = vpop.f32.mrb[0].mxu0
        %v3849 = vadd.f32 %v3544, %v3848
        %v3850 = vpop.f32.mrb[0].mxu0
        %3851 = vmatprep.mubr.f32.mxu0 %v1111
        %3852 = vmatmul.mubr.f32.gmra.mrb[0].mxu0 %v1110
        %v3853 = vpop.f32.mrb[0].mxu0
        %v3854 = vadd.f32 %v3549, %v3853
        %v3855 = vpop.f32.mrb[0].mxu0
        %3856 = vmatprep.mubr.f32.mxu0 %v1135
        %3857 = vmatmul.mubr.f32.gmra.mrb[0].mxu0 %v1134
        %v3858 = vpop.f32.mrb[0].mxu0
        %v3859 = vadd.f32 %v3554, %v3858
        %v3860 = vpop.f32.mrb[0].mxu0
        %3861 = vmatprep.mubr.f32.mxu0 %v1159
        %3862 = vmatmul.mubr.f32.gmra.mrb[0].mxu0 %v1158
        %v3863 = vpop.f32.mrb[0].mxu0
        %v3864 = vadd.f32 %v3559, %v3863
        %v3865 = vpop.f32.mrb[0].mxu0
        %3866 = vmatprep.mubr.f32.mxu0 %v1183
        %3867 = vmatmul.mubr.f32.gmra.mrb[0].mxu0 %v1182
        %v3868 = vpop.f32.mrb[0].mxu0
        %v3869 = vadd.f32 %v3564, %v3868
        %v3870 = vpop.f32.mrb[0].mxu0
        %3871 = vmatprep.mubr.f32.mxu0 %v1207
        %3872 = vmatmul.mubr.f32.gmra.mrb[0].mxu0 %v1206
        %v3873 = vpop.f32.mrb[0].mxu0
        %v3874 = vadd.f32 %v3569, %v3873
        %v3875 = vpop.f32.mrb[0].mxu0
        %3876 = vmatprep.mubr.f32.mxu0 %v1231
        %3877 = vmatmul.mubr.f32.gmra.mrb[0].mxu0 %v1230
        %v3878 = vpop.f32.mrb[0].mxu0
        %v3879 = vadd.f32 %v3574, %v3878
        %v3880 = vpop.f32.mrb[0].mxu0
        %3881 = vmatprep.mubr.f32.mxu0 %v1255
        %3882 = vmatmul.mubr.f32.gmra.mrb[0].mxu0 %v1254
        %v3883 = vpop.f32.mrb[0].mxu0
        %v3884 = vadd.f32 %v3579, %v3883
        %v3885 = vpop.f32.mrb[0].mxu0
        %3886 = vmatprep.mubr.f32.mxu0 %v1279
        %3887 = vmatmul.mubr.f32.gmra.mrb[0].mxu0 %v1278
        %v3888 = vpop.f32.mrb[0].mxu0
        %v3889 = vadd.f32 %v3584, %v3888
        %v3890 = vpop.f32.mrb[0].mxu0
        %3891 = vmatprep.mubr.f32.mxu0 %v1303
        %3892 = vmatmul.mubr.f32.gmra.mrb[0].mxu0 %v1302
        %v3893 = vpop.f32.mrb[0].mxu0
        %v3894 = vadd.f32 %v3589, %v3893
        %v3895 = vpop.f32.mrb[0].mxu0
        %3896 = vmatprep.mubr.f32.mxu0 %v1327
        %3897 = vmatmul.mubr.f32.gmra.mrb[0].mxu0 %v1326
        %v3898 = vpop.f32.mrb[0].mxu0
        %v3899 = vadd.f32 %v3594, %v3898
        %v3900 = vpop.f32.mrb[0].mxu0
        %3901 = vmatprep.mubr.f32.mxu0 %v1351
        %3902 = vmatmul.mubr.f32.gmra.mrb[0].mxu0 %v1350
        %v3903 = vpop.f32.mrb[0].mxu0
        %v3904 = vadd.f32 %v3599, %v3903
        %v3905 = vpop.f32.mrb[0].mxu0
        %3906 = vmatprep.mubr.f32.mxu0 %v1375
        %3907 = vmatmul.mubr.f32.gmra.mrb[0].mxu0 %v1374
        %v3908 = vpop.f32.mrb[0].mxu0
        %v3909 = vadd.f32 %v3604, %v3908
        %v3910 = vpop.f32.mrb[0].mxu0
        %3911 = vdwg.mxu0
        %3912 = vmatprep.subr.mxu0 0.0
        %3913 = vmatpush1.msra.mxu0 %v1610
        %3914 = vmatprep.subr.mxu0 0.0
        %3915 = vmatpush1.msra.mxu0 %v1611
        %3916 = vmatprep.subr.mxu0 0.0
        %3917 = vmatpush1.msra.mxu0 %v1612
        %3918 = vmatprep.subr.mxu0 0.0
        %3919 = vmatpush1.msra.mxu0 %v1613
        %3920 = vmatprep.subr.mxu0 0.0
        %3921 = vmatpush1.msra.mxu0 %v1614
        %3922 = vmatprep.subr.mxu0 0.0
        %3923 = vmatpush1.msra.mxu0 %v1615
        %3924 = vmatprep.subr.mxu0 0.0
        %3925 = vmatpush1.msra.mxu0 %v1616
        %3926 = vmatprep.subr.mxu0 0.0
        %3927 = vmatpush1.msra.mxu0 %v1617
        %3928 = vmatprep.subr.mxu0 0.0
        %3929 = vmatpush1.msra.mxu0 %v1618
        %3930 = vmatprep.subr.mxu0 0.0
        %3931 = vmatpush1.msra.mxu0 %v1619
        %3932 = vmatprep.subr.mxu0 0.0
        %3933 = vmatpush1.msra.mxu0 %v1620
        %3934 = vmatprep.subr.mxu0 0.0
        %3935 = vmatpush1.msra.mxu0 %v1621
        %3936 = vmatprep.subr.mxu0 0.0
        %3937 = vmatpush1.msra.mxu0 %v1622
        %3938 = vmatprep.subr.mxu0 0.0
        %3939 = vmatpush1.msra.mxu0 %v1623
        %3940 = vmatprep.subr.mxu0 0.0
        %3941 = vmatpush1.msra.mxu0 %v1624
        %3942 = vmatprep.subr.mxu0 0.0
        %3943 = vmatpush1.msra.mxu0 %v1625
        %3944 = vmatprep.subr.mxu0 0.0
        %3945 = vmatpush1.msra.mxu0 %v1626
        %3946 = vmatprep.subr.mxu0 0.0
        %3947 = vmatpush1.msra.mxu0 %v1627
        %3948 = vmatprep.subr.mxu0 0.0
        %3949 = vmatpush1.msra.mxu0 %v1628
        %3950 = vmatprep.subr.mxu0 0.0
        %3951 = vmatpush1.msra.mxu0 %v1629
        %3952 = vmatprep.subr.mxu0 0.0
        %3953 = vmatpush1.msra.mxu0 %v1630
        %3954 = vmatprep.subr.mxu0 0.0
        %3955 = vmatpush1.msra.mxu0 %v1631
        %3956 = vmatprep.subr.mxu0 0.0
        %3957 = vmatpush1.msra.mxu0 %v1632
        %3958 = vmatprep.subr.mxu0 0.0
        %3959 = vmatpush1.msra.mxu0 %v1633
        %3960 = vmatprep.subr.mxu0 0.0
        %3961 = vmatpush1.msra.mxu0 %v1634
        %3962 = vmatprep.subr.mxu0 0.0
        %3963 = vmatpush1.msra.mxu0 %v1635
        %3964 = vmatprep.subr.mxu0 0.0
        %3965 = vmatpush1.msra.mxu0 %v1636
        %3966 = vmatprep.subr.mxu0 0.0
        %3967 = vmatpush1.msra.mxu0 %v1637
        %3968 = vmatprep.subr.mxu0 0.0
        %3969 = vmatpush1.msra.mxu0 %v1638
        %3970 = vmatprep.subr.mxu0 0.0
        %3971 = vmatpush1.msra.mxu0 %v1639
        %3972 = vmatprep.subr.mxu0 0.0
        %3973 = vmatpush1.msra.mxu0 %v1640
        %3974 = vmatprep.subr.mxu0 0.0
        %3975 = vmatpush1.msra.mxu0 %v1641
        %3976 = vmatprep.mubr.f32.mxu0 %v249
        %3977 = vmatmul.mubr.f32.gmra.mrb[0].mxu0 %v248
        %v3978 = vpop.f32.mrb[0].mxu0
        %v3979 = vadd.f32 %v3674, %v3978
        %v3980 = vpop.f32.mrb[0].mxu0
        %3981 = vmatprep.mubr.f32.mxu0 %v273
        %3982 = vmatmul.mubr.f32.gmra.mrb[0].mxu0 %v272
        %v3983 = vpop.f32.mrb[0].mxu0
        %v3984 = vadd.f32 %v3679, %v3983
        %v3985 = vpop.f32.mrb[0].mxu0
        %3986 = vmatprep.mubr.f32.mxu0 %v297
        %3987 = vmatmul.mubr.f32.gmra.mrb[0].mxu0 %v296
        %v3988 = vpop.f32.mrb[0].mxu0
        %v3989 = vadd.f32 %v3684, %v3988
        %v3990 = vpop.f32.mrb[0].mxu0
        %3991 = vmatprep.mubr.f32.mxu0 %v321
        %3992 = vmatmul.mubr.f32.gmra.mrb[0].mxu0 %v320
        %v3993 = vpop.f32.mrb[0].mxu0
        %v3994 = vadd.f32 %v3689, %v3993
        %v3995 = vpop.f32.mrb[0].mxu0
        %3996 = vmatprep.mubr.f32.mxu0 %v345
        %3997 = vmatmul.mubr.f32.gmra.mrb[0].mxu0 %v344
        %v3998 = vpop.f32.mrb[0].mxu0
        %v3999 = vadd.f32 %v3694, %v3998
        %v4000 = vpop.f32.mrb[0].mxu0
        %4001 = vmatprep.mubr.f32.mxu0 %v369
        %4002 = vmatmul.mubr.f32.gmra.mrb[0].mxu0 %v368
        %v4003 = vpop.f32.mrb[0].mxu0
        %v4004 = vadd.f32 %v3699, %v4003
        %v4005 = vpop.f32.mrb[0].mxu0
        %4006 = vmatprep.mubr.f32.mxu0 %v393
        %4007 = vmatmul.mubr.f32.gmra.mrb[0].mxu0 %v392
        %v4008 = vpop.f32.mrb[0].mxu0
        %v4009 = vadd.f32 %v3704, %v4008
        %v4010 = vpop.f32.mrb[0].mxu0
        %4011 = vmatprep.mubr.f32.mxu0 %v417
        %4012 = vmatmul.mubr.f32.gmra.mrb[0].mxu0 %v416
        %v4013 = vpop.f32.mrb[0].mxu0
        %v4014 = vadd.f32 %v3709, %v4013
        %v4015 = vpop.f32.mrb[0].mxu0
        %4016 = vmatprep.mubr.f32.mxu0 %v441
        %4017 = vmatmul.mubr.f32.gmra.mrb[0].mxu0 %v440
        %v4018 = vpop.f32.mrb[0].mxu0
        %v4019 = vadd.f32 %v3714, %v4018
        %v4020 = vpop.f32.mrb[0].mxu0
        %4021 = vmatprep.mubr.f32.mxu0 %v465
        %4022 = vmatmul.mubr.f32.gmra.mrb[0].mxu0 %v464
        %v4023 = vpop.f32.mrb[0].mxu0
        %v4024 = vadd.f32 %v3719, %v4023
        %v4025 = vpop.f32.mrb[0].mxu0
        %4026 = vmatprep.mubr.f32.mxu0 %v489
        %4027 = vmatmul.mubr.f32.gmra.mrb[0].mxu0 %v488
        %v4028 = vpop.f32.mrb[0].mxu0
        %v4029 = vadd.f32 %v3724, %v4028
        %v4030 = vpop.f32.mrb[0].mxu0
        %4031 = vmatprep.mubr.f32.mxu0 %v513
        %4032 = vmatmul.mubr.f32.gmra.mrb[0].mxu0 %v512
        %v4033 = vpop.f32.mrb[0].mxu0
        %v4034 = vadd.f32 %v3729, %v4033
        %v4035 = vpop.f32.mrb[0].mxu0
        %4036 = vmatprep.mubr.f32.mxu0 %v537
        %4037 = vmatmul.mubr.f32.gmra.mrb[0].mxu0 %v536
        %v4038 = vpop.f32.mrb[0].mxu0
        %v4039 = vadd.f32 %v3734, %v4038
        %v4040 = vpop.f32.mrb[0].mxu0
        %4041 = vmatprep.mubr.f32.mxu0 %v561
        %4042 = vmatmul.mubr.f32.gmra.mrb[0].mxu0 %v560
        %v4043 = vpop.f32.mrb[0].mxu0
        %v4044 = vadd.f32 %v3739, %v4043
        %v4045 = vpop.f32.mrb[0].mxu0
        %4046 = vmatprep.mubr.f32.mxu0 %v585
        %4047 = vmatmul.mubr.f32.gmra.mrb[0].mxu0 %v584
        %v4048 = vpop.f32.mrb[0].mxu0
        %v4049 = vadd.f32 %v3744, %v4048
        %v4050 = vpop.f32.mrb[0].mxu0
        %4051 = vmatprep.mubr.f32.mxu0 %v609
        %4052 = vmatmul.mubr.f32.gmra.mrb[0].mxu0 %v608
        %v4053 = vpop.f32.mrb[0].mxu0
        %v4054 = vadd.f32 %v3749, %v4053
        %v4055 = vpop.f32.mrb[0].mxu0
        %4056 = vmatprep.mubr.f32.mxu0 %v633
        %4057 = vmatmul.mubr.f32.gmra.mrb[0].mxu0 %v632
        %v4058 = vpop.f32.mrb[0].mxu0
        %v4059 = vadd.f32 %v3754, %v4058
        %v4060 = vpop.f32.mrb[0].mxu0
        %4061 = vmatprep.mubr.f32.mxu0 %v657
        %4062 = vmatmul.mubr.f32.gmra.mrb[0].mxu0 %v656
        %v4063 = vpop.f32.mrb[0].mxu0
        %v4064 = vadd.f32 %v3759, %v4063
        %v4065 = vpop.f32.mrb[0].mxu0
        %4066 = vmatprep.mubr.f32.mxu0 %v681
        %4067 = vmatmul.mubr.f32.gmra.mrb[0].mxu0 %v680
        %v4068 = vpop.f32.mrb[0].mxu0
        %v4069 = vadd.f32 %v3764, %v4068
        %v4070 = vpop.f32.mrb[0].mxu0
        %4071 = vmatprep.mubr.f32.mxu0 %v705
        %4072 = vmatmul.mubr.f32.gmra.mrb[0].mxu0 %v704
        %v4073 = vpop.f32.mrb[0].mxu0
        %v4074 = vadd.f32 %v3769, %v4073
        %v4075 = vpop.f32.mrb[0].mxu0
        %4076 = vmatprep.mubr.f32.mxu0 %v729
        %4077 = vmatmul.mubr.f32.gmra.mrb[0].mxu0 %v728
        %v4078 = vpop.f32.mrb[0].mxu0
        %v4079 = vadd.f32 %v3774, %v4078
        %v4080 = vpop.f32.mrb[0].mxu0
        %4081 = vmatprep.mubr.f32.mxu0 %v753
        %4082 = vmatmul.mubr.f32.gmra.mrb[0].mxu0 %v752
        %v4083 = vpop.f32.mrb[0].mxu0
        %v4084 = vadd.f32 %v3779, %v4083
        %v4085 = vpop.f32.mrb[0].mxu0
        %4086 = vmatprep.mubr.f32.mxu0 %v777
        %4087 = vmatmul.mubr.f32.gmra.mrb[0].mxu0 %v776
        %v4088 = vpop.f32.mrb[0].mxu0
        %v4089 = vadd.f32 %v3784, %v4088
        %v4090 = vpop.f32.mrb[0].mxu0
        %4091 = vmatprep.mubr.f32.mxu0 %v801
        %4092 = vmatmul.mubr.f32.gmra.mrb[0].mxu0 %v800
        %v4093 = vpop.f32.mrb[0].mxu0
        %v4094 = vadd.f32 %v3789, %v4093
        %v4095 = vpop.f32.mrb[0].mxu0
        %4096 = vmatprep.mubr.f32.mxu0 %v825
        %4097 = vmatmul.mubr.f32.gmra.mrb[0].mxu0 %v824
        %v4098 = vpop.f32.mrb[0].mxu0
        %v4099 = vadd.f32 %v3794, %v4098
        %v4100 = vpop.f32.mrb[0].mxu0
        %4101 = vmatprep.mubr.f32.mxu0 %v849
        %4102 = vmatmul.mubr.f32.gmra.mrb[0].mxu0 %v848
        %v4103 = vpop.f32.mrb[0].mxu0
        %v4104 = vadd.f32 %v3799, %v4103
        %v4105 = vpop.f32.mrb[0].mxu0
        %4106 = vmatprep.mubr.f32.mxu0 %v873
        %4107 = vmatmul.mubr.f32.gmra.mrb[0].mxu0 %v872
        %v4108 = vpop.f32.mrb[0].mxu0
        %v4109 = vadd.f32 %v3804, %v4108
        %v4110 = vpop.f32.mrb[0].mxu0
        %4111 = vmatprep.mubr.f32.mxu0 %v897
        %4112 = vmatmul.mubr.f32.gmra.mrb[0].mxu0 %v896
        %v4113 = vpop.f32.mrb[0].mxu0
        %v4114 = vadd.f32 %v3809, %v4113
        %v4115 = vpop.f32.mrb[0].mxu0
        %4116 = vmatprep.mubr.f32.mxu0 %v921
        %4117 = vmatmul.mubr.f32.gmra.mrb[0].mxu0 %v920
        %v4118 = vpop.f32.mrb[0].mxu0
        %v4119 = vadd.f32 %v3814, %v4118
        %v4120 = vpop.f32.mrb[0].mxu0
        %4121 = vmatprep.mubr.f32.mxu0 %v945
        %4122 = vmatmul.mubr.f32.gmra.mrb[0].mxu0 %v944
        %v4123 = vpop.f32.mrb[0].mxu0
        %v4124 = vadd.f32 %v3819, %v4123
        %v4125 = vpop.f32.mrb[0].mxu0
        %4126 = vmatprep.mubr.f32.mxu0 %v969
        %4127 = vmatmul.mubr.f32.gmra.mrb[0].mxu0 %v968
        %v4128 = vpop.f32.mrb[0].mxu0
        %v4129 = vadd.f32 %v3824, %v4128
        %v4130 = vpop.f32.mrb[0].mxu0
        %4131 = vmatprep.mubr.f32.mxu0 %v993
        %4132 = vmatmul.mubr.f32.gmra.mrb[0].mxu0 %v992
        %v4133 = vpop.f32.mrb[0].mxu0
        %v4134 = vadd.f32 %v3829, %v4133
        %v4135 = vpop.f32.mrb[0].mxu0
        %4136 = vmatprep.mubr.f32.mxu0 %v1017
        %4137 = vmatmul.mubr.f32.gmra.mrb[0].mxu0 %v1016
        %v4138 = vpop.f32.mrb[0].mxu0
        %v4139 = vadd.f32 %v3834, %v4138
        %v4140 = vpop.f32.mrb[0].mxu0
        %4141 = vmatprep.mubr.f32.mxu0 %v1041
        %4142 = vmatmul.mubr.f32.gmra.mrb[0].mxu0 %v1040
        %v4143 = vpop.f32.mrb[0].mxu0
        %v4144 = vadd.f32 %v3839, %v4143
        %v4145 = vpop.f32.mrb[0].mxu0
        %4146 = vmatprep.mubr.f32.mxu0 %v1065
        %4147 = vmatmul.mubr.f32.gmra.mrb[0].mxu0 %v1064
        %v4148 = vpop.f32.mrb[0].mxu0
        %v4149 = vadd.f32 %v3844, %v4148
        %v4150 = vpop.f32.mrb[0].mxu0
        %4151 = vmatprep.mubr.f32.mxu0 %v1089
        %4152 = vmatmul.mubr.f32.gmra.mrb[0].mxu0 %v1088
        %v4153 = vpop.f32.mrb[0].mxu0
        %v4154 = vadd.f32 %v3849, %v4153
        %v4155 = vpop.f32.mrb[0].mxu0
        %4156 = vmatprep.mubr.f32.mxu0 %v1113
        %4157 = vmatmul.mubr.f32.gmra.mrb[0].mxu0 %v1112
        %v4158 = vpop.f32.mrb[0].mxu0
        %v4159 = vadd.f32 %v3854, %v4158
        %v4160 = vpop.f32.mrb[0].mxu0
        %4161 = vmatprep.mubr.f32.mxu0 %v1137
        %4162 = vmatmul.mubr.f32.gmra.mrb[0].mxu0 %v1136
        %v4163 = vpop.f32.mrb[0].mxu0
        %v4164 = vadd.f32 %v3859, %v4163
        %v4165 = vpop.f32.mrb[0].mxu0
        %4166 = vmatprep.mubr.f32.mxu0 %v1161
        %4167 = vmatmul.mubr.f32.gmra.mrb[0].mxu0 %v1160
        %v4168 = vpop.f32.mrb[0].mxu0
        %v4169 = vadd.f32 %v3864, %v4168
        %v4170 = vpop.f32.mrb[0].mxu0
        %4171 = vmatprep.mubr.f32.mxu0 %v1185
        %4172 = vmatmul.mubr.f32.gmra.mrb[0].mxu0 %v1184
        %v4173 = vpop.f32.mrb[0].mxu0
        %v4174 = vadd.f32 %v3869, %v4173
        %v4175 = vpop.f32.mrb[0].mxu0
        %4176 = vmatprep.mubr.f32.mxu0 %v1209
        %4177 = vmatmul.mubr.f32.gmra.mrb[0].mxu0 %v1208
        %v4178 = vpop.f32.mrb[0].mxu0
        %v4179 = vadd.f32 %v3874, %v4178
        %v4180 = vpop.f32.mrb[0].mxu0
        %4181 = vmatprep.mubr.f32.mxu0 %v1233
        %4182 = vmatmul.mubr.f32.gmra.mrb[0].mxu0 %v1232
        %v4183 = vpop.f32.mrb[0].mxu0
        %v4184 = vadd.f32 %v3879, %v4183
        %v4185 = vpop.f32.mrb[0].mxu0
        %4186 = vmatprep.mubr.f32.mxu0 %v1257
        %4187 = vmatmul.mubr.f32.gmra.mrb[0].mxu0 %v1256
        %v4188 = vpop.f32.mrb[0].mxu0
        %v4189 = vadd.f32 %v3884, %v4188
        %v4190 = vpop.f32.mrb[0].mxu0
        %4191 = vmatprep.mubr.f32.mxu0 %v1281
        %4192 = vmatmul.mubr.f32.gmra.mrb[0].mxu0 %v1280
        %v4193 = vpop.f32.mrb[0].mxu0
        %v4194 = vadd.f32 %v3889, %v4193
        %v4195 = vpop.f32.mrb[0].mxu0
        %4196 = vmatprep.mubr.f32.mxu0 %v1305
        %4197 = vmatmul.mubr.f32.gmra.mrb[0].mxu0 %v1304
        %v4198 = vpop.f32.mrb[0].mxu0
        %v4199 = vadd.f32 %v3894, %v4198
        %v4200 = vpop.f32.mrb[0].mxu0
        %4201 = vmatprep.mubr.f32.mxu0 %v1329
        %4202 = vmatmul.mubr.f32.gmra.mrb[0].mxu0 %v1328
        %v4203 = vpop.f32.mrb[0].mxu0
        %v4204 = vadd.f32 %v3899, %v4203
        %v4205 = vpop.f32.mrb[0].mxu0
        %4206 = vmatprep.mubr.f32.mxu0 %v1353
        %4207 = vmatmul.mubr.f32.gmra.mrb[0].mxu0 %v1352
        %v4208 = vpop.f32.mrb[0].mxu0
        %v4209 = vadd.f32 %v3904, %v4208
        %v4210 = vpop.f32.mrb[0].mxu0
        %4211 = vmatprep.mubr.f32.mxu0 %v1377
        %4212 = vmatmul.mubr.f32.gmra.mrb[0].mxu0 %v1376
        %v4213 = vpop.f32.mrb[0].mxu0
        %v4214 = vadd.f32 %v3909, %v4213
        %v4215 = vpop.f32.mrb[0].mxu0
        %4216 = vdwg.mxu0
        %4217 = vmatprep.subr.mxu0 0.0
        %4218 = vmatpush1.msra.mxu0 %v1642
        %4219 = vmatprep.subr.mxu0 0.0
        %4220 = vmatpush1.msra.mxu0 %v1643
        %4221 = vmatprep.subr.mxu0 0.0
        %4222 = vmatpush1.msra.mxu0 %v1644
        %4223 = vmatprep.subr.mxu0 0.0
        %4224 = vmatpush1.msra.mxu0 %v1645
        %4225 = vmatprep.subr.mxu0 0.0
        %4226 = vmatpush1.msra.mxu0 %v1646
        %4227 = vmatprep.subr.mxu0 0.0
        %4228 = vmatpush1.msra.mxu0 %v1647
        %4229 = vmatprep.subr.mxu0 0.0
        %4230 = vmatpush1.msra.mxu0 %v1648
        %4231 = vmatprep.subr.mxu0 0.0
        %4232 = vmatpush1.msra.mxu0 %v1649
        %4233 = vmatprep.subr.mxu0 0.0
        %4234 = vmatpush1.msra.mxu0 %v1650
        %4235 = vmatprep.subr.mxu0 0.0
        %4236 = vmatpush1.msra.mxu0 %v1651
        %4237 = vmatprep.subr.mxu0 0.0
        %4238 = vmatpush1.msra.mxu0 %v1652
        %4239 = vmatprep.subr.mxu0 0.0
        %4240 = vmatpush1.msra.mxu0 %v1653
        %4241 = vmatprep.subr.mxu0 0.0
        %4242 = vmatpush1.msra.mxu0 %v1654
        %4243 = vmatprep.subr.mxu0 0.0
        %4244 = vmatpush1.msra.mxu0 %v1655
        %4245 = vmatprep.subr.mxu0 0.0
        %4246 = vmatpush1.msra.mxu0 %v1656
        %4247 = vmatprep.subr.mxu0 0.0
        %4248 = vmatpush1.msra.mxu0 %v1657
        %4249 = vmatprep.subr.mxu0 0.0
        %4250 = vmatpush1.msra.mxu0 %v1658
        %4251 = vmatprep.subr.mxu0 0.0
        %4252 = vmatpush1.msra.mxu0 %v1659
        %4253 = vmatprep.subr.mxu0 0.0
        %4254 = vmatpush1.msra.mxu0 %v1660
        %4255 = vmatprep.subr.mxu0 0.0
        %4256 = vmatpush1.msra.mxu0 %v1661
        %4257 = vmatprep.subr.mxu0 0.0
        %4258 = vmatpush1.msra.mxu0 %v1662
        %4259 = vmatprep.subr.mxu0 0.0
        %4260 = vmatpush1.msra.mxu0 %v1663
        %4261 = vmatprep.subr.mxu0 0.0
        %4262 = vmatpush1.msra.mxu0 %v1664
        %4263 = vmatprep.subr.mxu0 0.0
        %4264 = vmatpush1.msra.mxu0 %v1665
        %4265 = vmatprep.subr.mxu0 0.0
        %4266 = vmatpush1.msra.mxu0 %v1666
        %4267 = vmatprep.subr.mxu0 0.0
        %4268 = vmatpush1.msra.mxu0 %v1667
        %4269 = vmatprep.subr.mxu0 0.0
        %4270 = vmatpush1.msra.mxu0 %v1668
        %4271 = vmatprep.subr.mxu0 0.0
        %4272 = vmatpush1.msra.mxu0 %v1669
        %4273 = vmatprep.subr.mxu0 0.0
        %4274 = vmatpush1.msra.mxu0 %v1670
        %4275 = vmatprep.subr.mxu0 0.0
        %4276 = vmatpush1.msra.mxu0 %v1671
        %4277 = vmatprep.subr.mxu0 0.0
        %4278 = vmatpush1.msra.mxu0 %v1672
        %4279 = vmatprep.subr.mxu0 0.0
        %4280 = vmatpush1.msra.mxu0 %v1673
        %4281 = vmatprep.mubr.f32.mxu0 %v251
        %4282 = vmatmul.mubr.f32.gmra.mrb[0].mxu0 %v250
        %v4283 = vpop.f32.mrb[0].mxu0
        %v4284 = vadd.f32 %v3979, %v4283
        %v4285 = vpop.f32.mrb[0].mxu0
        %4286 = vmatprep.mubr.f32.mxu0 %v275
        %4287 = vmatmul.mubr.f32.gmra.mrb[0].mxu0 %v274
        %v4288 = vpop.f32.mrb[0].mxu0
        %v4289 = vadd.f32 %v3984, %v4288
        %v4290 = vpop.f32.mrb[0].mxu0
        %4291 = vmatprep.mubr.f32.mxu0 %v299
        %4292 = vmatmul.mubr.f32.gmra.mrb[0].mxu0 %v298
        %v4293 = vpop.f32.mrb[0].mxu0
        %v4294 = vadd.f32 %v3989, %v4293
        %v4295 = vpop.f32.mrb[0].mxu0
        %4296 = vmatprep.mubr.f32.mxu0 %v323
        %4297 = vmatmul.mubr.f32.gmra.mrb[0].mxu0 %v322
        %v4298 = vpop.f32.mrb[0].mxu0
        %v4299 = vadd.f32 %v3994, %v4298
        %v4300 = vpop.f32.mrb[0].mxu0
        %4301 = vmatprep.mubr.f32.mxu0 %v347
        %4302 = vmatmul.mubr.f32.gmra.mrb[0].mxu0 %v346
        %v4303 = vpop.f32.mrb[0].mxu0
        %v4304 = vadd.f32 %v3999, %v4303
        %v4305 = vpop.f32.mrb[0].mxu0
        %4306 = vmatprep.mubr.f32.mxu0 %v371
        %4307 = vmatmul.mubr.f32.gmra.mrb[0].mxu0 %v370
        %v4308 = vpop.f32.mrb[0].mxu0
        %v4309 = vadd.f32 %v4004, %v4308
        %v4310 = vpop.f32.mrb[0].mxu0
        %4311 = vmatprep.mubr.f32.mxu0 %v395
        %4312 = vmatmul.mubr.f32.gmra.mrb[0].mxu0 %v394
        %v4313 = vpop.f32.mrb[0].mxu0
        %v4314 = vadd.f32 %v4009, %v4313
        %v4315 = vpop.f32.mrb[0].mxu0
        %4316 = vmatprep.mubr.f32.mxu0 %v419
        %4317 = vmatmul.mubr.f32.gmra.mrb[0].mxu0 %v418
        %v4318 = vpop.f32.mrb[0].mxu0
        %v4319 = vadd.f32 %v4014, %v4318
        %v4320 = vpop.f32.mrb[0].mxu0
        %4321 = vmatprep.mubr.f32.mxu0 %v443
        %4322 = vmatmul.mubr.f32.gmra.mrb[0].mxu0 %v442
        %v4323 = vpop.f32.mrb[0].mxu0
        %v4324 = vadd.f32 %v4019, %v4323
        %v4325 = vpop.f32.mrb[0].mxu0
        %4326 = vmatprep.mubr.f32.mxu0 %v467
        %4327 = vmatmul.mubr.f32.gmra.mrb[0].mxu0 %v466
        %v4328 = vpop.f32.mrb[0].mxu0
        %v4329 = vadd.f32 %v4024, %v4328
        %v4330 = vpop.f32.mrb[0].mxu0
        %4331 = vmatprep.mubr.f32.mxu0 %v491
        %4332 = vmatmul.mubr.f32.gmra.mrb[0].mxu0 %v490
        %v4333 = vpop.f32.mrb[0].mxu0
        %v4334 = vadd.f32 %v4029, %v4333
        %v4335 = vpop.f32.mrb[0].mxu0
        %4336 = vmatprep.mubr.f32.mxu0 %v515
        %4337 = vmatmul.mubr.f32.gmra.mrb[0].mxu0 %v514
        %v4338 = vpop.f32.mrb[0].mxu0
        %v4339 = vadd.f32 %v4034, %v4338
        %v4340 = vpop.f32.mrb[0].mxu0
        %4341 = vmatprep.mubr.f32.mxu0 %v539
        %4342 = vmatmul.mubr.f32.gmra.mrb[0].mxu0 %v538
        %v4343 = vpop.f32.mrb[0].mxu0
        %v4344 = vadd.f32 %v4039, %v4343
        %v4345 = vpop.f32.mrb[0].mxu0
        %4346 = vmatprep.mubr.f32.mxu0 %v563
        %4347 = vmatmul.mubr.f32.gmra.mrb[0].mxu0 %v562
        %v4348 = vpop.f32.mrb[0].mxu0
        %v4349 = vadd.f32 %v4044, %v4348
        %v4350 = vpop.f32.mrb[0].mxu0
        %4351 = vmatprep.mubr.f32.mxu0 %v587
        %4352 = vmatmul.mubr.f32.gmra.mrb[0].mxu0 %v586
        %v4353 = vpop.f32.mrb[0].mxu0
        %v4354 = vadd.f32 %v4049, %v4353
        %v4355 = vpop.f32.mrb[0].mxu0
        %4356 = vmatprep.mubr.f32.mxu0 %v611
        %4357 = vmatmul.mubr.f32.gmra.mrb[0].mxu0 %v610
        %v4358 = vpop.f32.mrb[0].mxu0
        %v4359 = vadd.f32 %v4054, %v4358
        %v4360 = vpop.f32.mrb[0].mxu0
        %4361 = vmatprep.mubr.f32.mxu0 %v635
        %4362 = vmatmul.mubr.f32.gmra.mrb[0].mxu0 %v634
        %v4363 = vpop.f32.mrb[0].mxu0
        %v4364 = vadd.f32 %v4059, %v4363
        %v4365 = vpop.f32.mrb[0].mxu0
        %4366 = vmatprep.mubr.f32.mxu0 %v659
        %4367 = vmatmul.mubr.f32.gmra.mrb[0].mxu0 %v658
        %v4368 = vpop.f32.mrb[0].mxu0
        %v4369 = vadd.f32 %v4064, %v4368
        %v4370 = vpop.f32.mrb[0].mxu0
        %4371 = vmatprep.mubr.f32.mxu0 %v683
        %4372 = vmatmul.mubr.f32.gmra.mrb[0].mxu0 %v682
        %v4373 = vpop.f32.mrb[0].mxu0
        %v4374 = vadd.f32 %v4069, %v4373
        %v4375 = vpop.f32.mrb[0].mxu0
        %4376 = vmatprep.mubr.f32.mxu0 %v707
        %4377 = vmatmul.mubr.f32.gmra.mrb[0].mxu0 %v706
        %v4378 = vpop.f32.mrb[0].mxu0
        %v4379 = vadd.f32 %v4074, %v4378
        %v4380 = vpop.f32.mrb[0].mxu0
        %4381 = vmatprep.mubr.f32.mxu0 %v731
        %4382 = vmatmul.mubr.f32.gmra.mrb[0].mxu0 %v730
        %v4383 = vpop.f32.mrb[0].mxu0
        %v4384 = vadd.f32 %v4079, %v4383
        %v4385 = vpop.f32.mrb[0].mxu0
        %4386 = vmatprep.mubr.f32.mxu0 %v755
        %4387 = vmatmul.mubr.f32.gmra.mrb[0].mxu0 %v754
        %v4388 = vpop.f32.mrb[0].mxu0
        %v4389 = vadd.f32 %v4084, %v4388
        %v4390 = vpop.f32.mrb[0].mxu0
        %4391 = vmatprep.mubr.f32.mxu0 %v779
        %4392 = vmatmul.mubr.f32.gmra.mrb[0].mxu0 %v778
        %v4393 = vpop.f32.mrb[0].mxu0
        %v4394 = vadd.f32 %v4089, %v4393
        %v4395 = vpop.f32.mrb[0].mxu0
        %4396 = vmatprep.mubr.f32.mxu0 %v803
        %4397 = vmatmul.mubr.f32.gmra.mrb[0].mxu0 %v802
        %v4398 = vpop.f32.mrb[0].mxu0
        %v4399 = vadd.f32 %v4094, %v4398
        %v4400 = vpop.f32.mrb[0].mxu0
        %4401 = vmatprep.mubr.f32.mxu0 %v827
        %4402 = vmatmul.mubr.f32.gmra.mrb[0].mxu0 %v826
        %v4403 = vpop.f32.mrb[0].mxu0
        %v4404 = vadd.f32 %v4099, %v4403
        %v4405 = vpop.f32.mrb[0].mxu0
        %4406 = vmatprep.mubr.f32.mxu0 %v851
        %4407 = vmatmul.mubr.f32.gmra.mrb[0].mxu0 %v850
        %v4408 = vpop.f32.mrb[0].mxu0
        %v4409 = vadd.f32 %v4104, %v4408
        %v4410 = vpop.f32.mrb[0].mxu0
        %4411 = vmatprep.mubr.f32.mxu0 %v875
        %4412 = vmatmul.mubr.f32.gmra.mrb[0].mxu0 %v874
        %v4413 = vpop.f32.mrb[0].mxu0
        %v4414 = vadd.f32 %v4109, %v4413
        %v4415 = vpop.f32.mrb[0].mxu0
        %4416 = vmatprep.mubr.f32.mxu0 %v899
        %4417 = vmatmul.mubr.f32.gmra.mrb[0].mxu0 %v898
        %v4418 = vpop.f32.mrb[0].mxu0
        %v4419 = vadd.f32 %v4114, %v4418
        %v4420 = vpop.f32.mrb[0].mxu0
        %4421 = vmatprep.mubr.f32.mxu0 %v923
        %4422 = vmatmul.mubr.f32.gmra.mrb[0].mxu0 %v922
        %v4423 = vpop.f32.mrb[0].mxu0
        %v4424 = vadd.f32 %v4119, %v4423
        %v4425 = vpop.f32.mrb[0].mxu0
        %4426 = vmatprep.mubr.f32.mxu0 %v947
        %4427 = vmatmul.mubr.f32.gmra.mrb[0].mxu0 %v946
        %v4428 = vpop.f32.mrb[0].mxu0
        %v4429 = vadd.f32 %v4124, %v4428
        %v4430 = vpop.f32.mrb[0].mxu0
        %4431 = vmatprep.mubr.f32.mxu0 %v971
        %4432 = vmatmul.mubr.f32.gmra.mrb[0].mxu0 %v970
        %v4433 = vpop.f32.mrb[0].mxu0
        %v4434 = vadd.f32 %v4129, %v4433
        %v4435 = vpop.f32.mrb[0].mxu0
        %4436 = vmatprep.mubr.f32.mxu0 %v995
        %4437 = vmatmul.mubr.f32.gmra.mrb[0].mxu0 %v994
        %v4438 = vpop.f32.mrb[0].mxu0
        %v4439 = vadd.f32 %v4134, %v4438
        %v4440 = vpop.f32.mrb[0].mxu0
        %4441 = vmatprep.mubr.f32.mxu0 %v1019
        %4442 = vmatmul.mubr.f32.gmra.mrb[0].mxu0 %v1018
        %v4443 = vpop.f32.mrb[0].mxu0
        %v4444 = vadd.f32 %v4139, %v4443
        %v4445 = vpop.f32.mrb[0].mxu0
        %4446 = vmatprep.mubr.f32.mxu0 %v1043
        %4447 = vmatmul.mubr.f32.gmra.mrb[0].mxu0 %v1042
        %v4448 = vpop.f32.mrb[0].mxu0
        %v4449 = vadd.f32 %v4144, %v4448
        %v4450 = vpop.f32.mrb[0].mxu0
        %4451 = vmatprep.mubr.f32.mxu0 %v1067
        %4452 = vmatmul.mubr.f32.gmra.mrb[0].mxu0 %v1066
        %v4453 = vpop.f32.mrb[0].mxu0
        %v4454 = vadd.f32 %v4149, %v4453
        %v4455 = vpop.f32.mrb[0].mxu0
        %4456 = vmatprep.mubr.f32.mxu0 %v1091
        %4457 = vmatmul.mubr.f32.gmra.mrb[0].mxu0 %v1090
        %v4458 = vpop.f32.mrb[0].mxu0
        %v4459 = vadd.f32 %v4154, %v4458
        %v4460 = vpop.f32.mrb[0].mxu0
        %4461 = vmatprep.mubr.f32.mxu0 %v1115
        %4462 = vmatmul.mubr.f32.gmra.mrb[0].mxu0 %v1114
        %v4463 = vpop.f32.mrb[0].mxu0
        %v4464 = vadd.f32 %v4159, %v4463
        %v4465 = vpop.f32.mrb[0].mxu0
        %4466 = vmatprep.mubr.f32.mxu0 %v1139
        %4467 = vmatmul.mubr.f32.gmra.mrb[0].mxu0 %v1138
        %v4468 = vpop.f32.mrb[0].mxu0
        %v4469 = vadd.f32 %v4164, %v4468
        %v4470 = vpop.f32.mrb[0].mxu0
        %4471 = vmatprep.mubr.f32.mxu0 %v1163
        %4472 = vmatmul.mubr.f32.gmra.mrb[0].mxu0 %v1162
        %v4473 = vpop.f32.mrb[0].mxu0
        %v4474 = vadd.f32 %v4169, %v4473
        %v4475 = vpop.f32.mrb[0].mxu0
        %4476 = vmatprep.mubr.f32.mxu0 %v1187
        %4477 = vmatmul.mubr.f32.gmra.mrb[0].mxu0 %v1186
        %v4478 = vpop.f32.mrb[0].mxu0
        %v4479 = vadd.f32 %v4174, %v4478
        %v4480 = vpop.f32.mrb[0].mxu0
        %4481 = vmatprep.mubr.f32.mxu0 %v1211
        %4482 = vmatmul.mubr.f32.gmra.mrb[0].mxu0 %v1210
        %v4483 = vpop.f32.mrb[0].mxu0
        %v4484 = vadd.f32 %v4179, %v4483
        %v4485 = vpop.f32.mrb[0].mxu0
        %4486 = vmatprep.mubr.f32.mxu0 %v1235
        %4487 = vmatmul.mubr.f32.gmra.mrb[0].mxu0 %v1234
        %v4488 = vpop.f32.mrb[0].mxu0
        %v4489 = vadd.f32 %v4184, %v4488
        %v4490 = vpop.f32.mrb[0].mxu0
        %4491 = vmatprep.mubr.f32.mxu0 %v1259
        %4492 = vmatmul.mubr.f32.gmra.mrb[0].mxu0 %v1258
        %v4493 = vpop.f32.mrb[0].mxu0
        %v4494 = vadd.f32 %v4189, %v4493
        %v4495 = vpop.f32.mrb[0].mxu0
        %4496 = vmatprep.mubr.f32.mxu0 %v1283
        %4497 = vmatmul.mubr.f32.gmra.mrb[0].mxu0 %v1282
        %v4498 = vpop.f32.mrb[0].mxu0
        %v4499 = vadd.f32 %v4194, %v4498
        %v4500 = vpop.f32.mrb[0].mxu0
        %4501 = vmatprep.mubr.f32.mxu0 %v1307
        %4502 = vmatmul.mubr.f32.gmra.mrb[0].mxu0 %v1306
        %v4503 = vpop.f32.mrb[0].mxu0
        %v4504 = vadd.f32 %v4199, %v4503
        %v4505 = vpop.f32.mrb[0].mxu0
        %4506 = vmatprep.mubr.f32.mxu0 %v1331
        %4507 = vmatmul.mubr.f32.gmra.mrb[0].mxu0 %v1330
        %v4508 = vpop.f32.mrb[0].mxu0
        %v4509 = vadd.f32 %v4204, %v4508
        %v4510 = vpop.f32.mrb[0].mxu0
        %4511 = vmatprep.mubr.f32.mxu0 %v1355
        %4512 = vmatmul.mubr.f32.gmra.mrb[0].mxu0 %v1354
        %v4513 = vpop.f32.mrb[0].mxu0
        %v4514 = vadd.f32 %v4209, %v4513
        %v4515 = vpop.f32.mrb[0].mxu0
        %4516 = vmatprep.mubr.f32.mxu0 %v1379
        %4517 = vmatmul.mubr.f32.gmra.mrb[0].mxu0 %v1378
        %v4518 = vpop.f32.mrb[0].mxu0
        %v4519 = vadd.f32 %v4214, %v4518
        %v4520 = vpop.f32.mrb[0].mxu0
        %4521 = vdwg.mxu0
        %4522 = vmatprep.subr.mxu0 0.0
        %4523 = vmatpush1.msra.mxu0 %v1674
        %4524 = vmatprep.subr.mxu0 0.0
        %4525 = vmatpush1.msra.mxu0 %v1675
        %4526 = vmatprep.subr.mxu0 0.0
        %4527 = vmatpush1.msra.mxu0 %v1676
        %4528 = vmatprep.subr.mxu0 0.0
        %4529 = vmatpush1.msra.mxu0 %v1677
        %4530 = vmatprep.subr.mxu0 0.0
        %4531 = vmatpush1.msra.mxu0 %v1678
        %4532 = vmatprep.subr.mxu0 0.0
        %4533 = vmatpush1.msra.mxu0 %v1679
        %4534 = vmatprep.subr.mxu0 0.0
        %4535 = vmatpush1.msra.mxu0 %v1680
        %4536 = vmatprep.subr.mxu0 0.0
        %4537 = vmatpush1.msra.mxu0 %v1681
        %4538 = vmatprep.subr.mxu0 0.0
        %4539 = vmatpush1.msra.mxu0 %v1682
        %4540 = vmatprep.subr.mxu0 0.0
        %4541 = vmatpush1.msra.mxu0 %v1683
        %4542 = vmatprep.subr.mxu0 0.0
        %4543 = vmatpush1.msra.mxu0 %v1684
        %4544 = vmatprep.subr.mxu0 0.0
        %4545 = vmatpush1.msra.mxu0 %v1685
        %4546 = vmatprep.subr.mxu0 0.0
        %4547 = vmatpush1.msra.mxu0 %v1686
        %4548 = vmatprep.subr.mxu0 0.0
        %4549 = vmatpush1.msra.mxu0 %v1687
        %4550 = vmatprep.subr.mxu0 0.0
        %4551 = vmatpush1.msra.mxu0 %v1688
        %4552 = vmatprep.subr.mxu0 0.0
        %4553 = vmatpush1.msra.mxu0 %v1689
        %4554 = vmatprep.subr.mxu0 0.0
        %4555 = vmatpush1.msra.mxu0 %v1690
        %4556 = vmatprep.subr.mxu0 0.0
        %4557 = vmatpush1.msra.mxu0 %v1691
        %4558 = vmatprep.subr.mxu0 0.0
        %4559 = vmatpush1.msra.mxu0 %v1692
        %4560 = vmatprep.subr.mxu0 0.0
        %4561 = vmatpush1.msra.mxu0 %v1693
        %4562 = vmatprep.subr.mxu0 0.0
        %4563 = vmatpush1.msra.mxu0 %v1694
        %4564 = vmatprep.subr.mxu0 0.0
        %4565 = vmatpush1.msra.mxu0 %v1695
        %4566 = vmatprep.subr.mxu0 0.0
        %4567 = vmatpush1.msra.mxu0 %v1696
        %4568 = vmatprep.subr.mxu0 0.0
        %4569 = vmatpush1.msra.mxu0 %v1697
        %4570 = vmatprep.subr.mxu0 0.0
        %4571 = vmatpush1.msra.mxu0 %v1698
        %4572 = vmatprep.subr.mxu0 0.0
        %4573 = vmatpush1.msra.mxu0 %v1699
        %4574 = vmatprep.subr.mxu0 0.0
        %4575 = vmatpush1.msra.mxu0 %v1700
        %4576 = vmatprep.subr.mxu0 0.0
        %4577 = vmatpush1.msra.mxu0 %v1701
        %4578 = vmatprep.subr.mxu0 0.0
        %4579 = vmatpush1.msra.mxu0 %v1702
        %4580 = vmatprep.subr.mxu0 0.0
        %4581 = vmatpush1.msra.mxu0 %v1703
        %4582 = vmatprep.subr.mxu0 0.0
        %4583 = vmatpush1.msra.mxu0 %v1704
        %4584 = vmatprep.subr.mxu0 0.0
        %4585 = vmatpush1.msra.mxu0 %v1705
        %4586 = vmatprep.mubr.f32.mxu0 %v253
        %4587 = vmatmul.mubr.f32.gmra.mrb[0].mxu0 %v252
        %v4588 = vpop.f32.mrb[0].mxu0
        %v4589 = vadd.f32 %v4284, %v4588
        %v4590 = vpop.f32.mrb[0].mxu0
        %4591 = vmatprep.mubr.f32.mxu0 %v277
        %4592 = vmatmul.mubr.f32.gmra.mrb[0].mxu0 %v276
        %v4593 = vpop.f32.mrb[0].mxu0
        %v4594 = vadd.f32 %v4289, %v4593
        %v4595 = vpop.f32.mrb[0].mxu0
        %4596 = vmatprep.mubr.f32.mxu0 %v301
        %4597 = vmatmul.mubr.f32.gmra.mrb[0].mxu0 %v300
        %v4598 = vpop.f32.mrb[0].mxu0
        %v4599 = vadd.f32 %v4294, %v4598
        %v4600 = vpop.f32.mrb[0].mxu0
        %4601 = vmatprep.mubr.f32.mxu0 %v325
        %4602 = vmatmul.mubr.f32.gmra.mrb[0].mxu0 %v324
        %v4603 = vpop.f32.mrb[0].mxu0
        %v4604 = vadd.f32 %v4299, %v4603
        %v4605 = vpop.f32.mrb[0].mxu0
        %4606 = vmatprep.mubr.f32.mxu0 %v349
        %4607 = vmatmul.mubr.f32.gmra.mrb[0].mxu0 %v348
        %v4608 = vpop.f32.mrb[0].mxu0
        %v4609 = vadd.f32 %v4304, %v4608
        %v4610 = vpop.f32.mrb[0].mxu0
        %4611 = vmatprep.mubr.f32.mxu0 %v373
        %4612 = vmatmul.mubr.f32.gmra.mrb[0].mxu0 %v372
        %v4613 = vpop.f32.mrb[0].mxu0
        %v4614 = vadd.f32 %v4309, %v4613
        %v4615 = vpop.f32.mrb[0].mxu0
        %4616 = vmatprep.mubr.f32.mxu0 %v397
        %4617 = vmatmul.mubr.f32.gmra.mrb[0].mxu0 %v396
        %v4618 = vpop.f32.mrb[0].mxu0
        %v4619 = vadd.f32 %v4314, %v4618
        %v4620 = vpop.f32.mrb[0].mxu0
        %4621 = vmatprep.mubr.f32.mxu0 %v421
        %4622 = vmatmul.mubr.f32.gmra.mrb[0].mxu0 %v420
        %v4623 = vpop.f32.mrb[0].mxu0
        %v4624 = vadd.f32 %v4319, %v4623
        %v4625 = vpop.f32.mrb[0].mxu0
        %4626 = vmatprep.mubr.f32.mxu0 %v445
        %4627 = vmatmul.mubr.f32.gmra.mrb[0].mxu0 %v444
        %v4628 = vpop.f32.mrb[0].mxu0
        %v4629 = vadd.f32 %v4324, %v4628
        %v4630 = vpop.f32.mrb[0].mxu0
        %4631 = vmatprep.mubr.f32.mxu0 %v469
        %4632 = vmatmul.mubr.f32.gmra.mrb[0].mxu0 %v468
        %v4633 = vpop.f32.mrb[0].mxu0
        %v4634 = vadd.f32 %v4329, %v4633
        %v4635 = vpop.f32.mrb[0].mxu0
        %4636 = vmatprep.mubr.f32.mxu0 %v493
        %4637 = vmatmul.mubr.f32.gmra.mrb[0].mxu0 %v492
        %v4638 = vpop.f32.mrb[0].mxu0
        %v4639 = vadd.f32 %v4334, %v4638
        %v4640 = vpop.f32.mrb[0].mxu0
        %4641 = vmatprep.mubr.f32.mxu0 %v517
        %4642 = vmatmul.mubr.f32.gmra.mrb[0].mxu0 %v516
        %v4643 = vpop.f32.mrb[0].mxu0
        %v4644 = vadd.f32 %v4339, %v4643
        %v4645 = vpop.f32.mrb[0].mxu0
        %4646 = vmatprep.mubr.f32.mxu0 %v541
        %4647 = vmatmul.mubr.f32.gmra.mrb[0].mxu0 %v540
        %v4648 = vpop.f32.mrb[0].mxu0
        %v4649 = vadd.f32 %v4344, %v4648
        %v4650 = vpop.f32.mrb[0].mxu0
        %4651 = vmatprep.mubr.f32.mxu0 %v565
        %4652 = vmatmul.mubr.f32.gmra.mrb[0].mxu0 %v564
        %v4653 = vpop.f32.mrb[0].mxu0
        %v4654 = vadd.f32 %v4349, %v4653
        %v4655 = vpop.f32.mrb[0].mxu0
        %4656 = vmatprep.mubr.f32.mxu0 %v589
        %4657 = vmatmul.mubr.f32.gmra.mrb[0].mxu0 %v588
        %v4658 = vpop.f32.mrb[0].mxu0
        %v4659 = vadd.f32 %v4354, %v4658
        %v4660 = vpop.f32.mrb[0].mxu0
        %4661 = vmatprep.mubr.f32.mxu0 %v613
        %4662 = vmatmul.mubr.f32.gmra.mrb[0].mxu0 %v612
        %v4663 = vpop.f32.mrb[0].mxu0
        %v4664 = vadd.f32 %v4359, %v4663
        %v4665 = vpop.f32.mrb[0].mxu0
        %4666 = vmatprep.mubr.f32.mxu0 %v637
        %4667 = vmatmul.mubr.f32.gmra.mrb[0].mxu0 %v636
        %v4668 = vpop.f32.mrb[0].mxu0
        %v4669 = vadd.f32 %v4364, %v4668
        %v4670 = vpop.f32.mrb[0].mxu0
        %4671 = vmatprep.mubr.f32.mxu0 %v661
        %4672 = vmatmul.mubr.f32.gmra.mrb[0].mxu0 %v660
        %v4673 = vpop.f32.mrb[0].mxu0
        %v4674 = vadd.f32 %v4369, %v4673
        %v4675 = vpop.f32.mrb[0].mxu0
        %4676 = vmatprep.mubr.f32.mxu0 %v685
        %4677 = vmatmul.mubr.f32.gmra.mrb[0].mxu0 %v684
        %v4678 = vpop.f32.mrb[0].mxu0
        %v4679 = vadd.f32 %v4374, %v4678
        %v4680 = vpop.f32.mrb[0].mxu0
        %4681 = vmatprep.mubr.f32.mxu0 %v709
        %4682 = vmatmul.mubr.f32.gmra.mrb[0].mxu0 %v708
        %v4683 = vpop.f32.mrb[0].mxu0
        %v4684 = vadd.f32 %v4379, %v4683
        %v4685 = vpop.f32.mrb[0].mxu0
        %4686 = vmatprep.mubr.f32.mxu0 %v733
        %4687 = vmatmul.mubr.f32.gmra.mrb[0].mxu0 %v732
        %v4688 = vpop.f32.mrb[0].mxu0
        %v4689 = vadd.f32 %v4384, %v4688
        %v4690 = vpop.f32.mrb[0].mxu0
        %4691 = vmatprep.mubr.f32.mxu0 %v757
        %4692 = vmatmul.mubr.f32.gmra.mrb[0].mxu0 %v756
        %v4693 = vpop.f32.mrb[0].mxu0
        %v4694 = vadd.f32 %v4389, %v4693
        %v4695 = vpop.f32.mrb[0].mxu0
        %4696 = vmatprep.mubr.f32.mxu0 %v781
        %4697 = vmatmul.mubr.f32.gmra.mrb[0].mxu0 %v780
        %v4698 = vpop.f32.mrb[0].mxu0
        %v4699 = vadd.f32 %v4394, %v4698
        %v4700 = vpop.f32.mrb[0].mxu0
        %4701 = vmatprep.mubr.f32.mxu0 %v805
        %4702 = vmatmul.mubr.f32.gmra.mrb[0].mxu0 %v804
        %v4703 = vpop.f32.mrb[0].mxu0
        %v4704 = vadd.f32 %v4399, %v4703
        %v4705 = vpop.f32.mrb[0].mxu0
        %4706 = vmatprep.mubr.f32.mxu0 %v829
        %4707 = vmatmul.mubr.f32.gmra.mrb[0].mxu0 %v828
        %v4708 = vpop.f32.mrb[0].mxu0
        %v4709 = vadd.f32 %v4404, %v4708
        %v4710 = vpop.f32.mrb[0].mxu0
        %4711 = vmatprep.mubr.f32.mxu0 %v853
        %4712 = vmatmul.mubr.f32.gmra.mrb[0].mxu0 %v852
        %v4713 = vpop.f32.mrb[0].mxu0
        %v4714 = vadd.f32 %v4409, %v4713
        %v4715 = vpop.f32.mrb[0].mxu0
        %4716 = vmatprep.mubr.f32.mxu0 %v877
        %4717 = vmatmul.mubr.f32.gmra.mrb[0].mxu0 %v876
        %v4718 = vpop.f32.mrb[0].mxu0
        %v4719 = vadd.f32 %v4414, %v4718
        %v4720 = vpop.f32.mrb[0].mxu0
        %4721 = vmatprep.mubr.f32.mxu0 %v901
        %4722 = vmatmul.mubr.f32.gmra.mrb[0].mxu0 %v900
        %v4723 = vpop.f32.mrb[0].mxu0
        %v4724 = vadd.f32 %v4419, %v4723
        %v4725 = vpop.f32.mrb[0].mxu0
        %4726 = vmatprep.mubr.f32.mxu0 %v925
        %4727 = vmatmul.mubr.f32.gmra.mrb[0].mxu0 %v924
        %v4728 = vpop.f32.mrb[0].mxu0
        %v4729 = vadd.f32 %v4424, %v4728
        %v4730 = vpop.f32.mrb[0].mxu0
        %4731 = vmatprep.mubr.f32.mxu0 %v949
        %4732 = vmatmul.mubr.f32.gmra.mrb[0].mxu0 %v948
        %v4733 = vpop.f32.mrb[0].mxu0
        %v4734 = vadd.f32 %v4429, %v4733
        %v4735 = vpop.f32.mrb[0].mxu0
        %4736 = vmatprep.mubr.f32.mxu0 %v973
        %4737 = vmatmul.mubr.f32.gmra.mrb[0].mxu0 %v972
        %v4738 = vpop.f32.mrb[0].mxu0
        %v4739 = vadd.f32 %v4434, %v4738
        %v4740 = vpop.f32.mrb[0].mxu0
        %4741 = vmatprep.mubr.f32.mxu0 %v997
        %4742 = vmatmul.mubr.f32.gmra.mrb[0].mxu0 %v996
        %v4743 = vpop.f32.mrb[0].mxu0
        %v4744 = vadd.f32 %v4439, %v4743
        %v4745 = vpop.f32.mrb[0].mxu0
        %4746 = vmatprep.mubr.f32.mxu0 %v1021
        %4747 = vmatmul.mubr.f32.gmra.mrb[0].mxu0 %v1020
        %v4748 = vpop.f32.mrb[0].mxu0
        %v4749 = vadd.f32 %v4444, %v4748
        %v4750 = vpop.f32.mrb[0].mxu0
        %4751 = vmatprep.mubr.f32.mxu0 %v1045
        %4752 = vmatmul.mubr.f32.gmra.mrb[0].mxu0 %v1044
        %v4753 = vpop.f32.mrb[0].mxu0
        %v4754 = vadd.f32 %v4449, %v4753
        %v4755 = vpop.f32.mrb[0].mxu0
        %4756 = vmatprep.mubr.f32.mxu0 %v1069
        %4757 = vmatmul.mubr.f32.gmra.mrb[0].mxu0 %v1068
        %v4758 = vpop.f32.mrb[0].mxu0
        %v4759 = vadd.f32 %v4454, %v4758
        %v4760 = vpop.f32.mrb[0].mxu0
        %4761 = vmatprep.mubr.f32.mxu0 %v1093
        %4762 = vmatmul.mubr.f32.gmra.mrb[0].mxu0 %v1092
        %v4763 = vpop.f32.mrb[0].mxu0
        %v4764 = vadd.f32 %v4459, %v4763
        %v4765 = vpop.f32.mrb[0].mxu0
        %4766 = vmatprep.mubr.f32.mxu0 %v1117
        %4767 = vmatmul.mubr.f32.gmra.mrb[0].mxu0 %v1116
        %v4768 = vpop.f32.mrb[0].mxu0
        %v4769 = vadd.f32 %v4464, %v4768
        %v4770 = vpop.f32.mrb[0].mxu0
        %4771 = vmatprep.mubr.f32.mxu0 %v1141
        %4772 = vmatmul.mubr.f32.gmra.mrb[0].mxu0 %v1140
        %v4773 = vpop.f32.mrb[0].mxu0
        %v4774 = vadd.f32 %v4469, %v4773
        %v4775 = vpop.f32.mrb[0].mxu0
        %4776 = vmatprep.mubr.f32.mxu0 %v1165
        %4777 = vmatmul.mubr.f32.gmra.mrb[0].mxu0 %v1164
        %v4778 = vpop.f32.mrb[0].mxu0
        %v4779 = vadd.f32 %v4474, %v4778
        %v4780 = vpop.f32.mrb[0].mxu0
        %4781 = vmatprep.mubr.f32.mxu0 %v1189
        %4782 = vmatmul.mubr.f32.gmra.mrb[0].mxu0 %v1188
        %v4783 = vpop.f32.mrb[0].mxu0
        %v4784 = vadd.f32 %v4479, %v4783
        %v4785 = vpop.f32.mrb[0].mxu0
        %4786 = vmatprep.mubr.f32.mxu0 %v1213
        %4787 = vmatmul.mubr.f32.gmra.mrb[0].mxu0 %v1212
        %v4788 = vpop.f32.mrb[0].mxu0
        %v4789 = vadd.f32 %v4484, %v4788
        %v4790 = vpop.f32.mrb[0].mxu0
        %4791 = vmatprep.mubr.f32.mxu0 %v1237
        %4792 = vmatmul.mubr.f32.gmra.mrb[0].mxu0 %v1236
        %v4793 = vpop.f32.mrb[0].mxu0
        %v4794 = vadd.f32 %v4489, %v4793
        %v4795 = vpop.f32.mrb[0].mxu0
        %4796 = vmatprep.mubr.f32.mxu0 %v1261
        %4797 = vmatmul.mubr.f32.gmra.mrb[0].mxu0 %v1260
        %v4798 = vpop.f32.mrb[0].mxu0
        %v4799 = vadd.f32 %v4494, %v4798
        %v4800 = vpop.f32.mrb[0].mxu0
        %4801 = vmatprep.mubr.f32.mxu0 %v1285
        %4802 = vmatmul.mubr.f32.gmra.mrb[0].mxu0 %v1284
        %v4803 = vpop.f32.mrb[0].mxu0
        %v4804 = vadd.f32 %v4499, %v4803
        %v4805 = vpop.f32.mrb[0].mxu0
        %4806 = vmatprep.mubr.f32.mxu0 %v1309
        %4807 = vmatmul.mubr.f32.gmra.mrb[0].mxu0 %v1308
        %v4808 = vpop.f32.mrb[0].mxu0
        %v4809 = vadd.f32 %v4504, %v4808
        %v4810 = vpop.f32.mrb[0].mxu0
        %4811 = vmatprep.mubr.f32.mxu0 %v1333
        %4812 = vmatmul.mubr.f32.gmra.mrb[0].mxu0 %v1332
        %v4813 = vpop.f32.mrb[0].mxu0
        %v4814 = vadd.f32 %v4509, %v4813
        %v4815 = vpop.f32.mrb[0].mxu0
        %4816 = vmatprep.mubr.f32.mxu0 %v1357
        %4817 = vmatmul.mubr.f32.gmra.mrb[0].mxu0 %v1356
        %v4818 = vpop.f32.mrb[0].mxu0
        %v4819 = vadd.f32 %v4514, %v4818
        %v4820 = vpop.f32.mrb[0].mxu0
        %4821 = vmatprep.mubr.f32.mxu0 %v1381
        %4822 = vmatmul.mubr.f32.gmra.mrb[0].mxu0 %v1380
        %v4823 = vpop.f32.mrb[0].mxu0
        %v4824 = vadd.f32 %v4519, %v4823
        %v4825 = vpop.f32.mrb[0].mxu0
        %4826 = vdwg.mxu0
        %4827 = vmatprep.subr.mxu0 0.0
        %4828 = vmatpush1.msra.mxu0 %v1706
        %4829 = vmatprep.subr.mxu0 0.0
        %4830 = vmatpush1.msra.mxu0 %v1707
        %4831 = vmatprep.subr.mxu0 0.0
        %4832 = vmatpush1.msra.mxu0 %v1708
        %4833 = vmatprep.subr.mxu0 0.0
        %4834 = vmatpush1.msra.mxu0 %v1709
        %4835 = vmatprep.subr.mxu0 0.0
        %4836 = vmatpush1.msra.mxu0 %v1710
        %4837 = vmatprep.subr.mxu0 0.0
        %4838 = vmatpush1.msra.mxu0 %v1711
        %4839 = vmatprep.subr.mxu0 0.0
        %4840 = vmatpush1.msra.mxu0 %v1712
        %4841 = vmatprep.subr.mxu0 0.0
        %4842 = vmatpush1.msra.mxu0 %v1713
        %4843 = vmatprep.subr.mxu0 0.0
        %4844 = vmatpush1.msra.mxu0 %v1714
        %4845 = vmatprep.subr.mxu0 0.0
        %4846 = vmatpush1.msra.mxu0 %v1715
        %4847 = vmatprep.subr.mxu0 0.0
        %4848 = vmatpush1.msra.mxu0 %v1716
        %4849 = vmatprep.subr.mxu0 0.0
        %4850 = vmatpush1.msra.mxu0 %v1717
        %4851 = vmatprep.subr.mxu0 0.0
        %4852 = vmatpush1.msra.mxu0 %v1718
        %4853 = vmatprep.subr.mxu0 0.0
        %4854 = vmatpush1.msra.mxu0 %v1719
        %4855 = vmatprep.subr.mxu0 0.0
        %4856 = vmatpush1.msra.mxu0 %v1720
        %4857 = vmatprep.subr.mxu0 0.0
        %4858 = vmatpush1.msra.mxu0 %v1721
        %4859 = vmatprep.subr.mxu0 0.0
        %4860 = vmatpush1.msra.mxu0 %v1722
        %4861 = vmatprep.subr.mxu0 0.0
        %4862 = vmatpush1.msra.mxu0 %v1723
        %4863 = vmatprep.subr.mxu0 0.0
        %4864 = vmatpush1.msra.mxu0 %v1724
        %4865 = vmatprep.subr.mxu0 0.0
        %4866 = vmatpush1.msra.mxu0 %v1725
        %4867 = vmatprep.subr.mxu0 0.0
        %4868 = vmatpush1.msra.mxu0 %v1726
        %4869 = vmatprep.subr.mxu0 0.0
        %4870 = vmatpush1.msra.mxu0 %v1727
        %4871 = vmatprep.subr.mxu0 0.0
        %4872 = vmatpush1.msra.mxu0 %v1728
        %4873 = vmatprep.subr.mxu0 0.0
        %4874 = vmatpush1.msra.mxu0 %v1729
        %4875 = vmatprep.subr.mxu0 0.0
        %4876 = vmatpush1.msra.mxu0 %v1730
        %4877 = vmatprep.subr.mxu0 0.0
        %4878 = vmatpush1.msra.mxu0 %v1731
        %4879 = vmatprep.subr.mxu0 0.0
        %4880 = vmatpush1.msra.mxu0 %v1732
        %4881 = vmatprep.subr.mxu0 0.0
        %4882 = vmatpush1.msra.mxu0 %v1733
        %4883 = vmatprep.subr.mxu0 0.0
        %4884 = vmatpush1.msra.mxu0 %v1734
        %4885 = vmatprep.subr.mxu0 0.0
        %4886 = vmatpush1.msra.mxu0 %v1735
        %4887 = vmatprep.subr.mxu0 0.0
        %4888 = vmatpush1.msra.mxu0 %v1736
        %4889 = vmatprep.subr.mxu0 0.0
        %4890 = vmatpush1.msra.mxu0 %v1737
        %4891 = vmatprep.mubr.f32.mxu0 %v255
        %4892 = vmatmul.mubr.f32.gmra.mrb[0].mxu0 %v254
        %v4893 = vpop.f32.mrb[0].mxu0
        %v4894 = vadd.f32 %v4589, %v4893
        %v4895 = vpop.f32.mrb[0].mxu0
        %4896 = vmatprep.mubr.f32.mxu0 %v279
        %4897 = vmatmul.mubr.f32.gmra.mrb[0].mxu0 %v278
        %v4898 = vpop.f32.mrb[0].mxu0
        %v4899 = vadd.f32 %v4594, %v4898
        %v4900 = vpop.f32.mrb[0].mxu0
        %4901 = vmatprep.mubr.f32.mxu0 %v303
        %4902 = vmatmul.mubr.f32.gmra.mrb[0].mxu0 %v302
        %v4903 = vpop.f32.mrb[0].mxu0
        %v4904 = vadd.f32 %v4599, %v4903
        %v4905 = vpop.f32.mrb[0].mxu0
        %4906 = vmatprep.mubr.f32.mxu0 %v327
        %4907 = vmatmul.mubr.f32.gmra.mrb[0].mxu0 %v326
        %v4908 = vpop.f32.mrb[0].mxu0
        %v4909 = vadd.f32 %v4604, %v4908
        %v4910 = vpop.f32.mrb[0].mxu0
        %4911 = vmatprep.mubr.f32.mxu0 %v351
        %4912 = vmatmul.mubr.f32.gmra.mrb[0].mxu0 %v350
        %v4913 = vpop.f32.mrb[0].mxu0
        %v4914 = vadd.f32 %v4609, %v4913
        %v4915 = vpop.f32.mrb[0].mxu0
        %4916 = vmatprep.mubr.f32.mxu0 %v375
        %4917 = vmatmul.mubr.f32.gmra.mrb[0].mxu0 %v374
        %v4918 = vpop.f32.mrb[0].mxu0
        %v4919 = vadd.f32 %v4614, %v4918
        %v4920 = vpop.f32.mrb[0].mxu0
        %4921 = vmatprep.mubr.f32.mxu0 %v399
        %4922 = vmatmul.mubr.f32.gmra.mrb[0].mxu0 %v398
        %v4923 = vpop.f32.mrb[0].mxu0
        %v4924 = vadd.f32 %v4619, %v4923
        %v4925 = vpop.f32.mrb[0].mxu0
        %4926 = vmatprep.mubr.f32.mxu0 %v423
        %4927 = vmatmul.mubr.f32.gmra.mrb[0].mxu0 %v422
        %v4928 = vpop.f32.mrb[0].mxu0
        %v4929 = vadd.f32 %v4624, %v4928
        %v4930 = vpop.f32.mrb[0].mxu0
        %4931 = vmatprep.mubr.f32.mxu0 %v447
        %4932 = vmatmul.mubr.f32.gmra.mrb[0].mxu0 %v446
        %v4933 = vpop.f32.mrb[0].mxu0
        %v4934 = vadd.f32 %v4629, %v4933
        %v4935 = vpop.f32.mrb[0].mxu0
        %4936 = vmatprep.mubr.f32.mxu0 %v471
        %4937 = vmatmul.mubr.f32.gmra.mrb[0].mxu0 %v470
        %v4938 = vpop.f32.mrb[0].mxu0
        %v4939 = vadd.f32 %v4634, %v4938
        %v4940 = vpop.f32.mrb[0].mxu0
        %4941 = vmatprep.mubr.f32.mxu0 %v495
        %4942 = vmatmul.mubr.f32.gmra.mrb[0].mxu0 %v494
        %v4943 = vpop.f32.mrb[0].mxu0
        %v4944 = vadd.f32 %v4639, %v4943
        %v4945 = vpop.f32.mrb[0].mxu0
        %4946 = vmatprep.mubr.f32.mxu0 %v519
        %4947 = vmatmul.mubr.f32.gmra.mrb[0].mxu0 %v518
        %v4948 = vpop.f32.mrb[0].mxu0
        %v4949 = vadd.f32 %v4644, %v4948
        %v4950 = vpop.f32.mrb[0].mxu0
        %4951 = vmatprep.mubr.f32.mxu0 %v543
        %4952 = vmatmul.mubr.f32.gmra.mrb[0].mxu0 %v542
        %v4953 = vpop.f32.mrb[0].mxu0
        %v4954 = vadd.f32 %v4649, %v4953
        %v4955 = vpop.f32.mrb[0].mxu0
        %4956 = vmatprep.mubr.f32.mxu0 %v567
        %4957 = vmatmul.mubr.f32.gmra.mrb[0].mxu0 %v566
        %v4958 = vpop.f32.mrb[0].mxu0
        %v4959 = vadd.f32 %v4654, %v4958
        %v4960 = vpop.f32.mrb[0].mxu0
        %4961 = vmatprep.mubr.f32.mxu0 %v591
        %4962 = vmatmul.mubr.f32.gmra.mrb[0].mxu0 %v590
        %v4963 = vpop.f32.mrb[0].mxu0
        %v4964 = vadd.f32 %v4659, %v4963
        %v4965 = vpop.f32.mrb[0].mxu0
        %4966 = vmatprep.mubr.f32.mxu0 %v615
        %4967 = vmatmul.mubr.f32.gmra.mrb[0].mxu0 %v614
        %v4968 = vpop.f32.mrb[0].mxu0
        %v4969 = vadd.f32 %v4664, %v4968
        %v4970 = vpop.f32.mrb[0].mxu0
        %4971 = vmatprep.mubr.f32.mxu0 %v639
        %4972 = vmatmul.mubr.f32.gmra.mrb[0].mxu0 %v638
        %v4973 = vpop.f32.mrb[0].mxu0
        %v4974 = vadd.f32 %v4669, %v4973
        %v4975 = vpop.f32.mrb[0].mxu0
        %4976 = vmatprep.mubr.f32.mxu0 %v663
        %4977 = vmatmul.mubr.f32.gmra.mrb[0].mxu0 %v662
        %v4978 = vpop.f32.mrb[0].mxu0
        %v4979 = vadd.f32 %v4674, %v4978
        %v4980 = vpop.f32.mrb[0].mxu0
        %4981 = vmatprep.mubr.f32.mxu0 %v687
        %4982 = vmatmul.mubr.f32.gmra.mrb[0].mxu0 %v686
        %v4983 = vpop.f32.mrb[0].mxu0
        %v4984 = vadd.f32 %v4679, %v4983
        %v4985 = vpop.f32.mrb[0].mxu0
        %4986 = vmatprep.mubr.f32.mxu0 %v711
        %4987 = vmatmul.mubr.f32.gmra.mrb[0].mxu0 %v710
        %v4988 = vpop.f32.mrb[0].mxu0
        %v4989 = vadd.f32 %v4684, %v4988
        %v4990 = vpop.f32.mrb[0].mxu0
        %4991 = vmatprep.mubr.f32.mxu0 %v735
        %4992 = vmatmul.mubr.f32.gmra.mrb[0].mxu0 %v734
        %v4993 = vpop.f32.mrb[0].mxu0
        %v4994 = vadd.f32 %v4689, %v4993
        %v4995 = vpop.f32.mrb[0].mxu0
        %4996 = vmatprep.mubr.f32.mxu0 %v759
        %4997 = vmatmul.mubr.f32.gmra.mrb[0].mxu0 %v758
        %v4998 = vpop.f32.mrb[0].mxu0
        %v4999 = vadd.f32 %v4694, %v4998
        %v5000 = vpop.f32.mrb[0].mxu0
        %5001 = vmatprep.mubr.f32.mxu0 %v783
        %5002 = vmatmul.mubr.f32.gmra.mrb[0].mxu0 %v782
        %v5003 = vpop.f32.mrb[0].mxu0
        %v5004 = vadd.f32 %v4699, %v5003
        %v5005 = vpop.f32.mrb[0].mxu0
        %5006 = vmatprep.mubr.f32.mxu0 %v807
        %5007 = vmatmul.mubr.f32.gmra.mrb[0].mxu0 %v806
        %v5008 = vpop.f32.mrb[0].mxu0
        %v5009 = vadd.f32 %v4704, %v5008
        %v5010 = vpop.f32.mrb[0].mxu0
        %5011 = vmatprep.mubr.f32.mxu0 %v831
        %5012 = vmatmul.mubr.f32.gmra.mrb[0].mxu0 %v830
        %v5013 = vpop.f32.mrb[0].mxu0
        %v5014 = vadd.f32 %v4709, %v5013
        %v5015 = vpop.f32.mrb[0].mxu0
        %5016 = vmatprep.mubr.f32.mxu0 %v855
        %5017 = vmatmul.mubr.f32.gmra.mrb[0].mxu0 %v854
        %v5018 = vpop.f32.mrb[0].mxu0
        %v5019 = vadd.f32 %v4714, %v5018
        %v5020 = vpop.f32.mrb[0].mxu0
        %5021 = vmatprep.mubr.f32.mxu0 %v879
        %5022 = vmatmul.mubr.f32.gmra.mrb[0].mxu0 %v878
        %v5023 = vpop.f32.mrb[0].mxu0
        %v5024 = vadd.f32 %v4719, %v5023
        %v5025 = vpop.f32.mrb[0].mxu0
        %5026 = vmatprep.mubr.f32.mxu0 %v903
        %5027 = vmatmul.mubr.f32.gmra.mrb[0].mxu0 %v902
        %v5028 = vpop.f32.mrb[0].mxu0
        %v5029 = vadd.f32 %v4724, %v5028
        %v5030 = vpop.f32.mrb[0].mxu0
        %5031 = vmatprep.mubr.f32.mxu0 %v927
        %5032 = vmatmul.mubr.f32.gmra.mrb[0].mxu0 %v926
        %v5033 = vpop.f32.mrb[0].mxu0
        %v5034 = vadd.f32 %v4729, %v5033
        %v5035 = vpop.f32.mrb[0].mxu0
        %5036 = vmatprep.mubr.f32.mxu0 %v951
        %5037 = vmatmul.mubr.f32.gmra.mrb[0].mxu0 %v950
        %v5038 = vpop.f32.mrb[0].mxu0
        %v5039 = vadd.f32 %v4734, %v5038
        %v5040 = vpop.f32.mrb[0].mxu0
        %5041 = vmatprep.mubr.f32.mxu0 %v975
        %5042 = vmatmul.mubr.f32.gmra.mrb[0].mxu0 %v974
        %v5043 = vpop.f32.mrb[0].mxu0
        %v5044 = vadd.f32 %v4739, %v5043
        %v5045 = vpop.f32.mrb[0].mxu0
        %5046 = vmatprep.mubr.f32.mxu0 %v999
        %5047 = vmatmul.mubr.f32.gmra.mrb[0].mxu0 %v998
        %v5048 = vpop.f32.mrb[0].mxu0
        %v5049 = vadd.f32 %v4744, %v5048
        %v5050 = vpop.f32.mrb[0].mxu0
        %5051 = vmatprep.mubr.f32.mxu0 %v1023
        %5052 = vmatmul.mubr.f32.gmra.mrb[0].mxu0 %v1022
        %v5053 = vpop.f32.mrb[0].mxu0
        %v5054 = vadd.f32 %v4749, %v5053
        %v5055 = vpop.f32.mrb[0].mxu0
        %5056 = vmatprep.mubr.f32.mxu0 %v1047
        %5057 = vmatmul.mubr.f32.gmra.mrb[0].mxu0 %v1046
        %v5058 = vpop.f32.mrb[0].mxu0
        %v5059 = vadd.f32 %v4754, %v5058
        %v5060 = vpop.f32.mrb[0].mxu0
        %5061 = vmatprep.mubr.f32.mxu0 %v1071
        %5062 = vmatmul.mubr.f32.gmra.mrb[0].mxu0 %v1070
        %v5063 = vpop.f32.mrb[0].mxu0
        %v5064 = vadd.f32 %v4759, %v5063
        %v5065 = vpop.f32.mrb[0].mxu0
        %5066 = vmatprep.mubr.f32.mxu0 %v1095
        %5067 = vmatmul.mubr.f32.gmra.mrb[0].mxu0 %v1094
        %v5068 = vpop.f32.mrb[0].mxu0
        %v5069 = vadd.f32 %v4764, %v5068
        %v5070 = vpop.f32.mrb[0].mxu0
        %5071 = vmatprep.mubr.f32.mxu0 %v1119
        %5072 = vmatmul.mubr.f32.gmra.mrb[0].mxu0 %v1118
        %v5073 = vpop.f32.mrb[0].mxu0
        %v5074 = vadd.f32 %v4769, %v5073
        %v5075 = vpop.f32.mrb[0].mxu0
        %5076 = vmatprep.mubr.f32.mxu0 %v1143
        %5077 = vmatmul.mubr.f32.gmra.mrb[0].mxu0 %v1142
        %v5078 = vpop.f32.mrb[0].mxu0
        %v5079 = vadd.f32 %v4774, %v5078
        %v5080 = vpop.f32.mrb[0].mxu0
        %5081 = vmatprep.mubr.f32.mxu0 %v1167
        %5082 = vmatmul.mubr.f32.gmra.mrb[0].mxu0 %v1166
        %v5083 = vpop.f32.mrb[0].mxu0
        %v5084 = vadd.f32 %v4779, %v5083
        %v5085 = vpop.f32.mrb[0].mxu0
        %5086 = vmatprep.mubr.f32.mxu0 %v1191
        %5087 = vmatmul.mubr.f32.gmra.mrb[0].mxu0 %v1190
        %v5088 = vpop.f32.mrb[0].mxu0
        %v5089 = vadd.f32 %v4784, %v5088
        %v5090 = vpop.f32.mrb[0].mxu0
        %5091 = vmatprep.mubr.f32.mxu0 %v1215
        %5092 = vmatmul.mubr.f32.gmra.mrb[0].mxu0 %v1214
        %v5093 = vpop.f32.mrb[0].mxu0
        %v5094 = vadd.f32 %v4789, %v5093
        %v5095 = vpop.f32.mrb[0].mxu0
        %5096 = vmatprep.mubr.f32.mxu0 %v1239
        %5097 = vmatmul.mubr.f32.gmra.mrb[0].mxu0 %v1238
        %v5098 = vpop.f32.mrb[0].mxu0
        %v5099 = vadd.f32 %v4794, %v5098
        %v5100 = vpop.f32.mrb[0].mxu0
        %5101 = vmatprep.mubr.f32.mxu0 %v1263
        %5102 = vmatmul.mubr.f32.gmra.mrb[0].mxu0 %v1262
        %v5103 = vpop.f32.mrb[0].mxu0
        %v5104 = vadd.f32 %v4799, %v5103
        %v5105 = vpop.f32.mrb[0].mxu0
        %5106 = vmatprep.mubr.f32.mxu0 %v1287
        %5107 = vmatmul.mubr.f32.gmra.mrb[0].mxu0 %v1286
        %v5108 = vpop.f32.mrb[0].mxu0
        %v5109 = vadd.f32 %v4804, %v5108
        %v5110 = vpop.f32.mrb[0].mxu0
        %5111 = vmatprep.mubr.f32.mxu0 %v1311
        %5112 = vmatmul.mubr.f32.gmra.mrb[0].mxu0 %v1310
        %v5113 = vpop.f32.mrb[0].mxu0
        %v5114 = vadd.f32 %v4809, %v5113
        %v5115 = vpop.f32.mrb[0].mxu0
        %5116 = vmatprep.mubr.f32.mxu0 %v1335
        %5117 = vmatmul.mubr.f32.gmra.mrb[0].mxu0 %v1334
        %v5118 = vpop.f32.mrb[0].mxu0
        %v5119 = vadd.f32 %v4814, %v5118
        %v5120 = vpop.f32.mrb[0].mxu0
        %5121 = vmatprep.mubr.f32.mxu0 %v1359
        %5122 = vmatmul.mubr.f32.gmra.mrb[0].mxu0 %v1358
        %v5123 = vpop.f32.mrb[0].mxu0
        %v5124 = vadd.f32 %v4819, %v5123
        %v5125 = vpop.f32.mrb[0].mxu0
        %5126 = vmatprep.mubr.f32.mxu0 %v1383
        %5127 = vmatmul.mubr.f32.gmra.mrb[0].mxu0 %v1382
        %v5128 = vpop.f32.mrb[0].mxu0
        %v5129 = vadd.f32 %v4824, %v5128
        %v5130 = vpop.f32.mrb[0].mxu0
        %5131 = vdwg.mxu0
        %5132 = vmatprep.subr.mxu0 0.0
        %5133 = vmatpush1.msra.mxu0 %v1738
        %5134 = vmatprep.subr.mxu0 0.0
        %5135 = vmatpush1.msra.mxu0 %v1739
        %5136 = vmatprep.subr.mxu0 0.0
        %5137 = vmatpush1.msra.mxu0 %v1740
        %5138 = vmatprep.subr.mxu0 0.0
        %5139 = vmatpush1.msra.mxu0 %v1741
        %5140 = vmatprep.subr.mxu0 0.0
        %5141 = vmatpush1.msra.mxu0 %v1742
        %5142 = vmatprep.subr.mxu0 0.0
        %5143 = vmatpush1.msra.mxu0 %v1743
        %5144 = vmatprep.subr.mxu0 0.0
        %5145 = vmatpush1.msra.mxu0 %v1744
        %5146 = vmatprep.subr.mxu0 0.0
        %5147 = vmatpush1.msra.mxu0 %v1745
        %5148 = vmatprep.subr.mxu0 0.0
        %5149 = vmatpush1.msra.mxu0 %v1746
        %5150 = vmatprep.subr.mxu0 0.0
        %5151 = vmatpush1.msra.mxu0 %v1747
        %5152 = vmatprep.subr.mxu0 0.0
        %5153 = vmatpush1.msra.mxu0 %v1748
        %5154 = vmatprep.subr.mxu0 0.0
        %5155 = vmatpush1.msra.mxu0 %v1749
        %5156 = vmatprep.subr.mxu0 0.0
        %5157 = vmatpush1.msra.mxu0 %v1750
        %5158 = vmatprep.subr.mxu0 0.0
        %5159 = vmatpush1.msra.mxu0 %v1751
        %5160 = vmatprep.subr.mxu0 0.0
        %5161 = vmatpush1.msra.mxu0 %v1752
        %5162 = vmatprep.subr.mxu0 0.0
        %5163 = vmatpush1.msra.mxu0 %v1753
        %5164 = vmatprep.subr.mxu0 0.0
        %5165 = vmatpush1.msra.mxu0 %v1754
        %5166 = vmatprep.subr.mxu0 0.0
        %5167 = vmatpush1.msra.mxu0 %v1755
        %5168 = vmatprep.subr.mxu0 0.0
        %5169 = vmatpush1.msra.mxu0 %v1756
        %5170 = vmatprep.subr.mxu0 0.0
        %5171 = vmatpush1.msra.mxu0 %v1757
        %5172 = vmatprep.subr.mxu0 0.0
        %5173 = vmatpush1.msra.mxu0 %v1758
        %5174 = vmatprep.subr.mxu0 0.0
        %5175 = vmatpush1.msra.mxu0 %v1759
        %5176 = vmatprep.subr.mxu0 0.0
        %5177 = vmatpush1.msra.mxu0 %v1760
        %5178 = vmatprep.subr.mxu0 0.0
        %5179 = vmatpush1.msra.mxu0 %v1761
        %5180 = vmatprep.subr.mxu0 0.0
        %5181 = vmatpush1.msra.mxu0 %v1762
        %5182 = vmatprep.subr.mxu0 0.0
        %5183 = vmatpush1.msra.mxu0 %v1763
        %5184 = vmatprep.subr.mxu0 0.0
        %5185 = vmatpush1.msra.mxu0 %v1764
        %5186 = vmatprep.subr.mxu0 0.0
        %5187 = vmatpush1.msra.mxu0 %v1765
        %5188 = vmatprep.subr.mxu0 0.0
        %5189 = vmatpush1.msra.mxu0 %v1766
        %5190 = vmatprep.subr.mxu0 0.0
        %5191 = vmatpush1.msra.mxu0 %v1767
        %5192 = vmatprep.subr.mxu0 0.0
        %5193 = vmatpush1.msra.mxu0 %v1768
        %5194 = vmatprep.subr.mxu0 0.0
        %5195 = vmatpush1.msra.mxu0 %v1769
        %5196 = vmatprep.mubr.f32.mxu0 %v257
        %5197 = vmatmul.mubr.f32.gmra.mrb[0].mxu0 %v256
        %v5198 = vpop.f32.mrb[0].mxu0
        %v5199 = vadd.f32 %v4894, %v5198
        %v5200 = vpop.f32.mrb[0].mxu0
        %5201 = vmatprep.mubr.f32.mxu0 %v281
        %5202 = vmatmul.mubr.f32.gmra.mrb[0].mxu0 %v280
        %v5203 = vpop.f32.mrb[0].mxu0
        %v5204 = vadd.f32 %v4899, %v5203
        %v5205 = vpop.f32.mrb[0].mxu0
        %5206 = vmatprep.mubr.f32.mxu0 %v305
        %5207 = vmatmul.mubr.f32.gmra.mrb[0].mxu0 %v304
        %v5208 = vpop.f32.mrb[0].mxu0
        %v5209 = vadd.f32 %v4904, %v5208
        %v5210 = vpop.f32.mrb[0].mxu0
        %5211 = vmatprep.mubr.f32.mxu0 %v329
        %5212 = vmatmul.mubr.f32.gmra.mrb[0].mxu0 %v328
        %v5213 = vpop.f32.mrb[0].mxu0
        %v5214 = vadd.f32 %v4909, %v5213
        %v5215 = vpop.f32.mrb[0].mxu0
        %5216 = vmatprep.mubr.f32.mxu0 %v353
        %5217 = vmatmul.mubr.f32.gmra.mrb[0].mxu0 %v352
        %v5218 = vpop.f32.mrb[0].mxu0
        %v5219 = vadd.f32 %v4914, %v5218
        %v5220 = vpop.f32.mrb[0].mxu0
        %5221 = vmatprep.mubr.f32.mxu0 %v377
        %5222 = vmatmul.mubr.f32.gmra.mrb[0].mxu0 %v376
        %v5223 = vpop.f32.mrb[0].mxu0
        %v5224 = vadd.f32 %v4919, %v5223
        %v5225 = vpop.f32.mrb[0].mxu0
        %5226 = vmatprep.mubr.f32.mxu0 %v401
        %5227 = vmatmul.mubr.f32.gmra.mrb[0].mxu0 %v400
        %v5228 = vpop.f32.mrb[0].mxu0
        %v5229 = vadd.f32 %v4924, %v5228
        %v5230 = vpop.f32.mrb[0].mxu0
        %5231 = vmatprep.mubr.f32.mxu0 %v425
        %5232 = vmatmul.mubr.f32.gmra.mrb[0].mxu0 %v424
        %v5233 = vpop.f32.mrb[0].mxu0
        %v5234 = vadd.f32 %v4929, %v5233
        %v5235 = vpop.f32.mrb[0].mxu0
        %5236 = vmatprep.mubr.f32.mxu0 %v449
        %5237 = vmatmul.mubr.f32.gmra.mrb[0].mxu0 %v448
        %v5238 = vpop.f32.mrb[0].mxu0
        %v5239 = vadd.f32 %v4934, %v5238
        %v5240 = vpop.f32.mrb[0].mxu0
        %5241 = vmatprep.mubr.f32.mxu0 %v473
        %5242 = vmatmul.mubr.f32.gmra.mrb[0].mxu0 %v472
        %v5243 = vpop.f32.mrb[0].mxu0
        %v5244 = vadd.f32 %v4939, %v5243
        %v5245 = vpop.f32.mrb[0].mxu0
        %5246 = vmatprep.mubr.f32.mxu0 %v497
        %5247 = vmatmul.mubr.f32.gmra.mrb[0].mxu0 %v496
        %v5248 = vpop.f32.mrb[0].mxu0
        %v5249 = vadd.f32 %v4944, %v5248
        %v5250 = vpop.f32.mrb[0].mxu0
        %5251 = vmatprep.mubr.f32.mxu0 %v521
        %5252 = vmatmul.mubr.f32.gmra.mrb[0].mxu0 %v520
        %v5253 = vpop.f32.mrb[0].mxu0
        %v5254 = vadd.f32 %v4949, %v5253
        %v5255 = vpop.f32.mrb[0].mxu0
        %5256 = vmatprep.mubr.f32.mxu0 %v545
        %5257 = vmatmul.mubr.f32.gmra.mrb[0].mxu0 %v544
        %v5258 = vpop.f32.mrb[0].mxu0
        %v5259 = vadd.f32 %v4954, %v5258
        %v5260 = vpop.f32.mrb[0].mxu0
        %5261 = vmatprep.mubr.f32.mxu0 %v569
        %5262 = vmatmul.mubr.f32.gmra.mrb[0].mxu0 %v568
        %v5263 = vpop.f32.mrb[0].mxu0
        %v5264 = vadd.f32 %v4959, %v5263
        %v5265 = vpop.f32.mrb[0].mxu0
        %5266 = vmatprep.mubr.f32.mxu0 %v593
        %5267 = vmatmul.mubr.f32.gmra.mrb[0].mxu0 %v592
        %v5268 = vpop.f32.mrb[0].mxu0
        %v5269 = vadd.f32 %v4964, %v5268
        %v5270 = vpop.f32.mrb[0].mxu0
        %5271 = vmatprep.mubr.f32.mxu0 %v617
        %5272 = vmatmul.mubr.f32.gmra.mrb[0].mxu0 %v616
        %v5273 = vpop.f32.mrb[0].mxu0
        %v5274 = vadd.f32 %v4969, %v5273
        %v5275 = vpop.f32.mrb[0].mxu0
        %5276 = vmatprep.mubr.f32.mxu0 %v641
        %5277 = vmatmul.mubr.f32.gmra.mrb[0].mxu0 %v640
        %v5278 = vpop.f32.mrb[0].mxu0
        %v5279 = vadd.f32 %v4974, %v5278
        %v5280 = vpop.f32.mrb[0].mxu0
        %5281 = vmatprep.mubr.f32.mxu0 %v665
        %5282 = vmatmul.mubr.f32.gmra.mrb[0].mxu0 %v664
        %v5283 = vpop.f32.mrb[0].mxu0
        %v5284 = vadd.f32 %v4979, %v5283
        %v5285 = vpop.f32.mrb[0].mxu0
        %5286 = vmatprep.mubr.f32.mxu0 %v689
        %5287 = vmatmul.mubr.f32.gmra.mrb[0].mxu0 %v688
        %v5288 = vpop.f32.mrb[0].mxu0
        %v5289 = vadd.f32 %v4984, %v5288
        %v5290 = vpop.f32.mrb[0].mxu0
        %5291 = vmatprep.mubr.f32.mxu0 %v713
        %5292 = vmatmul.mubr.f32.gmra.mrb[0].mxu0 %v712
        %v5293 = vpop.f32.mrb[0].mxu0
        %v5294 = vadd.f32 %v4989, %v5293
        %v5295 = vpop.f32.mrb[0].mxu0
        %5296 = vmatprep.mubr.f32.mxu0 %v737
        %5297 = vmatmul.mubr.f32.gmra.mrb[0].mxu0 %v736
        %v5298 = vpop.f32.mrb[0].mxu0
        %v5299 = vadd.f32 %v4994, %v5298
        %v5300 = vpop.f32.mrb[0].mxu0
        %5301 = vmatprep.mubr.f32.mxu0 %v761
        %5302 = vmatmul.mubr.f32.gmra.mrb[0].mxu0 %v760
        %v5303 = vpop.f32.mrb[0].mxu0
        %v5304 = vadd.f32 %v4999, %v5303
        %v5305 = vpop.f32.mrb[0].mxu0
        %5306 = vmatprep.mubr.f32.mxu0 %v785
        %5307 = vmatmul.mubr.f32.gmra.mrb[0].mxu0 %v784
        %v5308 = vpop.f32.mrb[0].mxu0
        %v5309 = vadd.f32 %v5004, %v5308
        %v5310 = vpop.f32.mrb[0].mxu0
        %5311 = vmatprep.mubr.f32.mxu0 %v809
        %5312 = vmatmul.mubr.f32.gmra.mrb[0].mxu0 %v808
        %v5313 = vpop.f32.mrb[0].mxu0
        %v5314 = vadd.f32 %v5009, %v5313
        %v5315 = vpop.f32.mrb[0].mxu0
        %5316 = vmatprep.mubr.f32.mxu0 %v833
        %5317 = vmatmul.mubr.f32.gmra.mrb[0].mxu0 %v832
        %v5318 = vpop.f32.mrb[0].mxu0
        %v5319 = vadd.f32 %v5014, %v5318
        %v5320 = vpop.f32.mrb[0].mxu0
        %5321 = vmatprep.mubr.f32.mxu0 %v857
        %5322 = vmatmul.mubr.f32.gmra.mrb[0].mxu0 %v856
        %v5323 = vpop.f32.mrb[0].mxu0
        %v5324 = vadd.f32 %v5019, %v5323
        %v5325 = vpop.f32.mrb[0].mxu0
        %5326 = vmatprep.mubr.f32.mxu0 %v881
        %5327 = vmatmul.mubr.f32.gmra.mrb[0].mxu0 %v880
        %v5328 = vpop.f32.mrb[0].mxu0
        %v5329 = vadd.f32 %v5024, %v5328
        %v5330 = vpop.f32.mrb[0].mxu0
        %5331 = vmatprep.mubr.f32.mxu0 %v905
        %5332 = vmatmul.mubr.f32.gmra.mrb[0].mxu0 %v904
        %v5333 = vpop.f32.mrb[0].mxu0
        %v5334 = vadd.f32 %v5029, %v5333
        %v5335 = vpop.f32.mrb[0].mxu0
        %5336 = vmatprep.mubr.f32.mxu0 %v929
        %5337 = vmatmul.mubr.f32.gmra.mrb[0].mxu0 %v928
        %v5338 = vpop.f32.mrb[0].mxu0
        %v5339 = vadd.f32 %v5034, %v5338
        %v5340 = vpop.f32.mrb[0].mxu0
        %5341 = vmatprep.mubr.f32.mxu0 %v953
        %5342 = vmatmul.mubr.f32.gmra.mrb[0].mxu0 %v952
        %v5343 = vpop.f32.mrb[0].mxu0
        %v5344 = vadd.f32 %v5039, %v5343
        %v5345 = vpop.f32.mrb[0].mxu0
        %5346 = vmatprep.mubr.f32.mxu0 %v977
        %5347 = vmatmul.mubr.f32.gmra.mrb[0].mxu0 %v976
        %v5348 = vpop.f32.mrb[0].mxu0
        %v5349 = vadd.f32 %v5044, %v5348
        %v5350 = vpop.f32.mrb[0].mxu0
        %5351 = vmatprep.mubr.f32.mxu0 %v1001
        %5352 = vmatmul.mubr.f32.gmra.mrb[0].mxu0 %v1000
        %v5353 = vpop.f32.mrb[0].mxu0
        %v5354 = vadd.f32 %v5049, %v5353
        %v5355 = vpop.f32.mrb[0].mxu0
        %5356 = vmatprep.mubr.f32.mxu0 %v1025
        %5357 = vmatmul.mubr.f32.gmra.mrb[0].mxu0 %v1024
        %v5358 = vpop.f32.mrb[0].mxu0
        %v5359 = vadd.f32 %v5054, %v5358
        %v5360 = vpop.f32.mrb[0].mxu0
        %5361 = vmatprep.mubr.f32.mxu0 %v1049
        %5362 = vmatmul.mubr.f32.gmra.mrb[0].mxu0 %v1048
        %v5363 = vpop.f32.mrb[0].mxu0
        %v5364 = vadd.f32 %v5059, %v5363
        %v5365 = vpop.f32.mrb[0].mxu0
        %5366 = vmatprep.mubr.f32.mxu0 %v1073
        %5367 = vmatmul.mubr.f32.gmra.mrb[0].mxu0 %v1072
        %v5368 = vpop.f32.mrb[0].mxu0
        %v5369 = vadd.f32 %v5064, %v5368
        %v5370 = vpop.f32.mrb[0].mxu0
        %5371 = vmatprep.mubr.f32.mxu0 %v1097
        %5372 = vmatmul.mubr.f32.gmra.mrb[0].mxu0 %v1096
        %v5373 = vpop.f32.mrb[0].mxu0
        %v5374 = vadd.f32 %v5069, %v5373
        %v5375 = vpop.f32.mrb[0].mxu0
        %5376 = vmatprep.mubr.f32.mxu0 %v1121
        %5377 = vmatmul.mubr.f32.gmra.mrb[0].mxu0 %v1120
        %v5378 = vpop.f32.mrb[0].mxu0
        %v5379 = vadd.f32 %v5074, %v5378
        %v5380 = vpop.f32.mrb[0].mxu0
        %5381 = vmatprep.mubr.f32.mxu0 %v1145
        %5382 = vmatmul.mubr.f32.gmra.mrb[0].mxu0 %v1144
        %v5383 = vpop.f32.mrb[0].mxu0
        %v5384 = vadd.f32 %v5079, %v5383
        %v5385 = vpop.f32.mrb[0].mxu0
        %5386 = vmatprep.mubr.f32.mxu0 %v1169
        %5387 = vmatmul.mubr.f32.gmra.mrb[0].mxu0 %v1168
        %v5388 = vpop.f32.mrb[0].mxu0
        %v5389 = vadd.f32 %v5084, %v5388
        %v5390 = vpop.f32.mrb[0].mxu0
        %5391 = vmatprep.mubr.f32.mxu0 %v1193
        %5392 = vmatmul.mubr.f32.gmra.mrb[0].mxu0 %v1192
        %v5393 = vpop.f32.mrb[0].mxu0
        %v5394 = vadd.f32 %v5089, %v5393
        %v5395 = vpop.f32.mrb[0].mxu0
        %5396 = vmatprep.mubr.f32.mxu0 %v1217
        %5397 = vmatmul.mubr.f32.gmra.mrb[0].mxu0 %v1216
        %v5398 = vpop.f32.mrb[0].mxu0
        %v5399 = vadd.f32 %v5094, %v5398
        %v5400 = vpop.f32.mrb[0].mxu0
        %5401 = vmatprep.mubr.f32.mxu0 %v1241
        %5402 = vmatmul.mubr.f32.gmra.mrb[0].mxu0 %v1240
        %v5403 = vpop.f32.mrb[0].mxu0
        %v5404 = vadd.f32 %v5099, %v5403
        %v5405 = vpop.f32.mrb[0].mxu0
        %5406 = vmatprep.mubr.f32.mxu0 %v1265
        %5407 = vmatmul.mubr.f32.gmra.mrb[0].mxu0 %v1264
        %v5408 = vpop.f32.mrb[0].mxu0
        %v5409 = vadd.f32 %v5104, %v5408
        %v5410 = vpop.f32.mrb[0].mxu0
        %5411 = vmatprep.mubr.f32.mxu0 %v1289
        %5412 = vmatmul.mubr.f32.gmra.mrb[0].mxu0 %v1288
        %v5413 = vpop.f32.mrb[0].mxu0
        %v5414 = vadd.f32 %v5109, %v5413
        %v5415 = vpop.f32.mrb[0].mxu0
        %5416 = vmatprep.mubr.f32.mxu0 %v1313
        %5417 = vmatmul.mubr.f32.gmra.mrb[0].mxu0 %v1312
        %v5418 = vpop.f32.mrb[0].mxu0
        %v5419 = vadd.f32 %v5114, %v5418
        %v5420 = vpop.f32.mrb[0].mxu0
        %5421 = vmatprep.mubr.f32.mxu0 %v1337
        %5422 = vmatmul.mubr.f32.gmra.mrb[0].mxu0 %v1336
        %v5423 = vpop.f32.mrb[0].mxu0
        %v5424 = vadd.f32 %v5119, %v5423
        %v5425 = vpop.f32.mrb[0].mxu0
        %5426 = vmatprep.mubr.f32.mxu0 %v1361
        %5427 = vmatmul.mubr.f32.gmra.mrb[0].mxu0 %v1360
        %v5428 = vpop.f32.mrb[0].mxu0
        %v5429 = vadd.f32 %v5124, %v5428
        %v5430 = vpop.f32.mrb[0].mxu0
        %5431 = vmatprep.mubr.f32.mxu0 %v1385
        %5432 = vmatmul.mubr.f32.gmra.mrb[0].mxu0 %v1384
        %v5433 = vpop.f32.mrb[0].mxu0
        %v5434 = vadd.f32 %v5129, %v5433
        %v5435 = vpop.f32.mrb[0].mxu0
        %5436 = vdwg.mxu0
        %5437 = vst [vmem:[%s233] sm:$0xff] %v5199
        %5438 = vst [vmem:[%s233 + $0x8] sm:$0xff] %v5204
        %5439 = vst [vmem:[%s233 + $0x10] sm:$0xff] %v5209
        %5440 = vst [vmem:[%s233 + $0x18] sm:$0xff] %v5214
        %5441 = vst [vmem:[%s233 + $0x20] sm:$0xff] %v5219
        %5442 = vst [vmem:[%s233 + $0x28] sm:$0xff] %v5224
        %5443 = vst [vmem:[%s233 + $0x30] sm:$0xff] %v5229
        %5444 = vst [vmem:[%s233 + $0x38] sm:$0xff] %v5234
        %5445 = vst [vmem:[%s233 + $0x40] sm:$0xff] %v5239
        %5446 = vst [vmem:[%s233 + $0x48] sm:$0xff] %v5244
        %5447 = vst [vmem:[%s233 + $0x50] sm:$0xff] %v5249
        %5448 = vst [vmem:[%s233 + $0x58] sm:$0xff] %v5254
        %5449 = vst [vmem:[%s233 + $0x60] sm:$0xff] %v5259
        %5450 = vst [vmem:[%s233 + $0x68] sm:$0xff] %v5264
        %5451 = vst [vmem:[%s233 + $0x70] sm:$0xff] %v5269
        %5452 = vst [vmem:[%s233 + $0x78] sm:$0xff] %v5274
        %5453 = vst [vmem:[%s233 + $0x80] sm:$0xff] %v5279
        %5454 = vst [vmem:[%s233 + $0x88] sm:$0xff] %v5284
        %5455 = vst [vmem:[%s233 + $0x90] sm:$0xff] %v5289
        %5456 = vst [vmem:[%s233 + $0x98] sm:$0xff] %v5294
        %5457 = vst [vmem:[%s233 + $0xa0] sm:$0xff] %v5299
        %5458 = vst [vmem:[%s233 + $0xa8] sm:$0xff] %v5304
        %5459 = vst [vmem:[%s233 + $0xb0] sm:$0xff] %v5309
        %5460 = vst [vmem:[%s233 + $0xb8] sm:$0xff] %v5314
        %5461 = vst [vmem:[%s233 + $0xc0] sm:$0xff] %v5319
        %5462 = vst [vmem:[%s233 + $0xc8] sm:$0xff] %v5324
        %5463 = vst [vmem:[%s233 + $0xd0] sm:$0xff] %v5329
        %5464 = vst [vmem:[%s233 + $0xd8] sm:$0xff] %v5334
        %5465 = vst [vmem:[%s233 + $0xe0] sm:$0xff] %v5339
        %5466 = vst [vmem:[%s233 + $0xe8] sm:$0xff] %v5344
        %5467 = vst [vmem:[%s233 + $0xf0] sm:$0xff] %v5349
        %5468 = vst [vmem:[%s233 + $0xf8] sm:$0xff] %v5354
        %5469 = vst [vmem:[%s233 + $0x100] sm:$0xff] %v5359
        %5470 = vst [vmem:[%s233 + $0x108] sm:$0xff] %v5364
        %5471 = vst [vmem:[%s233 + $0x110] sm:$0xff] %v5369
        %5472 = vst [vmem:[%s233 + $0x118] sm:$0xff] %v5374
        %5473 = vst [vmem:[%s233 + $0x120] sm:$0xff] %v5379
        %5474 = vst [vmem:[%s233 + $0x128] sm:$0xff] %v5384
        %5475 = vst [vmem:[%s233 + $0x130] sm:$0xff] %v5389
        %5476 = vst [vmem:[%s233 + $0x138] sm:$0xff] %v5394
        %5477 = vst [vmem:[%s233 + $0x140] sm:$0xff] %v5399
        %5478 = vst [vmem:[%s233 + $0x148] sm:$0xff] %v5404
        %5479 = vst [vmem:[%s233 + $0x150] sm:$0xff] %v5409
        %5480 = vst [vmem:[%s233 + $0x158] sm:$0xff] %v5414
        %5481 = vst [vmem:[%s233 + $0x160] sm:$0xff] %v5419
        %5482 = vst [vmem:[%s233 + $0x168] sm:$0xff] %v5424
        %5483 = vst [vmem:[%s233 + $0x170] sm:$0xff] %v5429
        %5484 = vst [vmem:[%s233 + $0x178] sm:$0xff] %v5434
        %s5485 = sand.u32 %s102, 1
        %s5486 = scalar_lea.sflag [#allocation4], %s5485
        %s5487 = sand.u32 %s102, 1
        %s5488 = smul.addr %s5487, 384
        %s5489 = scalar_lea.vmem [#allocation8], %s5488
        // Predicated region
        $region45: #{tpu_custom_call.1} parent=31 // pred_check
          %p5490 = pneg %p112
        $region46: #{tpu_custom_call.1} parent=31 // pred_check_branch
          %5492 = sbr.rel (%p5490) target = $region48
        $region47: #{tpu_custom_call.1} parent=31 // pred_region
          %s5494 = ssub.s32 6144, 6144
          %5495 = vsyncadd %s5486, %s5494
          %s5496 = smul.addr %s21, 128
          %s5497 = scalar_lea.hbm %s3, %s5496
          %s5498 = sshll.u32 %s5489, 4
          %s5499 = int_to_ptr.vmem [resolvable:$true] %s5498
          %5504 = dma.vmem_to_hbm [thread:$0]  %s5499, 6144, %s5497, %s5486, 128, 768, 8
        $region48: #{tpu_custom_call.1} parent=31 // pred_fallthru
          _
      $region32: #{tpu_custom_call.1} parent=5 // pred_fallthru
        _
      %p5505 = scmp.le.s32.totalorder 2, %s16
      // Predicated region
      $region49: #{tpu_custom_call.1} parent=5 // pred_check
        %p5506 = pneg %p5505
      $region50: #{tpu_custom_call.1} parent=5 // pred_check_branch
        %5508 = sbr.rel (%p5506) target = $region52
      $region51: #{tpu_custom_call.1} parent=5 // pred_region
        %s5509 = ssub.s32 %s16, 2
        // Predicated region
        $region53: #{tpu_custom_call.1} parent=51 // pred_check
          %p5510 = pneg %p118
        $region54: #{tpu_custom_call.1} parent=51 // pred_check_branch
          %5512 = sbr.rel (%p5510) target = $region56
        $region55: #{tpu_custom_call.1} parent=51 // pred_region
          %s5513 = sand.u32 %s103, 1
          %s5514 = scalar_lea.sflag [#allocation4], %s5513
          %s5515 = sand.u32 %s103, 1
          %s5516 = smul.addr %s5515, 384
          %s5517 = scalar_lea.vmem [#allocation8], %s5516
          %5518 = dma.done %s5514, 6144
        $region56: #{tpu_custom_call.1} parent=51 // pred_fallthru
          _
      $region52: #{tpu_custom_call.1} parent=5 // pred_fallthru
        _
    $region6: #{tpu_custom_call.1} parent=1 // loop_footer
      %s20 = sadd.s32 1, %s16
    $region7: #{tpu_custom_call.1} parent=1 // loop_footer_branch
      %15 = sbr.rel target = $region3
    $region8: #{tpu_custom_call.1} parent=1 // loop_exit
      _
    %5519 = vsyncpa [#allocation3], 1
    %s5520 = scalar_lea.sflag [#allocation3], 1
    %5521 = vsyncpa %s5520, 1
    %5522 = vsyncpa [#allocation6], 1
    %s5523 = scalar_lea.sflag [#allocation6], 1
    %5524 = vsyncpa %s5523, 1
    %5525 = vsyncpa [#allocation4], 1
    %s5526 = scalar_lea.sflag [#allocation4], 1
    %5527 = vsyncpa %s5526, 1

</llo_original>
